<compile_context>
chip_gen: v7x
topology: tpu7x:2x2x1
jax: 0.10.0
libtpu: 0.0.40
codegen_flags: <defaults>
</compile_context>

<pallas_src>
import jax
import jax.numpy as jnp
from jax.experimental import pallas as pl
from jax.experimental.pallas import tpu as pltpu

HEAD_PAD = 128  # lane-aligned width reserved for the 1-wide convout head


def _round_up(v, m):
    return ((v + m - 1) // m) * m


def _sdf_kernel(feat_ref, w1_ref, b1_ref, w2_ref, b2_ref, w34_ref, b34_ref,
                out_ref):
    # feat_ref: (1, TN, C_in) bf16   -- tile of pixels (rows) for one batch elem
    # w*_ref:   bf16 weights, b*_ref: f32 biases (all VMEM-resident)
    # out_ref:  (1, TN, 256 + HEAD_PAD) f32 -- fused convout2 | convout heads
    f32 = jnp.float32
    x = feat_ref[0]                                             # (TN, C_in)

    h = jnp.dot(x, w1_ref[...], preferred_element_type=f32) + b1_ref[...]
    h = jnp.maximum(h, 0.0).astype(jnp.bfloat16)                # (TN, 512)

    h = jnp.dot(h, w2_ref[...], preferred_element_type=f32) + b2_ref[...]
    h = jnp.maximum(h, 0.0).astype(jnp.bfloat16)                # (TN, 256)

    o = jnp.dot(h, w34_ref[...], preferred_element_type=f32) + b34_ref[...]
    out_ref[0] = o.astype(out_ref.dtype)                        # (TN, 384)


def sdf_regressor_forward(feat, params, *, tn=512):
    """feat: [B, C_in, H, W] f32 -> (out1 [B,1,H,W] f32, out2 [B,256,H,W] f32)."""
    w1, b1, w2, b2, w3, b3, w4, b4 = params
    B, C, H, W = feat.shape
    HW = H * W
    c2 = w4.shape[1]
    c_out = c2 + HEAD_PAD

    # Fuse the two 1x1-conv heads into one lane-dense matmul:
    # columns [0:c2) -> convout2, column c2 -> convout, the rest zero padding.
    w34 = jnp.concatenate([w4, jnp.pad(w3, ((0, 0), (0, HEAD_PAD - 1)))], axis=1)
    b34 = jnp.concatenate([b4, jnp.pad(b3, ((0, 0), (0, HEAD_PAD - 1)))], axis=1)

    # bf16 on the MXU (f32 accumulation in the kernel); biases stay f32.
    w1b = w1.astype(jnp.bfloat16)
    w2b = w2.astype(jnp.bfloat16)
    w34b = w34.astype(jnp.bfloat16)

    # Lane-aligned row tiling of the H*W pixels; pad instead of asserting.
    assert tn % 128 == 0, "tile size must be lane-aligned"
    tn = min(tn, _round_up(HW, 128))
    HWp = _round_up(HW, tn)
    x = feat.transpose(0, 2, 3, 1).reshape(B, HW, C).astype(jnp.bfloat16)
    if HWp != HW:
        x = jnp.pad(x, ((0, 0), (0, HWp - HW), (0, 0)))

    grid_spec = pltpu.PrefetchScalarGridSpec(
        num_scalar_prefetch=0,
        grid=(B, HWp // tn),
        in_specs=[
            pl.BlockSpec((1, tn, C), lambda b, n: (b, n, 0)),
            pl.BlockSpec(w1b.shape, lambda b, n: (0, 0)),
            pl.BlockSpec(b1.shape, lambda b, n: (0, 0)),
            pl.BlockSpec(w2b.shape, lambda b, n: (0, 0)),
            pl.BlockSpec(b2.shape, lambda b, n: (0, 0)),
            pl.BlockSpec(w34b.shape, lambda b, n: (0, 0)),
            pl.BlockSpec(b34.shape, lambda b, n: (0, 0)),
        ],
        out_specs=pl.BlockSpec((1, tn, c_out), lambda b, n: (b, n, 0)),
    )

    fused = pl.pallas_call(
        _sdf_kernel,
        out_shape=jax.ShapeDtypeStruct((B, HWp, c_out), jnp.float32),
        grid_spec=grid_spec,
        compiler_params=pltpu.CompilerParams(
            dimension_semantics=("parallel", "parallel"),
            vmem_limit_bytes=32 * 1024 * 1024),
    )(x, w1b, b1, w2b, b2, w34b, b34)

    fused = fused[:, :HW, :]
    out2 = fused[..., :c2].reshape(B, H, W, c2).transpose(0, 3, 1, 2)
    out1 = fused[..., c2].reshape(B, H, W, 1).transpose(0, 3, 1, 2)
    return out1, out2


def make_params(key, fs=1024):
    """Synthetic parameters matching sdf_regressor's 1x1-conv shapes.

    Weights are stored as (in_channels, out_channels) = PyTorch conv weight
    transposed (kernel size 1 squeezed). Biases are small random values so the
    bias-add path is exercised (the PyTorch init zeros them, which is only an
    init choice, not a semantic one).
    """
    c1, c2 = 512, 256
    ks = jax.random.split(key, 8)

    def xavier(k, din, dout):
        bound = (6.0 / (din + dout)) ** 0.5
        return jax.random.uniform(k, (din, dout), jnp.float32, -bound, bound)

    w1 = xavier(ks[0], fs, c1)
    b1 = 0.01 * jax.random.normal(ks[1], (1, c1), jnp.float32)
    w2 = xavier(ks[2], c1, c2)
    b2 = 0.01 * jax.random.normal(ks[3], (1, c2), jnp.float32)
    w3 = xavier(ks[4], c2, 1)
    b3 = 0.01 * jax.random.normal(ks[5], (1, 1), jnp.float32)
    w4 = xavier(ks[6], c2, c2)
    b4 = 0.01 * jax.random.normal(ks[7], (1, c2), jnp.float32)
    return (w1, b1, w2, b2, w3, b3, w4, b4)


def reference_forward(feat, params):
    """Pure-JAX f32 replica of the PyTorch forward (1x1 convs as matmuls)."""
    w1, b1, w2, b2, w3, b3, w4, b4 = params
    B, C, H, W = feat.shape
    x = feat.transpose(0, 2, 3, 1).reshape(B, H * W, C)
    h = jnp.maximum(x @ w1 + b1, 0.0)
    h = jnp.maximum(h @ w2 + b2, 0.0)
    out1 = (h @ w3 + b3).reshape(B, H, W, 1).transpose(0, 3, 1, 2)
    out2 = (h @ w4 + b4).reshape(B, H, W, w4.shape[1]).transpose(0, 3, 1, 2)
    return out1, out2


def _max_rel_err(a, b):
    return float(jnp.max(jnp.abs(a - b)) / (jnp.max(jnp.abs(b)) + 1e-6))


if __name__ == "__main__":
    key = jax.random.PRNGKey(0)
    k_feat, k_par = jax.random.split(key)

    B, FS, H, W = 2, 1024, 16, 16
    feat = jax.random.normal(k_feat, (B, FS, H, W), jnp.float32)
    params = make_params(k_par, fs=FS)

    out1, out2 = sdf_regressor_forward(feat, params, tn=256)
    out1 = jax.block_until_ready(out1)
    out2 = jax.block_until_ready(out2)

    ref1, ref2 = reference_forward(feat, params)
    assert out1.shape == (B, 1, H, W)
    assert out2.shape == (B, FS // 4, H, W)  # 256 channels

    # Kernel runs in bf16 (MXU) with f32 accumulation; reference is pure f32,
    # so compare with a max-normalized relative error bound.
    e1 = _max_rel_err(out1, ref1)
    e2 = _max_rel_err(out2, ref2)
    assert e1 < 1e-1, f"out1 rel err {e1}"
    assert e2 < 1e-1, f"out2 rel err {e2}"

    print("KERNEL_OK")
</pallas_src>

<mosaic_0001>
module attributes {stable_mosaic.version = 11 : i64} {
  func.func @_sdf_kernel(%arg0: i32, %arg1: i32, %arg2: memref<1x256x1024xbf16, #tpu.memory_space<vmem>>, %arg3: memref<1024x512xbf16, #tpu.memory_space<vmem>>, %arg4: memref<1x512xf32, #tpu.memory_space<vmem>>, %arg5: memref<512x256xbf16, #tpu.memory_space<vmem>>, %arg6: memref<1x256xf32, #tpu.memory_space<vmem>>, %arg7: memref<256x384xbf16, #tpu.memory_space<vmem>>, %arg8: memref<1x384xf32, #tpu.memory_space<vmem>>, %arg9: memref<1x256x384xf32, #tpu.memory_space<vmem>>) attributes {dimension_semantics = [#tpu.dimension_semantics<parallel>, #tpu.dimension_semantics<parallel>], iteration_bounds = array<i64: 2, 1>, scalar_prefetch = 0 : i64, scratch_operands = 0 : i64, tpu.core_type = #tpu.core_type<tc>, window_params = [{transform_indices = @transform_0, window_bounds = array<i64: 1, 256, 1024>}, {pipeline_mode = #tpu.pipeline_mode<synchronous>, transform_indices = @transform_1, window_bounds = array<i64: 1024, 512>}, {pipeline_mode = #tpu.pipeline_mode<synchronous>, transform_indices = @transform_2, window_bounds = array<i64: 1, 512>}, {pipeline_mode = #tpu.pipeline_mode<synchronous>, transform_indices = @transform_3, window_bounds = array<i64: 512, 256>}, {pipeline_mode = #tpu.pipeline_mode<synchronous>, transform_indices = @transform_4, window_bounds = array<i64: 1, 256>}, {pipeline_mode = #tpu.pipeline_mode<synchronous>, transform_indices = @transform_5, window_bounds = array<i64: 256, 384>}, {pipeline_mode = #tpu.pipeline_mode<synchronous>, transform_indices = @transform_6, window_bounds = array<i64: 1, 384>}, {transform_indices = @transform_7, window_bounds = array<i64: 1, 256, 384>}]} {
    %c0 = arith.constant 0 : index
    %c0_0 = arith.constant 0 : index
    %c0_1 = arith.constant 0 : index
    %0 = vector.load %arg2[%c0, %c0_0, %c0_1] : memref<1x256x1024xbf16, #tpu.memory_space<vmem>>, vector<1x256x1024xbf16>
    %1 = vector.shape_cast %0 : vector<1x256x1024xbf16> to vector<256x1024xbf16>
    %c0_2 = arith.constant 0 : index
    %c0_3 = arith.constant 0 : index
    %2 = vector.load %arg3[%c0_2, %c0_3] : memref<1024x512xbf16, #tpu.memory_space<vmem>>, vector<1024x512xbf16>
    %cst = arith.constant dense<0.000000e+00> : vector<256x512xf32>
    %3 = tpu.matmul %1, %2, %cst {dimension_numbers = #tpu.dot_dimension_numbers<[1], [0], [0], [1], [0, 0, 1, 1], [], []>} : vector<256x1024xbf16>, vector<1024x512xbf16>, vector<256x512xf32> -> vector<256x512xf32>
    %c0_4 = arith.constant 0 : index
    %c0_5 = arith.constant 0 : index
    %4 = vector.load %arg4[%c0_4, %c0_5] : memref<1x512xf32, #tpu.memory_space<vmem>>, vector<1x512xf32>
    %5 = vector.broadcast %4 : vector<1x512xf32> to vector<256x512xf32>
    %6 = arith.addf %3, %5 : vector<256x512xf32>
    %cst_6 = arith.constant 0.000000e+00 : f32
    %7 = vector.broadcast %cst_6 : f32 to vector<256x512xf32>
    %8 = arith.maximumf %6, %7 : vector<256x512xf32>
    %9 = arith.truncf %8 : vector<256x512xf32> to vector<256x512xbf16>
    %c0_7 = arith.constant 0 : index
    %c0_8 = arith.constant 0 : index
    %10 = vector.load %arg5[%c0_7, %c0_8] : memref<512x256xbf16, #tpu.memory_space<vmem>>, vector<512x256xbf16>
    %cst_9 = arith.constant dense<0.000000e+00> : vector<256x256xf32>
    %11 = tpu.matmul %9, %10, %cst_9 {dimension_numbers = #tpu.dot_dimension_numbers<[1], [0], [0], [1], [0, 0, 1, 1], [], []>} : vector<256x512xbf16>, vector<512x256xbf16>, vector<256x256xf32> -> vector<256x256xf32>
    %c0_10 = arith.constant 0 : index
    %c0_11 = arith.constant 0 : index
    %12 = vector.load %arg6[%c0_10, %c0_11] : memref<1x256xf32, #tpu.memory_space<vmem>>, vector<1x256xf32>
    %13 = vector.broadcast %12 : vector<1x256xf32> to vector<256x256xf32>
    %14 = arith.addf %11, %13 : vector<256x256xf32>
    %cst_12 = arith.constant 0.000000e+00 : f32
    %15 = vector.broadcast %cst_12 : f32 to vector<256x256xf32>
    %16 = arith.maximumf %14, %15 : vector<256x256xf32>
    %17 = arith.truncf %16 : vector<256x256xf32> to vector<256x256xbf16>
    %c0_13 = arith.constant 0 : index
    %c0_14 = arith.constant 0 : index
    %18 = vector.load %arg7[%c0_13, %c0_14] : memref<256x384xbf16, #tpu.memory_space<vmem>>, vector<256x384xbf16>
    %cst_15 = arith.constant dense<0.000000e+00> : vector<256x384xf32>
    %19 = tpu.matmul %17, %18, %cst_15 {dimension_numbers = #tpu.dot_dimension_numbers<[1], [0], [0], [1], [0, 0, 1, 1], [], []>} : vector<256x256xbf16>, vector<256x384xbf16>, vector<256x384xf32> -> vector<256x384xf32>
    %c0_16 = arith.constant 0 : index
    %c0_17 = arith.constant 0 : index
    %20 = vector.load %arg8[%c0_16, %c0_17] : memref<1x384xf32, #tpu.memory_space<vmem>>, vector<1x384xf32>
    %21 = vector.broadcast %20 : vector<1x384xf32> to vector<256x384xf32>
    %22 = arith.addf %19, %21 : vector<256x384xf32>
    %c0_18 = arith.constant 0 : index
    %c0_19 = arith.constant 0 : index
    %c0_20 = arith.constant 0 : index
    %23 = vector.load %arg9[%c0_18, %c0_19, %c0_20] : memref<1x256x384xf32, #tpu.memory_space<vmem>>, vector<1x256x384xf32>
    %24 = vector.shape_cast %23 : vector<1x256x384xf32> to vector<256x384xf32>
    %25 = vector.shape_cast %22 : vector<256x384xf32> to vector<1x256x384xf32>
    tpu.vector_store %arg9[%c0_18, %c0_19, %c0_20], %25 {strides = array<i32>} : memref<1x256x384xf32, #tpu.memory_space<vmem>>, vector<1x256x384xf32>,
    return
  }
  func.func @transform_0(%arg0: i32, %arg1: i32) -> (i32, i32, i32) {
    %c0_i32 = arith.constant 0 : i32
    %c0_i32_0 = arith.constant 0 : i32
    return %arg0, %arg1, %c0_i32 : i32, i32, i32
  }
  func.func @transform_1(%arg0: i32, %arg1: i32) -> (i32, i32) {
    %c0_i32 = arith.constant 0 : i32
    %c0_i32_0 = arith.constant 0 : i32
    %c0_i32_1 = arith.constant 0 : i32
    return %c0_i32, %c0_i32_0 : i32, i32
  }
  func.func @transform_2(%arg0: i32, %arg1: i32) -> (i32, i32) {
    %c0_i32 = arith.constant 0 : i32
    %c0_i32_0 = arith.constant 0 : i32
    %c0_i32_1 = arith.constant 0 : i32
    return %c0_i32, %c0_i32_0 : i32, i32
  }
  func.func @transform_3(%arg0: i32, %arg1: i32) -> (i32, i32) {
    %c0_i32 = arith.constant 0 : i32
    %c0_i32_0 = arith.constant 0 : i32
    %c0_i32_1 = arith.constant 0 : i32
    return %c0_i32, %c0_i32_0 : i32, i32
  }
  func.func @transform_4(%arg0: i32, %arg1: i32) -> (i32, i32) {
    %c0_i32 = arith.constant 0 : i32
    %c0_i32_0 = arith.constant 0 : i32
    %c0_i32_1 = arith.constant 0 : i32
    return %c0_i32, %c0_i32_0 : i32, i32
  }
  func.func @transform_5(%arg0: i32, %arg1: i32) -> (i32, i32) {
    %c0_i32 = arith.constant 0 : i32
    %c0_i32_0 = arith.constant 0 : i32
    %c0_i32_1 = arith.constant 0 : i32
    return %c0_i32, %c0_i32_0 : i32, i32
  }
  func.func @transform_6(%arg0: i32, %arg1: i32) -> (i32, i32) {
    %c0_i32 = arith.constant 0 : i32
    %c0_i32_0 = arith.constant 0 : i32
    %c0_i32_1 = arith.constant 0 : i32
    return %c0_i32, %c0_i32_0 : i32, i32
  }
  func.func @transform_7(%arg0: i32, %arg1: i32) -> (i32, i32, i32) {
    %c0_i32 = arith.constant 0 : i32
    %c0_i32_0 = arith.constant 0 : i32
    return %arg0, %arg1, %c0_i32 : i32, i32, i32
  }
}

</mosaic_0001>

<llo_original>
// kernel: tpu_custom_call.1
$region0: #{tpu_custom_call.1}
  #allocation0 [shape = 'u32[]', space=smem, size = 0x4, offset = 0x4, fixed_abs, tag = 'smem constant byte address 0x4 - core index']
  #allocation1 [shape = 'u32[144,128]{1,0:T(1,128)}', space=vmem, size = 0x12000, scoped, tag = 'internal scratch']
  %s0 = inlined_call_operand.hbm [shape: bf16[2,256,1024], index: 0, kind: input, shape index: {}]
  %s1 = inlined_call_operand.hbm [shape: bf16[1024,512], index: 1, kind: input, shape index: {}]
  %s2 = inlined_call_operand.vmem [shape: f32[1,512], index: 2, kind: input, shape index: {}]
  %s3 = inlined_call_operand.hbm [shape: bf16[512,256], index: 3, kind: input, shape index: {}]
  %s4 = inlined_call_operand.vmem [shape: f32[1,256], index: 4, kind: input, shape index: {}]
  %s5 = inlined_call_operand.hbm [shape: bf16[256,384], index: 5, kind: input, shape index: {}]
  %s6 = inlined_call_operand.vmem [shape: f32[1,384], index: 6, kind: input, shape index: {}]
  %s7 = inlined_call_operand.hbm [shape: f32[2,256,384], index: 7, kind: output, shape index: {}]
  %s8 = sld [smem:[#allocation0]]
  $region77: #{tpu_custom_call.1} parent=0
    _
  %s10 = ssub.s32 1, %s8
  %s11 = scalar_select 0, %s10, %s8
  $region1: #{tpu_custom_call.1} parent=0
    #allocation2 [shape = 'u8[1048576]{0}', space=vmem, size = 0x100000, scoped, tag = 'input window, operand 0']
    #allocation3 [shape = 's32[2]{0}', space=sflag, size = 0x8, scoped, tag = 'scoped memory for tpu_custom_call.1']
    #allocation4 [shape = 's32[2]{0}', space=sflag, size = 0x8, scoped, tag = 'scoped memory for tpu_custom_call.1']
    #allocation5 [shape = 'u8[1048576]{0}', space=vmem, size = 0x100000, scoped, tag = 'input window, operand 1, single buffered']
    #allocation6 [shape = 's32[1]{0}', space=sflag, size = 0x4, scoped, tag = 'scoped memory for tpu_custom_call.1']
    #allocation7 [shape = 'u8[262144]{0}', space=vmem, size = 0x40000, scoped, tag = 'input window, operand 3, single buffered']
    #allocation8 [shape = 'u8[196608]{0}', space=vmem, size = 0x30000, scoped, tag = 'input window, operand 5, single buffered']
    #allocation9 [shape = 's32[1]{0}', space=sflag, size = 0x4, scoped, tag = 'scoped memory for tpu_custom_call.1']
    #allocation10 [shape = 'u8[786432]{0}', space=vmem, size = 0xc0000, scoped, tag = 'output window, operand 0']
    %12 = vsyncpa [#allocation3], 0
    %s13 = scalar_lea.sflag [#allocation3], 1
    %14 = vsyncpa %s13, 0
    %15 = vsyncpa [#allocation6], 0
    %16 = vsyncpa [#allocation9], 0
    %17 = vsyncpa [#allocation4], 0
    %s18 = scalar_lea.sflag [#allocation4], 1
    %19 = vsyncpa %s18, 0
    loop: start=0, step=1, limit=4
    $region2: #{tpu_custom_call.1} parent=1 // loop_pre_header
      _
    $region3: #{tpu_custom_call.1} parent=1 // loop_header
      %s21 = sphi 0, %s25
      %p22 = scmp.ge.s32.totalorder %s21, 4
      %s28 = sphi 0, %s40
      %s29 = sphi 0, %s36
      %s30 = sphi 0, %s28
      %s31 = sphi 0, %s29
      %s32 = sphi 0, %s30
      %s33 = sphi 0, %s31
      %s45 = sphi 0, %s47
      %s48 = sphi 0, %s45
      %s49 = sphi 0, %s48
      %s65 = sphi 0, %s49
      %s69 = sphi 0, %s69
      %s71 = sphi 0, %s69
      %s72 = sphi 0, %s71
      %s86 = sphi 0, %s72
      %s90 = sphi 0, %s90
      %s92 = sphi 0, %s90
      %s93 = sphi 0, %s92
      %s107 = sphi 0, %s93
      %s111 = sphi 0, %s111
      %s113 = sphi 0, %s111
      %s114 = sphi 0, %s113
      %s128 = sphi 0, %s114
      %s132 = sphi 0, %s132
      %s134 = sphi 0, %s132
      %s135 = sphi 0, %s134
      %s149 = sphi 0, %s135
      %s153 = sphi 0, %s153
      %s155 = sphi 0, %s153
      %s156 = sphi 0, %s155
      %s170 = sphi 0, %s156
      %s174 = sphi 0, %s174
      %s176 = sphi 0, %s174
      %s177 = sphi 0, %s176
      %s191 = sphi 0, %s177
      %s199 = sphi 0, %s201
      %s202 = sphi 0, %s199
      %s203 = sphi 0, %s202
      %s219 = sphi 0, %s203
    $region4: #{tpu_custom_call.1} parent=1 // loop_header_branch
      %24 = sbr.rel (%p22) target = $region8
    $region5: #{tpu_custom_call.1} parent=1 // loop_body
      %s26 = ssub.s32 %s21, 1
      %s27 = ssub.s32 %s21, 2
      %s34 = sadd.s32 1, %s29
      %p35 = scmp.ge.s32.totalorder %s34, 1
      %s36 = scalar_select %p35, 0, %s34
      %s37 = sadd.s32 1, %s28
      %s38 = scalar_select %p35, %s37, %s28
      %p39 = scmp.ge.s32.totalorder %s38, 2
      %s40 = scalar_select %p39, 0, %s38
      %s41 = ssub.s32 %s28, %s40
      %s42 = ssub.s32 %s29, %s36
      %s43 = sor.u32 %s41, %s42
      %p44 = scmp.eq.s32.totalorder %s43, 0
      %s46 = sadd.s32 %s45, 1
      %s47 = scalar_select %p44, %s45, %s46
      %p50 = pneg %p44
      %p51 = scmp.eq.s32.totalorder %s21, 1
      %p52 = por %p50, %p51
      %p53 = scmp.ne.s32.totalorder %s45, %s48
      %p54 = scmp.eq.s32.totalorder %s21, 0
      %p55 = por %p53, %p54
      %p56 = scmp.ne.s32.totalorder %s45, %s48
      %p57 = scmp.eq.s32.totalorder %s26, 1
      %p58 = por %p56, %p57
      %p59 = scmp.ne.s32.totalorder %s48, %s49
      %p60 = scmp.eq.s32.totalorder %s26, 0
      %p61 = por %p59, %p60
      %p62 = scmp.ne.s32.totalorder %s48, %s49
      %p63 = scmp.eq.s32.totalorder %s27, 1
      %p64 = por %p62, %p63
      %p66 = scmp.ne.s32.totalorder %s49, %s65
      %p67 = scmp.eq.s32.totalorder %s27, 0
      %p68 = por %p66, %p67
      %s70 = sadd.s32 %s69, 1
      %p73 = scmp.eq.s32.totalorder %s21, 1
      %p74 = scmp.ne.s32.totalorder %s69, %s71
      %p75 = scmp.eq.s32.totalorder %s21, 0
      %p76 = por %p74, %p75
      %p77 = scmp.ne.s32.totalorder %s69, %s71
      %p78 = scmp.eq.s32.totalorder %s26, 1
      %p79 = por %p77, %p78
      %p80 = scmp.ne.s32.totalorder %s71, %s72
      %p81 = scmp.eq.s32.totalorder %s26, 0
      %p82 = por %p80, %p81
      %p83 = scmp.ne.s32.totalorder %s71, %s72
      %p84 = scmp.eq.s32.totalorder %s27, 1
      %p85 = por %p83, %p84
      %p87 = scmp.ne.s32.totalorder %s72, %s86
      %p88 = scmp.eq.s32.totalorder %s27, 0
      %p89 = por %p87, %p88
      %s91 = sadd.s32 %s90, 1
      %p94 = scmp.eq.s32.totalorder %s21, 1
      %p95 = scmp.ne.s32.totalorder %s90, %s92
      %p96 = scmp.eq.s32.totalorder %s21, 0
      %p97 = por %p95, %p96
      %p98 = scmp.ne.s32.totalorder %s90, %s92
      %p99 = scmp.eq.s32.totalorder %s26, 1
      %p100 = por %p98, %p99
      %p101 = scmp.ne.s32.totalorder %s92, %s93
      %p102 = scmp.eq.s32.totalorder %s26, 0
      %p103 = por %p101, %p102
      %p104 = scmp.ne.s32.totalorder %s92, %s93
      %p105 = scmp.eq.s32.totalorder %s27, 1
      %p106 = por %p104, %p105
      %p108 = scmp.ne.s32.totalorder %s93, %s107
      %p109 = scmp.eq.s32.totalorder %s27, 0
      %p110 = por %p108, %p109
      %s112 = sadd.s32 %s111, 1
      %p115 = scmp.eq.s32.totalorder %s21, 1
      %p116 = scmp.ne.s32.totalorder %s111, %s113
      %p117 = scmp.eq.s32.totalorder %s21, 0
      %p118 = por %p116, %p117
      %p119 = scmp.ne.s32.totalorder %s111, %s113
      %p120 = scmp.eq.s32.totalorder %s26, 1
      %p121 = por %p119, %p120
      %p122 = scmp.ne.s32.totalorder %s113, %s114
      %p123 = scmp.eq.s32.totalorder %s26, 0
      %p124 = por %p122, %p123
      %p125 = scmp.ne.s32.totalorder %s113, %s114
      %p126 = scmp.eq.s32.totalorder %s27, 1
      %p127 = por %p125, %p126
      %p129 = scmp.ne.s32.totalorder %s114, %s128
      %p130 = scmp.eq.s32.totalorder %s27, 0
      %p131 = por %p129, %p130
      %s133 = sadd.s32 %s132, 1
      %p136 = scmp.eq.s32.totalorder %s21, 1
      %p137 = scmp.ne.s32.totalorder %s132, %s134
      %p138 = scmp.eq.s32.totalorder %s21, 0
      %p139 = por %p137, %p138
      %p140 = scmp.ne.s32.totalorder %s132, %s134
      %p141 = scmp.eq.s32.totalorder %s26, 1
      %p142 = por %p140, %p141
      %p143 = scmp.ne.s32.totalorder %s134, %s135
      %p144 = scmp.eq.s32.totalorder %s26, 0
      %p145 = por %p143, %p144
      %p146 = scmp.ne.s32.totalorder %s134, %s135
      %p147 = scmp.eq.s32.totalorder %s27, 1
      %p148 = por %p146, %p147
      %p150 = scmp.ne.s32.totalorder %s135, %s149
      %p151 = scmp.eq.s32.totalorder %s27, 0
      %p152 = por %p150, %p151
      %s154 = sadd.s32 %s153, 1
      %p157 = scmp.eq.s32.totalorder %s21, 1
      %p158 = scmp.ne.s32.totalorder %s153, %s155
      %p159 = scmp.eq.s32.totalorder %s21, 0
      %p160 = por %p158, %p159
      %p161 = scmp.ne.s32.totalorder %s153, %s155
      %p162 = scmp.eq.s32.totalorder %s26, 1
      %p163 = por %p161, %p162
      %p164 = scmp.ne.s32.totalorder %s155, %s156
      %p165 = scmp.eq.s32.totalorder %s26, 0
      %p166 = por %p164, %p165
      %p167 = scmp.ne.s32.totalorder %s155, %s156
      %p168 = scmp.eq.s32.totalorder %s27, 1
      %p169 = por %p167, %p168
      %p171 = scmp.ne.s32.totalorder %s156, %s170
      %p172 = scmp.eq.s32.totalorder %s27, 0
      %p173 = por %p171, %p172
      %s175 = sadd.s32 %s174, 1
      %p178 = scmp.eq.s32.totalorder %s21, 1
      %p179 = scmp.ne.s32.totalorder %s174, %s176
      %p180 = scmp.eq.s32.totalorder %s21, 0
      %p181 = por %p179, %p180
      %p182 = scmp.ne.s32.totalorder %s174, %s176
      %p183 = scmp.eq.s32.totalorder %s26, 1
      %p184 = por %p182, %p183
      %p185 = scmp.ne.s32.totalorder %s176, %s177
      %p186 = scmp.eq.s32.totalorder %s26, 0
      %p187 = por %p185, %p186
      %p188 = scmp.ne.s32.totalorder %s176, %s177
      %p189 = scmp.eq.s32.totalorder %s27, 1
      %p190 = por %p188, %p189
      %p192 = scmp.ne.s32.totalorder %s177, %s191
      %p193 = scmp.eq.s32.totalorder %s27, 0
      %p194 = por %p192, %p193
      %s195 = ssub.s32 %s28, %s40
      %s196 = ssub.s32 %s29, %s36
      %s197 = sor.u32 %s195, %s196
      %p198 = scmp.eq.s32.totalorder %s197, 0
      %s200 = sadd.s32 %s199, 1
      %s201 = scalar_select %p198, %s199, %s200
      %p204 = pneg %p198
      %p205 = scmp.eq.s32.totalorder %s21, 1
      %p206 = por %p204, %p205
      %p207 = scmp.ne.s32.totalorder %s199, %s202
      %p208 = scmp.eq.s32.totalorder %s21, 0
      %p209 = por %p207, %p208
      %p210 = scmp.ne.s32.totalorder %s199, %s202
      %p211 = scmp.eq.s32.totalorder %s26, 1
      %p212 = por %p210, %p211
      %p213 = scmp.ne.s32.totalorder %s202, %s203
      %p214 = scmp.eq.s32.totalorder %s26, 0
      %p215 = por %p213, %p214
      %p216 = scmp.ne.s32.totalorder %s202, %s203
      %p217 = scmp.eq.s32.totalorder %s27, 1
      %p218 = por %p216, %p217
      %p220 = scmp.ne.s32.totalorder %s203, %s219
      %p221 = scmp.eq.s32.totalorder %s27, 0
      %p222 = por %p220, %p221
      %p223 = scmp.le.s32.totalorder 1, %s21
      %p224 = scmp.lt.s32.totalorder %s21, 3
      %p225 = pnand %p223, %p224
      %p226 = pneg %p225
      // Predicated region
      $region9: #{tpu_custom_call.1} parent=5 // pred_check
        _
      $region10: #{tpu_custom_call.1} parent=5 // pred_check_branch
        %228 = sbr.rel (%p225) target = $region12
      $region11: #{tpu_custom_call.1} parent=5 // pred_region
        %s229 = ssub.s32 %s21, 1
        // Predicated region
        $region13: #{tpu_custom_call.1} parent=11 // pred_check
          %p230 = pneg %p82
        $region14: #{tpu_custom_call.1} parent=11 // pred_check_branch
          %232 = sbr.rel (%p230) target = $region16
        $region15: #{tpu_custom_call.1} parent=11 // pred_region
          %s234 = ssub.s32 32768, 32768
          %235 = vsyncadd [#allocation6], %s234
          %s236 = sshll.u32 [#allocation5], 4
          %s237 = int_to_ptr.vmem [resolvable:$true] %s236
          %242 = dma.hbm_to_vmem [thread:$0]  %s1, 32768, %s237, [#allocation6], 256, 256, 16
        $region16: #{tpu_custom_call.1} parent=11 // pred_fallthru
          _
        // Predicated region
        $region17: #{tpu_custom_call.1} parent=11 // pred_check
          %p243 = pneg %p103
        $region18: #{tpu_custom_call.1} parent=11 // pred_check_branch
          %245 = sbr.rel (%p243) target = $region20
        $region19: #{tpu_custom_call.1} parent=11 // pred_region
          _
        $region20: #{tpu_custom_call.1} parent=11 // pred_fallthru
          _
        // Predicated region
        $region21: #{tpu_custom_call.1} parent=11 // pred_check
          %p246 = pneg %p124
        $region22: #{tpu_custom_call.1} parent=11 // pred_check_branch
          %248 = sbr.rel (%p246) target = $region24
        $region23: #{tpu_custom_call.1} parent=11 // pred_region
          %s250 = ssub.s32 8192, 8192
          %251 = vsyncadd [#allocation6], %s250
          %s252 = sshll.u32 [#allocation7], 4
          %s253 = int_to_ptr.vmem [resolvable:$true] %s252
          %258 = dma.hbm_to_vmem [thread:$0]  %s3, 8192, %s253, [#allocation6], 128, 128, 8
        $region24: #{tpu_custom_call.1} parent=11 // pred_fallthru
          _
        // Predicated region
        $region25: #{tpu_custom_call.1} parent=11 // pred_check
          %p259 = pneg %p145
        $region26: #{tpu_custom_call.1} parent=11 // pred_check_branch
          %261 = sbr.rel (%p259) target = $region28
        $region27: #{tpu_custom_call.1} parent=11 // pred_region
          _
        $region28: #{tpu_custom_call.1} parent=11 // pred_fallthru
          _
        // Predicated region
        $region29: #{tpu_custom_call.1} parent=11 // pred_check
          %p262 = pneg %p166
        $region30: #{tpu_custom_call.1} parent=11 // pred_check_branch
          %264 = sbr.rel (%p262) target = $region32
        $region31: #{tpu_custom_call.1} parent=11 // pred_region
          %s266 = ssub.s32 6144, 6144
          %267 = vsyncadd [#allocation9], %s266
          %s268 = sshll.u32 [#allocation8], 4
          %s269 = int_to_ptr.vmem [resolvable:$true] %s268
          %274 = dma.hbm_to_vmem [thread:$0]  %s5, 6144, %s269, [#allocation9], 192, 192, 12
        $region32: #{tpu_custom_call.1} parent=11 // pred_fallthru
          _
        // Predicated region
        $region33: #{tpu_custom_call.1} parent=11 // pred_check
          %p275 = pneg %p187
        $region34: #{tpu_custom_call.1} parent=11 // pred_check_branch
          %277 = sbr.rel (%p275) target = $region36
        $region35: #{tpu_custom_call.1} parent=11 // pred_region
          _
        $region36: #{tpu_custom_call.1} parent=11 // pred_fallthru
          _
      $region12: #{tpu_custom_call.1} parent=5 // pred_fallthru
        _
      %p278 = scmp.lt.s32.totalorder %s21, 2
      // Predicated region
      $region37: #{tpu_custom_call.1} parent=5 // pred_check
        %p279 = pneg %p278
      $region38: #{tpu_custom_call.1} parent=5 // pred_check_branch
        %281 = sbr.rel (%p279) target = $region40
      $region39: #{tpu_custom_call.1} parent=5 // pred_region
        // Predicated region
        $region41: #{tpu_custom_call.1} parent=39 // pred_check
          %p282 = pneg %p55
        $region42: #{tpu_custom_call.1} parent=39 // pred_check_branch
          %284 = sbr.rel (%p282) target = $region44
        $region43: #{tpu_custom_call.1} parent=39 // pred_region
          %s285 = sand.u32 %s45, 1
          %s286 = scalar_lea.sflag [#allocation3], %s285
          %s287 = sand.u32 %s45, 1
          %s288 = smul.addr %s287, 1024
          %s289 = scalar_lea.vmem [#allocation2], %s288
          %s290 = smul.u32 32, %s29
          %s292 = ssub.s32 16384, 16384
          %293 = vsyncadd %s286, %s292
          %s294 = smul.addr %s290, 8
          %s295 = smul.addr %s28, 256
          %s296 = sadd.s32 %s294, %s295
          %s297 = smul.addr %s296, 64
          %s298 = scalar_lea.hbm %s0, %s297
          %s299 = sshll.u32 %s289, 4
          %s300 = int_to_ptr.vmem [resolvable:$true] %s299
          %305 = dma.hbm_to_vmem [thread:$0]  %s298, 16384, %s300, %s286, 512, 512, 32
        $region44: #{tpu_custom_call.1} parent=39 // pred_fallthru
          _
      $region40: #{tpu_custom_call.1} parent=5 // pred_fallthru
        _
      %p306 = scmp.le.s32.totalorder 1, %s21
      %p307 = scmp.lt.s32.totalorder %s21, 3
      %p308 = pnand %p306, %p307
      %p309 = pneg %p308
      // Predicated region
      $region45: #{tpu_custom_call.1} parent=5 // pred_check
        _
      $region46: #{tpu_custom_call.1} parent=5 // pred_check_branch
        %311 = sbr.rel (%p308) target = $region48
      $region47: #{tpu_custom_call.1} parent=5 // pred_region
        %s312 = ssub.s32 %s21, 1
        %s313 = sand.u32 %s48, 1
        %s314 = scalar_lea.sflag [#allocation3], %s313
        %s315 = sand.u32 %s48, 1
        %s316 = smul.addr %s315, 1024
        %s317 = scalar_lea.vmem [#allocation2], %s316
        // Predicated region
        $region49: #{tpu_custom_call.1} parent=47 // pred_check
          %p318 = pneg %p61
        $region50: #{tpu_custom_call.1} parent=47 // pred_check_branch
          %320 = sbr.rel (%p318) target = $region52
        $region51: #{tpu_custom_call.1} parent=47 // pred_region
          %321 = dma.done %s314, 16384
        $region52: #{tpu_custom_call.1} parent=47 // pred_fallthru
          _
        // Predicated region
        $region53: #{tpu_custom_call.1} parent=47 // pred_check
          %p322 = pneg %p82
        $region54: #{tpu_custom_call.1} parent=47 // pred_check_branch
          %324 = sbr.rel (%p322) target = $region56
        $region55: #{tpu_custom_call.1} parent=47 // pred_region
          %325 = dma.done [#allocation6], 32768
        $region56: #{tpu_custom_call.1} parent=47 // pred_fallthru
          _
        // Predicated region
        $region57: #{tpu_custom_call.1} parent=47 // pred_check
          %p326 = pneg %p124
        $region58: #{tpu_custom_call.1} parent=47 // pred_check_branch
          %328 = sbr.rel (%p326) target = $region60
        $region59: #{tpu_custom_call.1} parent=47 // pred_region
          %329 = dma.done [#allocation6], 8192
        $region60: #{tpu_custom_call.1} parent=47 // pred_fallthru
          _
        // Predicated region
        $region61: #{tpu_custom_call.1} parent=47 // pred_check
          %p330 = pneg %p166
        $region62: #{tpu_custom_call.1} parent=47 // pred_check_branch
          %332 = sbr.rel (%p330) target = $region64
        $region63: #{tpu_custom_call.1} parent=47 // pred_region
          %333 = dma.done [#allocation9], 6144
        $region64: #{tpu_custom_call.1} parent=47 // pred_fallthru
          _
        %s334 = sand.u32 %s48, 1
        %s335 = scalar_lea.sflag [#allocation3], %s334
        %s336 = sand.u32 %s48, 1
        %s337 = smul.addr %s336, 1024
        %s338 = scalar_lea.vmem [#allocation2], %s337
        %p339 = pneg %p61
        %p340 = pneg %p58
        %p341 = pneg %p82
        %p342 = pneg %p79
        %p343 = pneg %p103
        %p344 = pneg %p100
        %p345 = pneg %p124
        %p346 = pneg %p121
        %p347 = pneg %p145
        %p348 = pneg %p142
        %p349 = pneg %p166
        %p350 = pneg %p163
        %p351 = pneg %p187
        %p352 = pneg %p184
        %p353 = pneg %p215
        %p354 = pneg %p212
        %s355 = sand.u32 %s202, 1
        %s356 = scalar_lea.sflag [#allocation4], %s355
        %s357 = sand.u32 %s202, 1
        %s358 = smul.addr %s357, 768
        %s359 = scalar_lea.vmem [#allocation10], %s358
        %s360 = smul.u32 32, %s31
        %s361 = smul.u32 32, %s31
        %v363 = vld [vmem:[%s317] sm:$0xff]
        %v364 = vld [vmem:[%s317 + $0x8] sm:$0xff]
        %v365 = vld [vmem:[%s317 + $0x10] sm:$0xff]
        %v366 = vld [vmem:[%s317 + $0x18] sm:$0xff]
        %v367 = vld [vmem:[%s317 + $0x20] sm:$0xff]
        %v368 = vld [vmem:[%s317 + $0x28] sm:$0xff]
        %v369 = vld [vmem:[%s317 + $0x30] sm:$0xff]
        %v370 = vld [vmem:[%s317 + $0x38] sm:$0xff]
        %v371 = vld [vmem:[%s317 + $0x40] sm:$0xff]
        %v372 = vld [vmem:[%s317 + $0x48] sm:$0xff]
        %v373 = vld [vmem:[%s317 + $0x50] sm:$0xff]
        %v374 = vld [vmem:[%s317 + $0x58] sm:$0xff]
        %v375 = vld [vmem:[%s317 + $0x60] sm:$0xff]
        %v376 = vld [vmem:[%s317 + $0x68] sm:$0xff]
        %v377 = vld [vmem:[%s317 + $0x70] sm:$0xff]
        %v378 = vld [vmem:[%s317 + $0x78] sm:$0xff]
        %v379 = vld [vmem:[%s317 + $0x80] sm:$0xff]
        %v380 = vld [vmem:[%s317 + $0x88] sm:$0xff]
        %v381 = vld [vmem:[%s317 + $0x90] sm:$0xff]
        %v382 = vld [vmem:[%s317 + $0x98] sm:$0xff]
        %v383 = vld [vmem:[%s317 + $0xa0] sm:$0xff]
        %v384 = vld [vmem:[%s317 + $0xa8] sm:$0xff]
        %v385 = vld [vmem:[%s317 + $0xb0] sm:$0xff]
        %v386 = vld [vmem:[%s317 + $0xb8] sm:$0xff]
        %v387 = vld [vmem:[%s317 + $0xc0] sm:$0xff]
        %v388 = vld [vmem:[%s317 + $0xc8] sm:$0xff]
        %v389 = vld [vmem:[%s317 + $0xd0] sm:$0xff]
        %v390 = vld [vmem:[%s317 + $0xd8] sm:$0xff]
        %v391 = vld [vmem:[%s317 + $0xe0] sm:$0xff]
        %v392 = vld [vmem:[%s317 + $0xe8] sm:$0xff]
        %v393 = vld [vmem:[%s317 + $0xf0] sm:$0xff]
        %v394 = vld [vmem:[%s317 + $0xf8] sm:$0xff]
        %v395 = vld [vmem:[%s317 + $0x100] sm:$0xff]
        %v396 = vld [vmem:[%s317 + $0x108] sm:$0xff]
        %v397 = vld [vmem:[%s317 + $0x110] sm:$0xff]
        %v398 = vld [vmem:[%s317 + $0x118] sm:$0xff]
        %v399 = vld [vmem:[%s317 + $0x120] sm:$0xff]
        %v400 = vld [vmem:[%s317 + $0x128] sm:$0xff]
        %v401 = vld [vmem:[%s317 + $0x130] sm:$0xff]
        %v402 = vld [vmem:[%s317 + $0x138] sm:$0xff]
        %v403 = vld [vmem:[%s317 + $0x140] sm:$0xff]
        %v404 = vld [vmem:[%s317 + $0x148] sm:$0xff]
        %v405 = vld [vmem:[%s317 + $0x150] sm:$0xff]
        %v406 = vld [vmem:[%s317 + $0x158] sm:$0xff]
        %v407 = vld [vmem:[%s317 + $0x160] sm:$0xff]
        %v408 = vld [vmem:[%s317 + $0x168] sm:$0xff]
        %v409 = vld [vmem:[%s317 + $0x170] sm:$0xff]
        %v410 = vld [vmem:[%s317 + $0x178] sm:$0xff]
        %v411 = vld [vmem:[%s317 + $0x180] sm:$0xff]
        %v412 = vld [vmem:[%s317 + $0x188] sm:$0xff]
        %v413 = vld [vmem:[%s317 + $0x190] sm:$0xff]
        %v414 = vld [vmem:[%s317 + $0x198] sm:$0xff]
        %v415 = vld [vmem:[%s317 + $0x1a0] sm:$0xff]
        %v416 = vld [vmem:[%s317 + $0x1a8] sm:$0xff]
        %v417 = vld [vmem:[%s317 + $0x1b0] sm:$0xff]
        %v418 = vld [vmem:[%s317 + $0x1b8] sm:$0xff]
        %v419 = vld [vmem:[%s317 + $0x1c0] sm:$0xff]
        %v420 = vld [vmem:[%s317 + $0x1c8] sm:$0xff]
        %v421 = vld [vmem:[%s317 + $0x1d0] sm:$0xff]
        %v422 = vld [vmem:[%s317 + $0x1d8] sm:$0xff]
        %v423 = vld [vmem:[%s317 + $0x1e0] sm:$0xff]
        %v424 = vld [vmem:[%s317 + $0x1e8] sm:$0xff]
        %v425 = vld [vmem:[%s317 + $0x1f0] sm:$0xff]
        %v426 = vld [vmem:[%s317 + $0x1f8] sm:$0xff]
        %v427 = vld [vmem:[%s317 + $0x200] sm:$0xff]
        %v428 = vld [vmem:[%s317 + $0x208] sm:$0xff]
        %v429 = vld [vmem:[%s317 + $0x210] sm:$0xff]
        %v430 = vld [vmem:[%s317 + $0x218] sm:$0xff]
        %v431 = vld [vmem:[%s317 + $0x220] sm:$0xff]
        %v432 = vld [vmem:[%s317 + $0x228] sm:$0xff]
        %v433 = vld [vmem:[%s317 + $0x230] sm:$0xff]
        %v434 = vld [vmem:[%s317 + $0x238] sm:$0xff]
        %v435 = vld [vmem:[%s317 + $0x240] sm:$0xff]
        %v436 = vld [vmem:[%s317 + $0x248] sm:$0xff]
        %v437 = vld [vmem:[%s317 + $0x250] sm:$0xff]
        %v438 = vld [vmem:[%s317 + $0x258] sm:$0xff]
        %v439 = vld [vmem:[%s317 + $0x260] sm:$0xff]
        %v440 = vld [vmem:[%s317 + $0x268] sm:$0xff]
        %v441 = vld [vmem:[%s317 + $0x270] sm:$0xff]
        %v442 = vld [vmem:[%s317 + $0x278] sm:$0xff]
        %v443 = vld [vmem:[%s317 + $0x280] sm:$0xff]
        %v444 = vld [vmem:[%s317 + $0x288] sm:$0xff]
        %v445 = vld [vmem:[%s317 + $0x290] sm:$0xff]
        %v446 = vld [vmem:[%s317 + $0x298] sm:$0xff]
        %v447 = vld [vmem:[%s317 + $0x2a0] sm:$0xff]
        %v448 = vld [vmem:[%s317 + $0x2a8] sm:$0xff]
        %v449 = vld [vmem:[%s317 + $0x2b0] sm:$0xff]
        %v450 = vld [vmem:[%s317 + $0x2b8] sm:$0xff]
        %v451 = vld [vmem:[%s317 + $0x2c0] sm:$0xff]
        %v452 = vld [vmem:[%s317 + $0x2c8] sm:$0xff]
        %v453 = vld [vmem:[%s317 + $0x2d0] sm:$0xff]
        %v454 = vld [vmem:[%s317 + $0x2d8] sm:$0xff]
        %v455 = vld [vmem:[%s317 + $0x2e0] sm:$0xff]
        %v456 = vld [vmem:[%s317 + $0x2e8] sm:$0xff]
        %v457 = vld [vmem:[%s317 + $0x2f0] sm:$0xff]
        %v458 = vld [vmem:[%s317 + $0x2f8] sm:$0xff]
        %v459 = vld [vmem:[%s317 + $0x300] sm:$0xff]
        %v460 = vld [vmem:[%s317 + $0x308] sm:$0xff]
        %v461 = vld [vmem:[%s317 + $0x310] sm:$0xff]
        %v462 = vld [vmem:[%s317 + $0x318] sm:$0xff]
        %v463 = vld [vmem:[%s317 + $0x320] sm:$0xff]
        %v464 = vld [vmem:[%s317 + $0x328] sm:$0xff]
        %v465 = vld [vmem:[%s317 + $0x330] sm:$0xff]
        %v466 = vld [vmem:[%s317 + $0x338] sm:$0xff]
        %v467 = vld [vmem:[%s317 + $0x340] sm:$0xff]
        %v468 = vld [vmem:[%s317 + $0x348] sm:$0xff]
        %v469 = vld [vmem:[%s317 + $0x350] sm:$0xff]
        %v470 = vld [vmem:[%s317 + $0x358] sm:$0xff]
        %v471 = vld [vmem:[%s317 + $0x360] sm:$0xff]
        %v472 = vld [vmem:[%s317 + $0x368] sm:$0xff]
        %v473 = vld [vmem:[%s317 + $0x370] sm:$0xff]
        %v474 = vld [vmem:[%s317 + $0x378] sm:$0xff]
        %v475 = vld [vmem:[%s317 + $0x380] sm:$0xff]
        %v476 = vld [vmem:[%s317 + $0x388] sm:$0xff]
        %v477 = vld [vmem:[%s317 + $0x390] sm:$0xff]
        %v478 = vld [vmem:[%s317 + $0x398] sm:$0xff]
        %v479 = vld [vmem:[%s317 + $0x3a0] sm:$0xff]
        %v480 = vld [vmem:[%s317 + $0x3a8] sm:$0xff]
        %v481 = vld [vmem:[%s317 + $0x3b0] sm:$0xff]
        %v482 = vld [vmem:[%s317 + $0x3b8] sm:$0xff]
        %v483 = vld [vmem:[%s317 + $0x3c0] sm:$0xff]
        %v484 = vld [vmem:[%s317 + $0x3c8] sm:$0xff]
        %v485 = vld [vmem:[%s317 + $0x3d0] sm:$0xff]
        %v486 = vld [vmem:[%s317 + $0x3d8] sm:$0xff]
        %v487 = vld [vmem:[%s317 + $0x3e0] sm:$0xff]
        %v488 = vld [vmem:[%s317 + $0x3e8] sm:$0xff]
        %v489 = vld [vmem:[%s317 + $0x3f0] sm:$0xff]
        %v490 = vld [vmem:[%s317 + $0x3f8] sm:$0xff]
        %v491 = vld [vmem:[#allocation5] sm:$0xff]
        %v492 = vld [vmem:[#allocation5 + $0x8] sm:$0xff]
        %v493 = vld [vmem:[#allocation5 + $0x10] sm:$0xff]
        %v494 = vld [vmem:[#allocation5 + $0x18] sm:$0xff]
        %v495 = vld [vmem:[#allocation5 + $0x20] sm:$0xff]
        %v496 = vld [vmem:[#allocation5 + $0x28] sm:$0xff]
        %v497 = vld [vmem:[#allocation5 + $0x30] sm:$0xff]
        %v498 = vld [vmem:[#allocation5 + $0x38] sm:$0xff]
        %v499 = vld [vmem:[#allocation5 + $0x40] sm:$0xff]
        %v500 = vld [vmem:[#allocation5 + $0x48] sm:$0xff]
        %v501 = vld [vmem:[#allocation5 + $0x50] sm:$0xff]
        %v502 = vld [vmem:[#allocation5 + $0x58] sm:$0xff]
        %v503 = vld [vmem:[#allocation5 + $0x60] sm:$0xff]
        %v504 = vld [vmem:[#allocation5 + $0x68] sm:$0xff]
        %v505 = vld [vmem:[#allocation5 + $0x70] sm:$0xff]
        %v506 = vld [vmem:[#allocation5 + $0x78] sm:$0xff]
        %v507 = vld [vmem:[#allocation5 + $0x80] sm:$0xff]
        %v508 = vld [vmem:[#allocation5 + $0x88] sm:$0xff]
        %v509 = vld [vmem:[#allocation5 + $0x90] sm:$0xff]
        %v510 = vld [vmem:[#allocation5 + $0x98] sm:$0xff]
        %v511 = vld [vmem:[#allocation5 + $0xa0] sm:$0xff]
        %v512 = vld [vmem:[#allocation5 + $0xa8] sm:$0xff]
        %v513 = vld [vmem:[#allocation5 + $0xb0] sm:$0xff]
        %v514 = vld [vmem:[#allocation5 + $0xb8] sm:$0xff]
        %v515 = vld [vmem:[#allocation5 + $0xc0] sm:$0xff]
        %v516 = vld [vmem:[#allocation5 + $0xc8] sm:$0xff]
        %v517 = vld [vmem:[#allocation5 + $0xd0] sm:$0xff]
        %v518 = vld [vmem:[#allocation5 + $0xd8] sm:$0xff]
        %v519 = vld [vmem:[#allocation5 + $0xe0] sm:$0xff]
        %v520 = vld [vmem:[#allocation5 + $0xe8] sm:$0xff]
        %v521 = vld [vmem:[#allocation5 + $0xf0] sm:$0xff]
        %v522 = vld [vmem:[#allocation5 + $0xf8] sm:$0xff]
        %v523 = vld [vmem:[#allocation5 + $0x100] sm:$0xff]
        %v524 = vld [vmem:[#allocation5 + $0x108] sm:$0xff]
        %v525 = vld [vmem:[#allocation5 + $0x110] sm:$0xff]
        %v526 = vld [vmem:[#allocation5 + $0x118] sm:$0xff]
        %v527 = vld [vmem:[#allocation5 + $0x120] sm:$0xff]
        %v528 = vld [vmem:[#allocation5 + $0x128] sm:$0xff]
        %v529 = vld [vmem:[#allocation5 + $0x130] sm:$0xff]
        %v530 = vld [vmem:[#allocation5 + $0x138] sm:$0xff]
        %v531 = vld [vmem:[#allocation5 + $0x140] sm:$0xff]
        %v532 = vld [vmem:[#allocation5 + $0x148] sm:$0xff]
        %v533 = vld [vmem:[#allocation5 + $0x150] sm:$0xff]
        %v534 = vld [vmem:[#allocation5 + $0x158] sm:$0xff]
        %v535 = vld [vmem:[#allocation5 + $0x160] sm:$0xff]
        %v536 = vld [vmem:[#allocation5 + $0x168] sm:$0xff]
        %v537 = vld [vmem:[#allocation5 + $0x170] sm:$0xff]
        %v538 = vld [vmem:[#allocation5 + $0x178] sm:$0xff]
        %v539 = vld [vmem:[#allocation5 + $0x180] sm:$0xff]
        %v540 = vld [vmem:[#allocation5 + $0x188] sm:$0xff]
        %v541 = vld [vmem:[#allocation5 + $0x190] sm:$0xff]
        %v542 = vld [vmem:[#allocation5 + $0x198] sm:$0xff]
        %v543 = vld [vmem:[#allocation5 + $0x1a0] sm:$0xff]
        %v544 = vld [vmem:[#allocation5 + $0x1a8] sm:$0xff]
        %v545 = vld [vmem:[#allocation5 + $0x1b0] sm:$0xff]
        %v546 = vld [vmem:[#allocation5 + $0x1b8] sm:$0xff]
        %v547 = vld [vmem:[#allocation5 + $0x1c0] sm:$0xff]
        %v548 = vld [vmem:[#allocation5 + $0x1c8] sm:$0xff]
        %v549 = vld [vmem:[#allocation5 + $0x1d0] sm:$0xff]
        %v550 = vld [vmem:[#allocation5 + $0x1d8] sm:$0xff]
        %v551 = vld [vmem:[#allocation5 + $0x1e0] sm:$0xff]
        %v552 = vld [vmem:[#allocation5 + $0x1e8] sm:$0xff]
        %v553 = vld [vmem:[#allocation5 + $0x1f0] sm:$0xff]
        %v554 = vld [vmem:[#allocation5 + $0x1f8] sm:$0xff]
        %v555 = vld [vmem:[#allocation5 + $0x200] sm:$0xff]
        %v556 = vld [vmem:[#allocation5 + $0x208] sm:$0xff]
        %v557 = vld [vmem:[#allocation5 + $0x210] sm:$0xff]
        %v558 = vld [vmem:[#allocation5 + $0x218] sm:$0xff]
        %v559 = vld [vmem:[#allocation5 + $0x220] sm:$0xff]
        %v560 = vld [vmem:[#allocation5 + $0x228] sm:$0xff]
        %v561 = vld [vmem:[#allocation5 + $0x230] sm:$0xff]
        %v562 = vld [vmem:[#allocation5 + $0x238] sm:$0xff]
        %v563 = vld [vmem:[#allocation5 + $0x240] sm:$0xff]
        %v564 = vld [vmem:[#allocation5 + $0x248] sm:$0xff]
        %v565 = vld [vmem:[#allocation5 + $0x250] sm:$0xff]
        %v566 = vld [vmem:[#allocation5 + $0x258] sm:$0xff]
        %v567 = vld [vmem:[#allocation5 + $0x260] sm:$0xff]
        %v568 = vld [vmem:[#allocation5 + $0x268] sm:$0xff]
        %v569 = vld [vmem:[#allocation5 + $0x270] sm:$0xff]
        %v570 = vld [vmem:[#allocation5 + $0x278] sm:$0xff]
        %v571 = vld [vmem:[#allocation5 + $0x280] sm:$0xff]
        %v572 = vld [vmem:[#allocation5 + $0x288] sm:$0xff]
        %v573 = vld [vmem:[#allocation5 + $0x290] sm:$0xff]
        %v574 = vld [vmem:[#allocation5 + $0x298] sm:$0xff]
        %v575 = vld [vmem:[#allocation5 + $0x2a0] sm:$0xff]
        %v576 = vld [vmem:[#allocation5 + $0x2a8] sm:$0xff]
        %v577 = vld [vmem:[#allocation5 + $0x2b0] sm:$0xff]
        %v578 = vld [vmem:[#allocation5 + $0x2b8] sm:$0xff]
        %v579 = vld [vmem:[#allocation5 + $0x2c0] sm:$0xff]
        %v580 = vld [vmem:[#allocation5 + $0x2c8] sm:$0xff]
        %v581 = vld [vmem:[#allocation5 + $0x2d0] sm:$0xff]
        %v582 = vld [vmem:[#allocation5 + $0x2d8] sm:$0xff]
        %v583 = vld [vmem:[#allocation5 + $0x2e0] sm:$0xff]
        %v584 = vld [vmem:[#allocation5 + $0x2e8] sm:$0xff]
        %v585 = vld [vmem:[#allocation5 + $0x2f0] sm:$0xff]
        %v586 = vld [vmem:[#allocation5 + $0x2f8] sm:$0xff]
        %v587 = vld [vmem:[#allocation5 + $0x300] sm:$0xff]
        %v588 = vld [vmem:[#allocation5 + $0x308] sm:$0xff]
        %v589 = vld [vmem:[#allocation5 + $0x310] sm:$0xff]
        %v590 = vld [vmem:[#allocation5 + $0x318] sm:$0xff]
        %v591 = vld [vmem:[#allocation5 + $0x320] sm:$0xff]
        %v592 = vld [vmem:[#allocation5 + $0x328] sm:$0xff]
        %v593 = vld [vmem:[#allocation5 + $0x330] sm:$0xff]
        %v594 = vld [vmem:[#allocation5 + $0x338] sm:$0xff]
        %v595 = vld [vmem:[#allocation5 + $0x340] sm:$0xff]
        %v596 = vld [vmem:[#allocation5 + $0x348] sm:$0xff]
        %v597 = vld [vmem:[#allocation5 + $0x350] sm:$0xff]
        %v598 = vld [vmem:[#allocation5 + $0x358] sm:$0xff]
        %v599 = vld [vmem:[#allocation5 + $0x360] sm:$0xff]
        %v600 = vld [vmem:[#allocation5 + $0x368] sm:$0xff]
        %v601 = vld [vmem:[#allocation5 + $0x370] sm:$0xff]
        %v602 = vld [vmem:[#allocation5 + $0x378] sm:$0xff]
        %v603 = vld [vmem:[#allocation5 + $0x380] sm:$0xff]
        %v604 = vld [vmem:[#allocation5 + $0x388] sm:$0xff]
        %v605 = vld [vmem:[#allocation5 + $0x390] sm:$0xff]
        %v606 = vld [vmem:[#allocation5 + $0x398] sm:$0xff]
        %v607 = vld [vmem:[#allocation5 + $0x3a0] sm:$0xff]
        %v608 = vld [vmem:[#allocation5 + $0x3a8] sm:$0xff]
        %v609 = vld [vmem:[#allocation5 + $0x3b0] sm:$0xff]
        %v610 = vld [vmem:[#allocation5 + $0x3b8] sm:$0xff]
        %v611 = vld [vmem:[#allocation5 + $0x3c0] sm:$0xff]
        %v612 = vld [vmem:[#allocation5 + $0x3c8] sm:$0xff]
        %v613 = vld [vmem:[#allocation5 + $0x3d0] sm:$0xff]
        %v614 = vld [vmem:[#allocation5 + $0x3d8] sm:$0xff]
        %v615 = vld [vmem:[#allocation5 + $0x3e0] sm:$0xff]
        %v616 = vld [vmem:[#allocation5 + $0x3e8] sm:$0xff]
        %v617 = vld [vmem:[#allocation5 + $0x3f0] sm:$0xff]
        %v618 = vld [vmem:[#allocation5 + $0x3f8] sm:$0xff]
        %v619 = vld [vmem:[#allocation5 + $0x400] sm:$0xff]
        %v620 = vld [vmem:[#allocation5 + $0x408] sm:$0xff]
        %v621 = vld [vmem:[#allocation5 + $0x410] sm:$0xff]
        %v622 = vld [vmem:[#allocation5 + $0x418] sm:$0xff]
        %v623 = vld [vmem:[#allocation5 + $0x420] sm:$0xff]
        %v624 = vld [vmem:[#allocation5 + $0x428] sm:$0xff]
        %v625 = vld [vmem:[#allocation5 + $0x430] sm:$0xff]
        %v626 = vld [vmem:[#allocation5 + $0x438] sm:$0xff]
        %v627 = vld [vmem:[#allocation5 + $0x440] sm:$0xff]
        %v628 = vld [vmem:[#allocation5 + $0x448] sm:$0xff]
        %v629 = vld [vmem:[#allocation5 + $0x450] sm:$0xff]
        %v630 = vld [vmem:[#allocation5 + $0x458] sm:$0xff]
        %v631 = vld [vmem:[#allocation5 + $0x460] sm:$0xff]
        %v632 = vld [vmem:[#allocation5 + $0x468] sm:$0xff]
        %v633 = vld [vmem:[#allocation5 + $0x470] sm:$0xff]
        %v634 = vld [vmem:[#allocation5 + $0x478] sm:$0xff]
        %v635 = vld [vmem:[#allocation5 + $0x480] sm:$0xff]
        %v636 = vld [vmem:[#allocation5 + $0x488] sm:$0xff]
        %v637 = vld [vmem:[#allocation5 + $0x490] sm:$0xff]
        %v638 = vld [vmem:[#allocation5 + $0x498] sm:$0xff]
        %v639 = vld [vmem:[#allocation5 + $0x4a0] sm:$0xff]
        %v640 = vld [vmem:[#allocation5 + $0x4a8] sm:$0xff]
        %v641 = vld [vmem:[#allocation5 + $0x4b0] sm:$0xff]
        %v642 = vld [vmem:[#allocation5 + $0x4b8] sm:$0xff]
        %v643 = vld [vmem:[#allocation5 + $0x4c0] sm:$0xff]
        %v644 = vld [vmem:[#allocation5 + $0x4c8] sm:$0xff]
        %v645 = vld [vmem:[#allocation5 + $0x4d0] sm:$0xff]
        %v646 = vld [vmem:[#allocation5 + $0x4d8] sm:$0xff]
        %v647 = vld [vmem:[#allocation5 + $0x4e0] sm:$0xff]
        %v648 = vld [vmem:[#allocation5 + $0x4e8] sm:$0xff]
        %v649 = vld [vmem:[#allocation5 + $0x4f0] sm:$0xff]
        %v650 = vld [vmem:[#allocation5 + $0x4f8] sm:$0xff]
        %v651 = vld [vmem:[#allocation5 + $0x500] sm:$0xff]
        %v652 = vld [vmem:[#allocation5 + $0x508] sm:$0xff]
        %v653 = vld [vmem:[#allocation5 + $0x510] sm:$0xff]
        %v654 = vld [vmem:[#allocation5 + $0x518] sm:$0xff]
        %v655 = vld [vmem:[#allocation5 + $0x520] sm:$0xff]
        %v656 = vld [vmem:[#allocation5 + $0x528] sm:$0xff]
        %v657 = vld [vmem:[#allocation5 + $0x530] sm:$0xff]
        %v658 = vld [vmem:[#allocation5 + $0x538] sm:$0xff]
        %v659 = vld [vmem:[#allocation5 + $0x540] sm:$0xff]
        %v660 = vld [vmem:[#allocation5 + $0x548] sm:$0xff]
        %v661 = vld [vmem:[#allocation5 + $0x550] sm:$0xff]
        %v662 = vld [vmem:[#allocation5 + $0x558] sm:$0xff]
        %v663 = vld [vmem:[#allocation5 + $0x560] sm:$0xff]
        %v664 = vld [vmem:[#allocation5 + $0x568] sm:$0xff]
        %v665 = vld [vmem:[#allocation5 + $0x570] sm:$0xff]
        %v666 = vld [vmem:[#allocation5 + $0x578] sm:$0xff]
        %v667 = vld [vmem:[#allocation5 + $0x580] sm:$0xff]
        %v668 = vld [vmem:[#allocation5 + $0x588] sm:$0xff]
        %v669 = vld [vmem:[#allocation5 + $0x590] sm:$0xff]
        %v670 = vld [vmem:[#allocation5 + $0x598] sm:$0xff]
        %v671 = vld [vmem:[#allocation5 + $0x5a0] sm:$0xff]
        %v672 = vld [vmem:[#allocation5 + $0x5a8] sm:$0xff]
        %v673 = vld [vmem:[#allocation5 + $0x5b0] sm:$0xff]
        %v674 = vld [vmem:[#allocation5 + $0x5b8] sm:$0xff]
        %v675 = vld [vmem:[#allocation5 + $0x5c0] sm:$0xff]
        %v676 = vld [vmem:[#allocation5 + $0x5c8] sm:$0xff]
        %v677 = vld [vmem:[#allocation5 + $0x5d0] sm:$0xff]
        %v678 = vld [vmem:[#allocation5 + $0x5d8] sm:$0xff]
        %v679 = vld [vmem:[#allocation5 + $0x5e0] sm:$0xff]
        %v680 = vld [vmem:[#allocation5 + $0x5e8] sm:$0xff]
        %v681 = vld [vmem:[#allocation5 + $0x5f0] sm:$0xff]
        %v682 = vld [vmem:[#allocation5 + $0x5f8] sm:$0xff]
        %v683 = vld [vmem:[#allocation5 + $0x600] sm:$0xff]
        %v684 = vld [vmem:[#allocation5 + $0x608] sm:$0xff]
        %v685 = vld [vmem:[#allocation5 + $0x610] sm:$0xff]
        %v686 = vld [vmem:[#allocation5 + $0x618] sm:$0xff]
        %v687 = vld [vmem:[#allocation5 + $0x620] sm:$0xff]
        %v688 = vld [vmem:[#allocation5 + $0x628] sm:$0xff]
        %v689 = vld [vmem:[#allocation5 + $0x630] sm:$0xff]
        %v690 = vld [vmem:[#allocation5 + $0x638] sm:$0xff]
        %v691 = vld [vmem:[#allocation5 + $0x640] sm:$0xff]
        %v692 = vld [vmem:[#allocation5 + $0x648] sm:$0xff]
        %v693 = vld [vmem:[#allocation5 + $0x650] sm:$0xff]
        %v694 = vld [vmem:[#allocation5 + $0x658] sm:$0xff]
        %v695 = vld [vmem:[#allocation5 + $0x660] sm:$0xff]
        %v696 = vld [vmem:[#allocation5 + $0x668] sm:$0xff]
        %v697 = vld [vmem:[#allocation5 + $0x670] sm:$0xff]
        %v698 = vld [vmem:[#allocation5 + $0x678] sm:$0xff]
        %v699 = vld [vmem:[#allocation5 + $0x680] sm:$0xff]
        %v700 = vld [vmem:[#allocation5 + $0x688] sm:$0xff]
        %v701 = vld [vmem:[#allocation5 + $0x690] sm:$0xff]
        %v702 = vld [vmem:[#allocation5 + $0x698] sm:$0xff]
        %v703 = vld [vmem:[#allocation5 + $0x6a0] sm:$0xff]
        %v704 = vld [vmem:[#allocation5 + $0x6a8] sm:$0xff]
        %v705 = vld [vmem:[#allocation5 + $0x6b0] sm:$0xff]
        %v706 = vld [vmem:[#allocation5 + $0x6b8] sm:$0xff]
        %v707 = vld [vmem:[#allocation5 + $0x6c0] sm:$0xff]
        %v708 = vld [vmem:[#allocation5 + $0x6c8] sm:$0xff]
        %v709 = vld [vmem:[#allocation5 + $0x6d0] sm:$0xff]
        %v710 = vld [vmem:[#allocation5 + $0x6d8] sm:$0xff]
        %v711 = vld [vmem:[#allocation5 + $0x6e0] sm:$0xff]
        %v712 = vld [vmem:[#allocation5 + $0x6e8] sm:$0xff]
        %v713 = vld [vmem:[#allocation5 + $0x6f0] sm:$0xff]
        %v714 = vld [vmem:[#allocation5 + $0x6f8] sm:$0xff]
        %v715 = vld [vmem:[#allocation5 + $0x700] sm:$0xff]
        %v716 = vld [vmem:[#allocation5 + $0x708] sm:$0xff]
        %v717 = vld [vmem:[#allocation5 + $0x710] sm:$0xff]
        %v718 = vld [vmem:[#allocation5 + $0x718] sm:$0xff]
        %v719 = vld [vmem:[#allocation5 + $0x720] sm:$0xff]
        %v720 = vld [vmem:[#allocation5 + $0x728] sm:$0xff]
        %v721 = vld [vmem:[#allocation5 + $0x730] sm:$0xff]
        %v722 = vld [vmem:[#allocation5 + $0x738] sm:$0xff]
        %v723 = vld [vmem:[#allocation5 + $0x740] sm:$0xff]
        %v724 = vld [vmem:[#allocation5 + $0x748] sm:$0xff]
        %v725 = vld [vmem:[#allocation5 + $0x750] sm:$0xff]
        %v726 = vld [vmem:[#allocation5 + $0x758] sm:$0xff]
        %v727 = vld [vmem:[#allocation5 + $0x760] sm:$0xff]
        %v728 = vld [vmem:[#allocation5 + $0x768] sm:$0xff]
        %v729 = vld [vmem:[#allocation5 + $0x770] sm:$0xff]
        %v730 = vld [vmem:[#allocation5 + $0x778] sm:$0xff]
        %v731 = vld [vmem:[#allocation5 + $0x780] sm:$0xff]
        %v732 = vld [vmem:[#allocation5 + $0x788] sm:$0xff]
        %v733 = vld [vmem:[#allocation5 + $0x790] sm:$0xff]
        %v734 = vld [vmem:[#allocation5 + $0x798] sm:$0xff]
        %v735 = vld [vmem:[#allocation5 + $0x7a0] sm:$0xff]
        %v736 = vld [vmem:[#allocation5 + $0x7a8] sm:$0xff]
        %v737 = vld [vmem:[#allocation5 + $0x7b0] sm:$0xff]
        %v738 = vld [vmem:[#allocation5 + $0x7b8] sm:$0xff]
        %v739 = vld [vmem:[#allocation5 + $0x7c0] sm:$0xff]
        %v740 = vld [vmem:[#allocation5 + $0x7c8] sm:$0xff]
        %v741 = vld [vmem:[#allocation5 + $0x7d0] sm:$0xff]
        %v742 = vld [vmem:[#allocation5 + $0x7d8] sm:$0xff]
        %v743 = vld [vmem:[#allocation5 + $0x7e0] sm:$0xff]
        %v744 = vld [vmem:[#allocation5 + $0x7e8] sm:$0xff]
        %v745 = vld [vmem:[#allocation5 + $0x7f0] sm:$0xff]
        %v746 = vld [vmem:[#allocation5 + $0x7f8] sm:$0xff]
        %v747 = vld [vmem:[%s2] sm:$0xf]
        %v749 = vlaneseq
        %v750 = vshrl.u32 %v749, 7
        %v751 = vsub.s32 0, %v750
        %v752 = vrot.slane %v747, %v751
        %v753 = vlaneseq
        %v754 = vshrl.u32 %v753, 7
        %v755 = vsub.s32 1, %v754
        %v756 = vrot.slane %v747, %v755
        %v757 = vlaneseq
        %v758 = vshrl.u32 %v757, 7
        %v759 = vsub.s32 2, %v758
        %v760 = vrot.slane %v747, %v759
        %v761 = vlaneseq
        %v762 = vshrl.u32 %v761, 7
        %v763 = vsub.s32 3, %v762
        %v764 = vrot.slane %v747, %v763
        %v897 = vunpack.c.l.b16 %v363
        %v898 = vunpack.c.h.b16 %v363
        %v899 = vunpack.c.l.b16 %v364
        %v900 = vunpack.c.h.b16 %v364
        %v901 = vunpack.c.l.b16 %v365
        %v902 = vunpack.c.h.b16 %v365
        %v903 = vunpack.c.l.b16 %v366
        %v904 = vunpack.c.h.b16 %v366
        %v905 = vunpack.c.l.b16 %v367
        %v906 = vunpack.c.h.b16 %v367
        %v907 = vunpack.c.l.b16 %v368
        %v908 = vunpack.c.h.b16 %v368
        %v909 = vunpack.c.l.b16 %v369
        %v910 = vunpack.c.h.b16 %v369
        %v911 = vunpack.c.l.b16 %v370
        %v912 = vunpack.c.h.b16 %v370
        %v913 = vunpack.c.l.b16 %v371
        %v914 = vunpack.c.h.b16 %v371
        %v915 = vunpack.c.l.b16 %v372
        %v916 = vunpack.c.h.b16 %v372
        %v917 = vunpack.c.l.b16 %v373
        %v918 = vunpack.c.h.b16 %v373
        %v919 = vunpack.c.l.b16 %v374
        %v920 = vunpack.c.h.b16 %v374
        %v921 = vunpack.c.l.b16 %v375
        %v922 = vunpack.c.h.b16 %v375
        %v923 = vunpack.c.l.b16 %v376
        %v924 = vunpack.c.h.b16 %v376
        %v925 = vunpack.c.l.b16 %v377
        %v926 = vunpack.c.h.b16 %v377
        %v927 = vunpack.c.l.b16 %v378
        %v928 = vunpack.c.h.b16 %v378
        %v929 = vunpack.c.l.b16 %v379
        %v930 = vunpack.c.h.b16 %v379
        %v931 = vunpack.c.l.b16 %v380
        %v932 = vunpack.c.h.b16 %v380
        %v933 = vunpack.c.l.b16 %v381
        %v934 = vunpack.c.h.b16 %v381
        %v935 = vunpack.c.l.b16 %v382
        %v936 = vunpack.c.h.b16 %v382
        %v937 = vunpack.c.l.b16 %v383
        %v938 = vunpack.c.h.b16 %v383
        %v939 = vunpack.c.l.b16 %v384
        %v940 = vunpack.c.h.b16 %v384
        %v941 = vunpack.c.l.b16 %v385
        %v942 = vunpack.c.h.b16 %v385
        %v943 = vunpack.c.l.b16 %v386
        %v944 = vunpack.c.h.b16 %v386
        %v945 = vunpack.c.l.b16 %v387
        %v946 = vunpack.c.h.b16 %v387
        %v947 = vunpack.c.l.b16 %v388
        %v948 = vunpack.c.h.b16 %v388
        %v949 = vunpack.c.l.b16 %v389
        %v950 = vunpack.c.h.b16 %v389
        %v951 = vunpack.c.l.b16 %v390
        %v952 = vunpack.c.h.b16 %v390
        %v953 = vunpack.c.l.b16 %v391
        %v954 = vunpack.c.h.b16 %v391
        %v955 = vunpack.c.l.b16 %v392
        %v956 = vunpack.c.h.b16 %v392
        %v957 = vunpack.c.l.b16 %v393
        %v958 = vunpack.c.h.b16 %v393
        %v959 = vunpack.c.l.b16 %v394
        %v960 = vunpack.c.h.b16 %v394
        %v961 = vunpack.c.l.b16 %v395
        %v962 = vunpack.c.h.b16 %v395
        %v963 = vunpack.c.l.b16 %v396
        %v964 = vunpack.c.h.b16 %v396
        %v965 = vunpack.c.l.b16 %v397
        %v966 = vunpack.c.h.b16 %v397
        %v967 = vunpack.c.l.b16 %v398
        %v968 = vunpack.c.h.b16 %v398
        %v969 = vunpack.c.l.b16 %v399
        %v970 = vunpack.c.h.b16 %v399
        %v971 = vunpack.c.l.b16 %v400
        %v972 = vunpack.c.h.b16 %v400
        %v973 = vunpack.c.l.b16 %v401
        %v974 = vunpack.c.h.b16 %v401
        %v975 = vunpack.c.l.b16 %v402
        %v976 = vunpack.c.h.b16 %v402
        %v977 = vunpack.c.l.b16 %v403
        %v978 = vunpack.c.h.b16 %v403
        %v979 = vunpack.c.l.b16 %v404
        %v980 = vunpack.c.h.b16 %v404
        %v981 = vunpack.c.l.b16 %v405
        %v982 = vunpack.c.h.b16 %v405
        %v983 = vunpack.c.l.b16 %v406
        %v984 = vunpack.c.h.b16 %v406
        %v985 = vunpack.c.l.b16 %v407
        %v986 = vunpack.c.h.b16 %v407
        %v987 = vunpack.c.l.b16 %v408
        %v988 = vunpack.c.h.b16 %v408
        %v989 = vunpack.c.l.b16 %v409
        %v990 = vunpack.c.h.b16 %v409
        %v991 = vunpack.c.l.b16 %v410
        %v992 = vunpack.c.h.b16 %v410
        %v993 = vunpack.c.l.b16 %v411
        %v994 = vunpack.c.h.b16 %v411
        %v995 = vunpack.c.l.b16 %v412
        %v996 = vunpack.c.h.b16 %v412
        %v997 = vunpack.c.l.b16 %v413
        %v998 = vunpack.c.h.b16 %v413
        %v999 = vunpack.c.l.b16 %v414
        %v1000 = vunpack.c.h.b16 %v414
        %v1001 = vunpack.c.l.b16 %v415
        %v1002 = vunpack.c.h.b16 %v415
        %v1003 = vunpack.c.l.b16 %v416
        %v1004 = vunpack.c.h.b16 %v416
        %v1005 = vunpack.c.l.b16 %v417
        %v1006 = vunpack.c.h.b16 %v417
        %v1007 = vunpack.c.l.b16 %v418
        %v1008 = vunpack.c.h.b16 %v418
        %v1009 = vunpack.c.l.b16 %v419
        %v1010 = vunpack.c.h.b16 %v419
        %v1011 = vunpack.c.l.b16 %v420
        %v1012 = vunpack.c.h.b16 %v420
        %v1013 = vunpack.c.l.b16 %v421
        %v1014 = vunpack.c.h.b16 %v421
        %v1015 = vunpack.c.l.b16 %v422
        %v1016 = vunpack.c.h.b16 %v422
        %v1017 = vunpack.c.l.b16 %v423
        %v1018 = vunpack.c.h.b16 %v423
        %v1019 = vunpack.c.l.b16 %v424
        %v1020 = vunpack.c.h.b16 %v424
        %v1021 = vunpack.c.l.b16 %v425
        %v1022 = vunpack.c.h.b16 %v425
        %v1023 = vunpack.c.l.b16 %v426
        %v1024 = vunpack.c.h.b16 %v426
        %v1025 = vunpack.c.l.b16 %v427
        %v1026 = vunpack.c.h.b16 %v427
        %v1027 = vunpack.c.l.b16 %v428
        %v1028 = vunpack.c.h.b16 %v428
        %v1029 = vunpack.c.l.b16 %v429
        %v1030 = vunpack.c.h.b16 %v429
        %v1031 = vunpack.c.l.b16 %v430
        %v1032 = vunpack.c.h.b16 %v430
        %v1033 = vunpack.c.l.b16 %v431
        %v1034 = vunpack.c.h.b16 %v431
        %v1035 = vunpack.c.l.b16 %v432
        %v1036 = vunpack.c.h.b16 %v432
        %v1037 = vunpack.c.l.b16 %v433
        %v1038 = vunpack.c.h.b16 %v433
        %v1039 = vunpack.c.l.b16 %v434
        %v1040 = vunpack.c.h.b16 %v434
        %v1041 = vunpack.c.l.b16 %v435
        %v1042 = vunpack.c.h.b16 %v435
        %v1043 = vunpack.c.l.b16 %v436
        %v1044 = vunpack.c.h.b16 %v436
        %v1045 = vunpack.c.l.b16 %v437
        %v1046 = vunpack.c.h.b16 %v437
        %v1047 = vunpack.c.l.b16 %v438
        %v1048 = vunpack.c.h.b16 %v438
        %v1049 = vunpack.c.l.b16 %v439
        %v1050 = vunpack.c.h.b16 %v439
        %v1051 = vunpack.c.l.b16 %v440
        %v1052 = vunpack.c.h.b16 %v440
        %v1053 = vunpack.c.l.b16 %v441
        %v1054 = vunpack.c.h.b16 %v441
        %v1055 = vunpack.c.l.b16 %v442
        %v1056 = vunpack.c.h.b16 %v442
        %v1057 = vunpack.c.l.b16 %v443
        %v1058 = vunpack.c.h.b16 %v443
        %v1059 = vunpack.c.l.b16 %v444
        %v1060 = vunpack.c.h.b16 %v444
        %v1061 = vunpack.c.l.b16 %v445
        %v1062 = vunpack.c.h.b16 %v445
        %v1063 = vunpack.c.l.b16 %v446
        %v1064 = vunpack.c.h.b16 %v446
        %v1065 = vunpack.c.l.b16 %v447
        %v1066 = vunpack.c.h.b16 %v447
        %v1067 = vunpack.c.l.b16 %v448
        %v1068 = vunpack.c.h.b16 %v448
        %v1069 = vunpack.c.l.b16 %v449
        %v1070 = vunpack.c.h.b16 %v449
        %v1071 = vunpack.c.l.b16 %v450
        %v1072 = vunpack.c.h.b16 %v450
        %v1073 = vunpack.c.l.b16 %v451
        %v1074 = vunpack.c.h.b16 %v451
        %v1075 = vunpack.c.l.b16 %v452
        %v1076 = vunpack.c.h.b16 %v452
        %v1077 = vunpack.c.l.b16 %v453
        %v1078 = vunpack.c.h.b16 %v453
        %v1079 = vunpack.c.l.b16 %v454
        %v1080 = vunpack.c.h.b16 %v454
        %v1081 = vunpack.c.l.b16 %v455
        %v1082 = vunpack.c.h.b16 %v455
        %v1083 = vunpack.c.l.b16 %v456
        %v1084 = vunpack.c.h.b16 %v456
        %v1085 = vunpack.c.l.b16 %v457
        %v1086 = vunpack.c.h.b16 %v457
        %v1087 = vunpack.c.l.b16 %v458
        %v1088 = vunpack.c.h.b16 %v458
        %v1089 = vunpack.c.l.b16 %v459
        %v1090 = vunpack.c.h.b16 %v459
        %v1091 = vunpack.c.l.b16 %v460
        %v1092 = vunpack.c.h.b16 %v460
        %v1093 = vunpack.c.l.b16 %v461
        %v1094 = vunpack.c.h.b16 %v461
        %v1095 = vunpack.c.l.b16 %v462
        %v1096 = vunpack.c.h.b16 %v462
        %v1097 = vunpack.c.l.b16 %v463
        %v1098 = vunpack.c.h.b16 %v463
        %v1099 = vunpack.c.l.b16 %v464
        %v1100 = vunpack.c.h.b16 %v464
        %v1101 = vunpack.c.l.b16 %v465
        %v1102 = vunpack.c.h.b16 %v465
        %v1103 = vunpack.c.l.b16 %v466
        %v1104 = vunpack.c.h.b16 %v466
        %v1105 = vunpack.c.l.b16 %v467
        %v1106 = vunpack.c.h.b16 %v467
        %v1107 = vunpack.c.l.b16 %v468
        %v1108 = vunpack.c.h.b16 %v468
        %v1109 = vunpack.c.l.b16 %v469
        %v1110 = vunpack.c.h.b16 %v469
        %v1111 = vunpack.c.l.b16 %v470
        %v1112 = vunpack.c.h.b16 %v470
        %v1113 = vunpack.c.l.b16 %v471
        %v1114 = vunpack.c.h.b16 %v471
        %v1115 = vunpack.c.l.b16 %v472
        %v1116 = vunpack.c.h.b16 %v472
        %v1117 = vunpack.c.l.b16 %v473
        %v1118 = vunpack.c.h.b16 %v473
        %v1119 = vunpack.c.l.b16 %v474
        %v1120 = vunpack.c.h.b16 %v474
        %v1121 = vunpack.c.l.b16 %v475
        %v1122 = vunpack.c.h.b16 %v475
        %v1123 = vunpack.c.l.b16 %v476
        %v1124 = vunpack.c.h.b16 %v476
        %v1125 = vunpack.c.l.b16 %v477
        %v1126 = vunpack.c.h.b16 %v477
        %v1127 = vunpack.c.l.b16 %v478
        %v1128 = vunpack.c.h.b16 %v478
        %v1129 = vunpack.c.l.b16 %v479
        %v1130 = vunpack.c.h.b16 %v479
        %v1131 = vunpack.c.l.b16 %v480
        %v1132 = vunpack.c.h.b16 %v480
        %v1133 = vunpack.c.l.b16 %v481
        %v1134 = vunpack.c.h.b16 %v481
        %v1135 = vunpack.c.l.b16 %v482
        %v1136 = vunpack.c.h.b16 %v482
        %v1137 = vunpack.c.l.b16 %v483
        %v1138 = vunpack.c.h.b16 %v483
        %v1139 = vunpack.c.l.b16 %v484
        %v1140 = vunpack.c.h.b16 %v484
        %v1141 = vunpack.c.l.b16 %v485
        %v1142 = vunpack.c.h.b16 %v485
        %v1143 = vunpack.c.l.b16 %v486
        %v1144 = vunpack.c.h.b16 %v486
        %v1145 = vunpack.c.l.b16 %v487
        %v1146 = vunpack.c.h.b16 %v487
        %v1147 = vunpack.c.l.b16 %v488
        %v1148 = vunpack.c.h.b16 %v488
        %v1149 = vunpack.c.l.b16 %v489
        %v1150 = vunpack.c.h.b16 %v489
        %v1151 = vunpack.c.l.b16 %v490
        %v1152 = vunpack.c.h.b16 %v490
        %v1153 = vpack.c.b16 %v905, %v897
        %v1154 = vpack.c.b16 %v906, %v898
        %v1155 = vpack.c.b16 %v907, %v899
        %v1156 = vpack.c.b16 %v908, %v900
        %v1157 = vpack.c.b16 %v909, %v901
        %v1158 = vpack.c.b16 %v910, %v902
        %v1159 = vpack.c.b16 %v911, %v903
        %v1160 = vpack.c.b16 %v912, %v904
        %v1161 = vpack.c.b16 %v921, %v913
        %v1162 = vpack.c.b16 %v922, %v914
        %v1163 = vpack.c.b16 %v923, %v915
        %v1164 = vpack.c.b16 %v924, %v916
        %v1165 = vpack.c.b16 %v925, %v917
        %v1166 = vpack.c.b16 %v926, %v918
        %v1167 = vpack.c.b16 %v927, %v919
        %v1168 = vpack.c.b16 %v928, %v920
        %v1169 = vpack.c.b16 %v937, %v929
        %v1170 = vpack.c.b16 %v938, %v930
        %v1171 = vpack.c.b16 %v939, %v931
        %v1172 = vpack.c.b16 %v940, %v932
        %v1173 = vpack.c.b16 %v941, %v933
        %v1174 = vpack.c.b16 %v942, %v934
        %v1175 = vpack.c.b16 %v943, %v935
        %v1176 = vpack.c.b16 %v944, %v936
        %v1177 = vpack.c.b16 %v953, %v945
        %v1178 = vpack.c.b16 %v954, %v946
        %v1179 = vpack.c.b16 %v955, %v947
        %v1180 = vpack.c.b16 %v956, %v948
        %v1181 = vpack.c.b16 %v957, %v949
        %v1182 = vpack.c.b16 %v958, %v950
        %v1183 = vpack.c.b16 %v959, %v951
        %v1184 = vpack.c.b16 %v960, %v952
        %v1185 = vpack.c.b16 %v969, %v961
        %v1186 = vpack.c.b16 %v970, %v962
        %v1187 = vpack.c.b16 %v971, %v963
        %v1188 = vpack.c.b16 %v972, %v964
        %v1189 = vpack.c.b16 %v973, %v965
        %v1190 = vpack.c.b16 %v974, %v966
        %v1191 = vpack.c.b16 %v975, %v967
        %v1192 = vpack.c.b16 %v976, %v968
        %v1193 = vpack.c.b16 %v985, %v977
        %v1194 = vpack.c.b16 %v986, %v978
        %v1195 = vpack.c.b16 %v987, %v979
        %v1196 = vpack.c.b16 %v988, %v980
        %v1197 = vpack.c.b16 %v989, %v981
        %v1198 = vpack.c.b16 %v990, %v982
        %v1199 = vpack.c.b16 %v991, %v983
        %v1200 = vpack.c.b16 %v992, %v984
        %v1201 = vpack.c.b16 %v1001, %v993
        %v1202 = vpack.c.b16 %v1002, %v994
        %v1203 = vpack.c.b16 %v1003, %v995
        %v1204 = vpack.c.b16 %v1004, %v996
        %v1205 = vpack.c.b16 %v1005, %v997
        %v1206 = vpack.c.b16 %v1006, %v998
        %v1207 = vpack.c.b16 %v1007, %v999
        %v1208 = vpack.c.b16 %v1008, %v1000
        %v1209 = vpack.c.b16 %v1017, %v1009
        %v1210 = vpack.c.b16 %v1018, %v1010
        %v1211 = vpack.c.b16 %v1019, %v1011
        %v1212 = vpack.c.b16 %v1020, %v1012
        %v1213 = vpack.c.b16 %v1021, %v1013
        %v1214 = vpack.c.b16 %v1022, %v1014
        %v1215 = vpack.c.b16 %v1023, %v1015
        %v1216 = vpack.c.b16 %v1024, %v1016
        %v1217 = vpack.c.b16 %v1033, %v1025
        %v1218 = vpack.c.b16 %v1034, %v1026
        %v1219 = vpack.c.b16 %v1035, %v1027
        %v1220 = vpack.c.b16 %v1036, %v1028
        %v1221 = vpack.c.b16 %v1037, %v1029
        %v1222 = vpack.c.b16 %v1038, %v1030
        %v1223 = vpack.c.b16 %v1039, %v1031
        %v1224 = vpack.c.b16 %v1040, %v1032
        %v1225 = vpack.c.b16 %v1049, %v1041
        %v1226 = vpack.c.b16 %v1050, %v1042
        %v1227 = vpack.c.b16 %v1051, %v1043
        %v1228 = vpack.c.b16 %v1052, %v1044
        %v1229 = vpack.c.b16 %v1053, %v1045
        %v1230 = vpack.c.b16 %v1054, %v1046
        %v1231 = vpack.c.b16 %v1055, %v1047
        %v1232 = vpack.c.b16 %v1056, %v1048
        %v1233 = vpack.c.b16 %v1065, %v1057
        %v1234 = vpack.c.b16 %v1066, %v1058
        %v1235 = vpack.c.b16 %v1067, %v1059
        %v1236 = vpack.c.b16 %v1068, %v1060
        %v1237 = vpack.c.b16 %v1069, %v1061
        %v1238 = vpack.c.b16 %v1070, %v1062
        %v1239 = vpack.c.b16 %v1071, %v1063
        %v1240 = vpack.c.b16 %v1072, %v1064
        %v1241 = vpack.c.b16 %v1081, %v1073
        %v1242 = vpack.c.b16 %v1082, %v1074
        %v1243 = vpack.c.b16 %v1083, %v1075
        %v1244 = vpack.c.b16 %v1084, %v1076
        %v1245 = vpack.c.b16 %v1085, %v1077
        %v1246 = vpack.c.b16 %v1086, %v1078
        %v1247 = vpack.c.b16 %v1087, %v1079
        %v1248 = vpack.c.b16 %v1088, %v1080
        %v1249 = vpack.c.b16 %v1097, %v1089
        %v1250 = vpack.c.b16 %v1098, %v1090
        %v1251 = vpack.c.b16 %v1099, %v1091
        %v1252 = vpack.c.b16 %v1100, %v1092
        %v1253 = vpack.c.b16 %v1101, %v1093
        %v1254 = vpack.c.b16 %v1102, %v1094
        %v1255 = vpack.c.b16 %v1103, %v1095
        %v1256 = vpack.c.b16 %v1104, %v1096
        %v1257 = vpack.c.b16 %v1113, %v1105
        %v1258 = vpack.c.b16 %v1114, %v1106
        %v1259 = vpack.c.b16 %v1115, %v1107
        %v1260 = vpack.c.b16 %v1116, %v1108
        %v1261 = vpack.c.b16 %v1117, %v1109
        %v1262 = vpack.c.b16 %v1118, %v1110
        %v1263 = vpack.c.b16 %v1119, %v1111
        %v1264 = vpack.c.b16 %v1120, %v1112
        %v1265 = vpack.c.b16 %v1129, %v1121
        %v1266 = vpack.c.b16 %v1130, %v1122
        %v1267 = vpack.c.b16 %v1131, %v1123
        %v1268 = vpack.c.b16 %v1132, %v1124
        %v1269 = vpack.c.b16 %v1133, %v1125
        %v1270 = vpack.c.b16 %v1134, %v1126
        %v1271 = vpack.c.b16 %v1135, %v1127
        %v1272 = vpack.c.b16 %v1136, %v1128
        %v1273 = vpack.c.b16 %v1145, %v1137
        %v1274 = vpack.c.b16 %v1146, %v1138
        %v1275 = vpack.c.b16 %v1147, %v1139
        %v1276 = vpack.c.b16 %v1148, %v1140
        %v1277 = vpack.c.b16 %v1149, %v1141
        %v1278 = vpack.c.b16 %v1150, %v1142
        %v1279 = vpack.c.b16 %v1151, %v1143
        %v1280 = vpack.c.b16 %v1152, %v1144
        %v1665 = vunpack.c.l.b16 %v491
        %v1666 = vunpack.c.h.b16 %v491
        %v1667 = vunpack.c.l.b16 %v492
        %v1668 = vunpack.c.h.b16 %v492
        %v1669 = vunpack.c.l.b16 %v493
        %v1670 = vunpack.c.h.b16 %v493
        %v1671 = vunpack.c.l.b16 %v494
        %v1672 = vunpack.c.h.b16 %v494
        %v1673 = vunpack.c.l.b16 %v495
        %v1674 = vunpack.c.h.b16 %v495
        %v1675 = vunpack.c.l.b16 %v496
        %v1676 = vunpack.c.h.b16 %v496
        %v1677 = vunpack.c.l.b16 %v497
        %v1678 = vunpack.c.h.b16 %v497
        %v1679 = vunpack.c.l.b16 %v498
        %v1680 = vunpack.c.h.b16 %v498
        %v1681 = vunpack.c.l.b16 %v499
        %v1682 = vunpack.c.h.b16 %v499
        %v1683 = vunpack.c.l.b16 %v500
        %v1684 = vunpack.c.h.b16 %v500
        %v1685 = vunpack.c.l.b16 %v501
        %v1686 = vunpack.c.h.b16 %v501
        %v1687 = vunpack.c.l.b16 %v502
        %v1688 = vunpack.c.h.b16 %v502
        %v1689 = vunpack.c.l.b16 %v503
        %v1690 = vunpack.c.h.b16 %v503
        %v1691 = vunpack.c.l.b16 %v504
        %v1692 = vunpack.c.h.b16 %v504
        %v1693 = vunpack.c.l.b16 %v505
        %v1694 = vunpack.c.h.b16 %v505
        %v1695 = vunpack.c.l.b16 %v506
        %v1696 = vunpack.c.h.b16 %v506
        %v1697 = vunpack.c.l.b16 %v507
        %v1698 = vunpack.c.h.b16 %v507
        %v1699 = vunpack.c.l.b16 %v508
        %v1700 = vunpack.c.h.b16 %v508
        %v1701 = vunpack.c.l.b16 %v509
        %v1702 = vunpack.c.h.b16 %v509
        %v1703 = vunpack.c.l.b16 %v510
        %v1704 = vunpack.c.h.b16 %v510
        %v1705 = vunpack.c.l.b16 %v511
        %v1706 = vunpack.c.h.b16 %v511
        %v1707 = vunpack.c.l.b16 %v512
        %v1708 = vunpack.c.h.b16 %v512
        %v1709 = vunpack.c.l.b16 %v513
        %v1710 = vunpack.c.h.b16 %v513
        %v1711 = vunpack.c.l.b16 %v514
        %v1712 = vunpack.c.h.b16 %v514
        %v1713 = vunpack.c.l.b16 %v515
        %v1714 = vunpack.c.h.b16 %v515
        %v1715 = vunpack.c.l.b16 %v516
        %v1716 = vunpack.c.h.b16 %v516
        %v1717 = vunpack.c.l.b16 %v517
        %v1718 = vunpack.c.h.b16 %v517
        %v1719 = vunpack.c.l.b16 %v518
        %v1720 = vunpack.c.h.b16 %v518
        %v1721 = vunpack.c.l.b16 %v519
        %v1722 = vunpack.c.h.b16 %v519
        %v1723 = vunpack.c.l.b16 %v520
        %v1724 = vunpack.c.h.b16 %v520
        %v1725 = vunpack.c.l.b16 %v521
        %v1726 = vunpack.c.h.b16 %v521
        %v1727 = vunpack.c.l.b16 %v522
        %v1728 = vunpack.c.h.b16 %v522
        %v1729 = vunpack.c.l.b16 %v523
        %v1730 = vunpack.c.h.b16 %v523
        %v1731 = vunpack.c.l.b16 %v524
        %v1732 = vunpack.c.h.b16 %v524
        %v1733 = vunpack.c.l.b16 %v525
        %v1734 = vunpack.c.h.b16 %v525
        %v1735 = vunpack.c.l.b16 %v526
        %v1736 = vunpack.c.h.b16 %v526
        %v1737 = vunpack.c.l.b16 %v527
        %v1738 = vunpack.c.h.b16 %v527
        %v1739 = vunpack.c.l.b16 %v528
        %v1740 = vunpack.c.h.b16 %v528
        %v1741 = vunpack.c.l.b16 %v529
        %v1742 = vunpack.c.h.b16 %v529
        %v1743 = vunpack.c.l.b16 %v530
        %v1744 = vunpack.c.h.b16 %v530
        %v1745 = vunpack.c.l.b16 %v531
        %v1746 = vunpack.c.h.b16 %v531
        %v1747 = vunpack.c.l.b16 %v532
        %v1748 = vunpack.c.h.b16 %v532
        %v1749 = vunpack.c.l.b16 %v533
        %v1750 = vunpack.c.h.b16 %v533
        %v1751 = vunpack.c.l.b16 %v534
        %v1752 = vunpack.c.h.b16 %v534
        %v1753 = vunpack.c.l.b16 %v535
        %v1754 = vunpack.c.h.b16 %v535
        %v1755 = vunpack.c.l.b16 %v536
        %v1756 = vunpack.c.h.b16 %v536
        %v1757 = vunpack.c.l.b16 %v537
        %v1758 = vunpack.c.h.b16 %v537
        %v1759 = vunpack.c.l.b16 %v538
        %v1760 = vunpack.c.h.b16 %v538
        %v1761 = vunpack.c.l.b16 %v539
        %v1762 = vunpack.c.h.b16 %v539
        %v1763 = vunpack.c.l.b16 %v540
        %v1764 = vunpack.c.h.b16 %v540
        %v1765 = vunpack.c.l.b16 %v541
        %v1766 = vunpack.c.h.b16 %v541
        %v1767 = vunpack.c.l.b16 %v542
        %v1768 = vunpack.c.h.b16 %v542
        %v1769 = vunpack.c.l.b16 %v543
        %v1770 = vunpack.c.h.b16 %v543
        %v1771 = vunpack.c.l.b16 %v544
        %v1772 = vunpack.c.h.b16 %v544
        %v1773 = vunpack.c.l.b16 %v545
        %v1774 = vunpack.c.h.b16 %v545
        %v1775 = vunpack.c.l.b16 %v546
        %v1776 = vunpack.c.h.b16 %v546
        %v1777 = vunpack.c.l.b16 %v547
        %v1778 = vunpack.c.h.b16 %v547
        %v1779 = vunpack.c.l.b16 %v548
        %v1780 = vunpack.c.h.b16 %v548
        %v1781 = vunpack.c.l.b16 %v549
        %v1782 = vunpack.c.h.b16 %v549
        %v1783 = vunpack.c.l.b16 %v550
        %v1784 = vunpack.c.h.b16 %v550
        %v1785 = vunpack.c.l.b16 %v551
        %v1786 = vunpack.c.h.b16 %v551
        %v1787 = vunpack.c.l.b16 %v552
        %v1788 = vunpack.c.h.b16 %v552
        %v1789 = vunpack.c.l.b16 %v553
        %v1790 = vunpack.c.h.b16 %v553
        %v1791 = vunpack.c.l.b16 %v554
        %v1792 = vunpack.c.h.b16 %v554
        %v1793 = vunpack.c.l.b16 %v555
        %v1794 = vunpack.c.h.b16 %v555
        %v1795 = vunpack.c.l.b16 %v556
        %v1796 = vunpack.c.h.b16 %v556
        %v1797 = vunpack.c.l.b16 %v557
        %v1798 = vunpack.c.h.b16 %v557
        %v1799 = vunpack.c.l.b16 %v558
        %v1800 = vunpack.c.h.b16 %v558
        %v1801 = vunpack.c.l.b16 %v559
        %v1802 = vunpack.c.h.b16 %v559
        %v1803 = vunpack.c.l.b16 %v560
        %v1804 = vunpack.c.h.b16 %v560
        %v1805 = vunpack.c.l.b16 %v561
        %v1806 = vunpack.c.h.b16 %v561
        %v1807 = vunpack.c.l.b16 %v562
        %v1808 = vunpack.c.h.b16 %v562
        %v1809 = vunpack.c.l.b16 %v563
        %v1810 = vunpack.c.h.b16 %v563
        %v1811 = vunpack.c.l.b16 %v564
        %v1812 = vunpack.c.h.b16 %v564
        %v1813 = vunpack.c.l.b16 %v565
        %v1814 = vunpack.c.h.b16 %v565
        %v1815 = vunpack.c.l.b16 %v566
        %v1816 = vunpack.c.h.b16 %v566
        %v1817 = vunpack.c.l.b16 %v567
        %v1818 = vunpack.c.h.b16 %v567
        %v1819 = vunpack.c.l.b16 %v568
        %v1820 = vunpack.c.h.b16 %v568
        %v1821 = vunpack.c.l.b16 %v569
        %v1822 = vunpack.c.h.b16 %v569
        %v1823 = vunpack.c.l.b16 %v570
        %v1824 = vunpack.c.h.b16 %v570
        %v1825 = vunpack.c.l.b16 %v571
        %v1826 = vunpack.c.h.b16 %v571
        %v1827 = vunpack.c.l.b16 %v572
        %v1828 = vunpack.c.h.b16 %v572
        %v1829 = vunpack.c.l.b16 %v573
        %v1830 = vunpack.c.h.b16 %v573
        %v1831 = vunpack.c.l.b16 %v574
        %v1832 = vunpack.c.h.b16 %v574
        %v1833 = vunpack.c.l.b16 %v575
        %v1834 = vunpack.c.h.b16 %v575
        %v1835 = vunpack.c.l.b16 %v576
        %v1836 = vunpack.c.h.b16 %v576
        %v1837 = vunpack.c.l.b16 %v577
        %v1838 = vunpack.c.h.b16 %v577
        %v1839 = vunpack.c.l.b16 %v578
        %v1840 = vunpack.c.h.b16 %v578
        %v1841 = vunpack.c.l.b16 %v579
        %v1842 = vunpack.c.h.b16 %v579
        %v1843 = vunpack.c.l.b16 %v580
        %v1844 = vunpack.c.h.b16 %v580
        %v1845 = vunpack.c.l.b16 %v581
        %v1846 = vunpack.c.h.b16 %v581
        %v1847 = vunpack.c.l.b16 %v582
        %v1848 = vunpack.c.h.b16 %v582
        %v1849 = vunpack.c.l.b16 %v583
        %v1850 = vunpack.c.h.b16 %v583
        %v1851 = vunpack.c.l.b16 %v584
        %v1852 = vunpack.c.h.b16 %v584
        %v1853 = vunpack.c.l.b16 %v585
        %v1854 = vunpack.c.h.b16 %v585
        %v1855 = vunpack.c.l.b16 %v586
        %v1856 = vunpack.c.h.b16 %v586
        %v1857 = vunpack.c.l.b16 %v587
        %v1858 = vunpack.c.h.b16 %v587
        %v1859 = vunpack.c.l.b16 %v588
        %v1860 = vunpack.c.h.b16 %v588
        %v1861 = vunpack.c.l.b16 %v589
        %v1862 = vunpack.c.h.b16 %v589
        %v1863 = vunpack.c.l.b16 %v590
        %v1864 = vunpack.c.h.b16 %v590
        %v1865 = vunpack.c.l.b16 %v591
        %v1866 = vunpack.c.h.b16 %v591
        %v1867 = vunpack.c.l.b16 %v592
        %v1868 = vunpack.c.h.b16 %v592
        %v1869 = vunpack.c.l.b16 %v593
        %v1870 = vunpack.c.h.b16 %v593
        %v1871 = vunpack.c.l.b16 %v594
        %v1872 = vunpack.c.h.b16 %v594
        %v1873 = vunpack.c.l.b16 %v595
        %v1874 = vunpack.c.h.b16 %v595
        %v1875 = vunpack.c.l.b16 %v596
        %v1876 = vunpack.c.h.b16 %v596
        %v1877 = vunpack.c.l.b16 %v597
        %v1878 = vunpack.c.h.b16 %v597
        %v1879 = vunpack.c.l.b16 %v598
        %v1880 = vunpack.c.h.b16 %v598
        %v1881 = vunpack.c.l.b16 %v599
        %v1882 = vunpack.c.h.b16 %v599
        %v1883 = vunpack.c.l.b16 %v600
        %v1884 = vunpack.c.h.b16 %v600
        %v1885 = vunpack.c.l.b16 %v601
        %v1886 = vunpack.c.h.b16 %v601
        %v1887 = vunpack.c.l.b16 %v602
        %v1888 = vunpack.c.h.b16 %v602
        %v1889 = vunpack.c.l.b16 %v603
        %v1890 = vunpack.c.h.b16 %v603
        %v1891 = vunpack.c.l.b16 %v604
        %v1892 = vunpack.c.h.b16 %v604
        %v1893 = vunpack.c.l.b16 %v605
        %v1894 = vunpack.c.h.b16 %v605
        %v1895 = vunpack.c.l.b16 %v606
        %v1896 = vunpack.c.h.b16 %v606
        %v1897 = vunpack.c.l.b16 %v607
        %v1898 = vunpack.c.h.b16 %v607
        %v1899 = vunpack.c.l.b16 %v608
        %v1900 = vunpack.c.h.b16 %v608
        %v1901 = vunpack.c.l.b16 %v609
        %v1902 = vunpack.c.h.b16 %v609
        %v1903 = vunpack.c.l.b16 %v610
        %v1904 = vunpack.c.h.b16 %v610
        %v1905 = vunpack.c.l.b16 %v611
        %v1906 = vunpack.c.h.b16 %v611
        %v1907 = vunpack.c.l.b16 %v612
        %v1908 = vunpack.c.h.b16 %v612
        %v1909 = vunpack.c.l.b16 %v613
        %v1910 = vunpack.c.h.b16 %v613
        %v1911 = vunpack.c.l.b16 %v614
        %v1912 = vunpack.c.h.b16 %v614
        %v1913 = vunpack.c.l.b16 %v615
        %v1914 = vunpack.c.h.b16 %v615
        %v1915 = vunpack.c.l.b16 %v616
        %v1916 = vunpack.c.h.b16 %v616
        %v1917 = vunpack.c.l.b16 %v617
        %v1918 = vunpack.c.h.b16 %v617
        %v1919 = vunpack.c.l.b16 %v618
        %v1920 = vunpack.c.h.b16 %v618
        %v1921 = vunpack.c.l.b16 %v619
        %v1922 = vunpack.c.h.b16 %v619
        %v1923 = vunpack.c.l.b16 %v620
        %v1924 = vunpack.c.h.b16 %v620
        %v1925 = vunpack.c.l.b16 %v621
        %v1926 = vunpack.c.h.b16 %v621
        %v1927 = vunpack.c.l.b16 %v622
        %v1928 = vunpack.c.h.b16 %v622
        %v1929 = vunpack.c.l.b16 %v623
        %v1930 = vunpack.c.h.b16 %v623
        %v1931 = vunpack.c.l.b16 %v624
        %v1932 = vunpack.c.h.b16 %v624
        %v1933 = vunpack.c.l.b16 %v625
        %v1934 = vunpack.c.h.b16 %v625
        %v1935 = vunpack.c.l.b16 %v626
        %v1936 = vunpack.c.h.b16 %v626
        %v1937 = vunpack.c.l.b16 %v627
        %v1938 = vunpack.c.h.b16 %v627
        %v1939 = vunpack.c.l.b16 %v628
        %v1940 = vunpack.c.h.b16 %v628
        %v1941 = vunpack.c.l.b16 %v629
        %v1942 = vunpack.c.h.b16 %v629
        %v1943 = vunpack.c.l.b16 %v630
        %v1944 = vunpack.c.h.b16 %v630
        %v1945 = vunpack.c.l.b16 %v631
        %v1946 = vunpack.c.h.b16 %v631
        %v1947 = vunpack.c.l.b16 %v632
        %v1948 = vunpack.c.h.b16 %v632
        %v1949 = vunpack.c.l.b16 %v633
        %v1950 = vunpack.c.h.b16 %v633
        %v1951 = vunpack.c.l.b16 %v634
        %v1952 = vunpack.c.h.b16 %v634
        %v1953 = vunpack.c.l.b16 %v635
        %v1954 = vunpack.c.h.b16 %v635
        %v1955 = vunpack.c.l.b16 %v636
        %v1956 = vunpack.c.h.b16 %v636
        %v1957 = vunpack.c.l.b16 %v637
        %v1958 = vunpack.c.h.b16 %v637
        %v1959 = vunpack.c.l.b16 %v638
        %v1960 = vunpack.c.h.b16 %v638
        %v1961 = vunpack.c.l.b16 %v639
        %v1962 = vunpack.c.h.b16 %v639
        %v1963 = vunpack.c.l.b16 %v640
        %v1964 = vunpack.c.h.b16 %v640
        %v1965 = vunpack.c.l.b16 %v641
        %v1966 = vunpack.c.h.b16 %v641
        %v1967 = vunpack.c.l.b16 %v642
        %v1968 = vunpack.c.h.b16 %v642
        %v1969 = vunpack.c.l.b16 %v643
        %v1970 = vunpack.c.h.b16 %v643
        %v1971 = vunpack.c.l.b16 %v644
        %v1972 = vunpack.c.h.b16 %v644
        %v1973 = vunpack.c.l.b16 %v645
        %v1974 = vunpack.c.h.b16 %v645
        %v1975 = vunpack.c.l.b16 %v646
        %v1976 = vunpack.c.h.b16 %v646
        %v1977 = vunpack.c.l.b16 %v647
        %v1978 = vunpack.c.h.b16 %v647
        %v1979 = vunpack.c.l.b16 %v648
        %v1980 = vunpack.c.h.b16 %v648
        %v1981 = vunpack.c.l.b16 %v649
        %v1982 = vunpack.c.h.b16 %v649
        %v1983 = vunpack.c.l.b16 %v650
        %v1984 = vunpack.c.h.b16 %v650
        %v1985 = vunpack.c.l.b16 %v651
        %v1986 = vunpack.c.h.b16 %v651
        %v1987 = vunpack.c.l.b16 %v652
        %v1988 = vunpack.c.h.b16 %v652
        %v1989 = vunpack.c.l.b16 %v653
        %v1990 = vunpack.c.h.b16 %v653
        %v1991 = vunpack.c.l.b16 %v654
        %v1992 = vunpack.c.h.b16 %v654
        %v1993 = vunpack.c.l.b16 %v655
        %v1994 = vunpack.c.h.b16 %v655
        %v1995 = vunpack.c.l.b16 %v656
        %v1996 = vunpack.c.h.b16 %v656
        %v1997 = vunpack.c.l.b16 %v657
        %v1998 = vunpack.c.h.b16 %v657
        %v1999 = vunpack.c.l.b16 %v658
        %v2000 = vunpack.c.h.b16 %v658
        %v2001 = vunpack.c.l.b16 %v659
        %v2002 = vunpack.c.h.b16 %v659
        %v2003 = vunpack.c.l.b16 %v660
        %v2004 = vunpack.c.h.b16 %v660
        %v2005 = vunpack.c.l.b16 %v661
        %v2006 = vunpack.c.h.b16 %v661
        %v2007 = vunpack.c.l.b16 %v662
        %v2008 = vunpack.c.h.b16 %v662
        %v2009 = vunpack.c.l.b16 %v663
        %v2010 = vunpack.c.h.b16 %v663
        %v2011 = vunpack.c.l.b16 %v664
        %v2012 = vunpack.c.h.b16 %v664
        %v2013 = vunpack.c.l.b16 %v665
        %v2014 = vunpack.c.h.b16 %v665
        %v2015 = vunpack.c.l.b16 %v666
        %v2016 = vunpack.c.h.b16 %v666
        %v2017 = vunpack.c.l.b16 %v667
        %v2018 = vunpack.c.h.b16 %v667
        %v2019 = vunpack.c.l.b16 %v668
        %v2020 = vunpack.c.h.b16 %v668
        %v2021 = vunpack.c.l.b16 %v669
        %v2022 = vunpack.c.h.b16 %v669
        %v2023 = vunpack.c.l.b16 %v670
        %v2024 = vunpack.c.h.b16 %v670
        %v2025 = vunpack.c.l.b16 %v671
        %v2026 = vunpack.c.h.b16 %v671
        %v2027 = vunpack.c.l.b16 %v672
        %v2028 = vunpack.c.h.b16 %v672
        %v2029 = vunpack.c.l.b16 %v673
        %v2030 = vunpack.c.h.b16 %v673
        %v2031 = vunpack.c.l.b16 %v674
        %v2032 = vunpack.c.h.b16 %v674
        %v2033 = vunpack.c.l.b16 %v675
        %v2034 = vunpack.c.h.b16 %v675
        %v2035 = vunpack.c.l.b16 %v676
        %v2036 = vunpack.c.h.b16 %v676
        %v2037 = vunpack.c.l.b16 %v677
        %v2038 = vunpack.c.h.b16 %v677
        %v2039 = vunpack.c.l.b16 %v678
        %v2040 = vunpack.c.h.b16 %v678
        %v2041 = vunpack.c.l.b16 %v679
        %v2042 = vunpack.c.h.b16 %v679
        %v2043 = vunpack.c.l.b16 %v680
        %v2044 = vunpack.c.h.b16 %v680
        %v2045 = vunpack.c.l.b16 %v681
        %v2046 = vunpack.c.h.b16 %v681
        %v2047 = vunpack.c.l.b16 %v682
        %v2048 = vunpack.c.h.b16 %v682
        %v2049 = vunpack.c.l.b16 %v683
        %v2050 = vunpack.c.h.b16 %v683
        %v2051 = vunpack.c.l.b16 %v684
        %v2052 = vunpack.c.h.b16 %v684
        %v2053 = vunpack.c.l.b16 %v685
        %v2054 = vunpack.c.h.b16 %v685
        %v2055 = vunpack.c.l.b16 %v686
        %v2056 = vunpack.c.h.b16 %v686
        %v2057 = vunpack.c.l.b16 %v687
        %v2058 = vunpack.c.h.b16 %v687
        %v2059 = vunpack.c.l.b16 %v688
        %v2060 = vunpack.c.h.b16 %v688
        %v2061 = vunpack.c.l.b16 %v689
        %v2062 = vunpack.c.h.b16 %v689
        %v2063 = vunpack.c.l.b16 %v690
        %v2064 = vunpack.c.h.b16 %v690
        %v2065 = vunpack.c.l.b16 %v691
        %v2066 = vunpack.c.h.b16 %v691
        %v2067 = vunpack.c.l.b16 %v692
        %v2068 = vunpack.c.h.b16 %v692
        %v2069 = vunpack.c.l.b16 %v693
        %v2070 = vunpack.c.h.b16 %v693
        %v2071 = vunpack.c.l.b16 %v694
        %v2072 = vunpack.c.h.b16 %v694
        %v2073 = vunpack.c.l.b16 %v695
        %v2074 = vunpack.c.h.b16 %v695
        %v2075 = vunpack.c.l.b16 %v696
        %v2076 = vunpack.c.h.b16 %v696
        %v2077 = vunpack.c.l.b16 %v697
        %v2078 = vunpack.c.h.b16 %v697
        %v2079 = vunpack.c.l.b16 %v698
        %v2080 = vunpack.c.h.b16 %v698
        %v2081 = vunpack.c.l.b16 %v699
        %v2082 = vunpack.c.h.b16 %v699
        %v2083 = vunpack.c.l.b16 %v700
        %v2084 = vunpack.c.h.b16 %v700
        %v2085 = vunpack.c.l.b16 %v701
        %v2086 = vunpack.c.h.b16 %v701
        %v2087 = vunpack.c.l.b16 %v702
        %v2088 = vunpack.c.h.b16 %v702
        %v2089 = vunpack.c.l.b16 %v703
        %v2090 = vunpack.c.h.b16 %v703
        %v2091 = vunpack.c.l.b16 %v704
        %v2092 = vunpack.c.h.b16 %v704
        %v2093 = vunpack.c.l.b16 %v705
        %v2094 = vunpack.c.h.b16 %v705
        %v2095 = vunpack.c.l.b16 %v706
        %v2096 = vunpack.c.h.b16 %v706
        %v2097 = vunpack.c.l.b16 %v707
        %v2098 = vunpack.c.h.b16 %v707
        %v2099 = vunpack.c.l.b16 %v708
        %v2100 = vunpack.c.h.b16 %v708
        %v2101 = vunpack.c.l.b16 %v709
        %v2102 = vunpack.c.h.b16 %v709
        %v2103 = vunpack.c.l.b16 %v710
        %v2104 = vunpack.c.h.b16 %v710
        %v2105 = vunpack.c.l.b16 %v711
        %v2106 = vunpack.c.h.b16 %v711
        %v2107 = vunpack.c.l.b16 %v712
        %v2108 = vunpack.c.h.b16 %v712
        %v2109 = vunpack.c.l.b16 %v713
        %v2110 = vunpack.c.h.b16 %v713
        %v2111 = vunpack.c.l.b16 %v714
        %v2112 = vunpack.c.h.b16 %v714
        %v2113 = vunpack.c.l.b16 %v715
        %v2114 = vunpack.c.h.b16 %v715
        %v2115 = vunpack.c.l.b16 %v716
        %v2116 = vunpack.c.h.b16 %v716
        %v2117 = vunpack.c.l.b16 %v717
        %v2118 = vunpack.c.h.b16 %v717
        %v2119 = vunpack.c.l.b16 %v718
        %v2120 = vunpack.c.h.b16 %v718
        %v2121 = vunpack.c.l.b16 %v719
        %v2122 = vunpack.c.h.b16 %v719
        %v2123 = vunpack.c.l.b16 %v720
        %v2124 = vunpack.c.h.b16 %v720
        %v2125 = vunpack.c.l.b16 %v721
        %v2126 = vunpack.c.h.b16 %v721
        %v2127 = vunpack.c.l.b16 %v722
        %v2128 = vunpack.c.h.b16 %v722
        %v2129 = vunpack.c.l.b16 %v723
        %v2130 = vunpack.c.h.b16 %v723
        %v2131 = vunpack.c.l.b16 %v724
        %v2132 = vunpack.c.h.b16 %v724
        %v2133 = vunpack.c.l.b16 %v725
        %v2134 = vunpack.c.h.b16 %v725
        %v2135 = vunpack.c.l.b16 %v726
        %v2136 = vunpack.c.h.b16 %v726
        %v2137 = vunpack.c.l.b16 %v727
        %v2138 = vunpack.c.h.b16 %v727
        %v2139 = vunpack.c.l.b16 %v728
        %v2140 = vunpack.c.h.b16 %v728
        %v2141 = vunpack.c.l.b16 %v729
        %v2142 = vunpack.c.h.b16 %v729
        %v2143 = vunpack.c.l.b16 %v730
        %v2144 = vunpack.c.h.b16 %v730
        %v2145 = vunpack.c.l.b16 %v731
        %v2146 = vunpack.c.h.b16 %v731
        %v2147 = vunpack.c.l.b16 %v732
        %v2148 = vunpack.c.h.b16 %v732
        %v2149 = vunpack.c.l.b16 %v733
        %v2150 = vunpack.c.h.b16 %v733
        %v2151 = vunpack.c.l.b16 %v734
        %v2152 = vunpack.c.h.b16 %v734
        %v2153 = vunpack.c.l.b16 %v735
        %v2154 = vunpack.c.h.b16 %v735
        %v2155 = vunpack.c.l.b16 %v736
        %v2156 = vunpack.c.h.b16 %v736
        %v2157 = vunpack.c.l.b16 %v737
        %v2158 = vunpack.c.h.b16 %v737
        %v2159 = vunpack.c.l.b16 %v738
        %v2160 = vunpack.c.h.b16 %v738
        %v2161 = vunpack.c.l.b16 %v739
        %v2162 = vunpack.c.h.b16 %v739
        %v2163 = vunpack.c.l.b16 %v740
        %v2164 = vunpack.c.h.b16 %v740
        %v2165 = vunpack.c.l.b16 %v741
        %v2166 = vunpack.c.h.b16 %v741
        %v2167 = vunpack.c.l.b16 %v742
        %v2168 = vunpack.c.h.b16 %v742
        %v2169 = vunpack.c.l.b16 %v743
        %v2170 = vunpack.c.h.b16 %v743
        %v2171 = vunpack.c.l.b16 %v744
        %v2172 = vunpack.c.h.b16 %v744
        %v2173 = vunpack.c.l.b16 %v745
        %v2174 = vunpack.c.h.b16 %v745
        %v2175 = vunpack.c.l.b16 %v746
        %v2176 = vunpack.c.h.b16 %v746
        %v2177 = vpack.c.b16 %v1669, %v1665
        %v2178 = vpack.c.b16 %v1670, %v1666
        %v2179 = vpack.c.b16 %v1671, %v1667
        %v2180 = vpack.c.b16 %v1672, %v1668
        %v2181 = vpack.c.b16 %v1677, %v1673
        %v2182 = vpack.c.b16 %v1678, %v1674
        %v2183 = vpack.c.b16 %v1679, %v1675
        %v2184 = vpack.c.b16 %v1680, %v1676
        %v2185 = vpack.c.b16 %v1685, %v1681
        %v2186 = vpack.c.b16 %v1686, %v1682
        %v2187 = vpack.c.b16 %v1687, %v1683
        %v2188 = vpack.c.b16 %v1688, %v1684
        %v2189 = vpack.c.b16 %v1693, %v1689
        %v2190 = vpack.c.b16 %v1694, %v1690
        %v2191 = vpack.c.b16 %v1695, %v1691
        %v2192 = vpack.c.b16 %v1696, %v1692
        %v2193 = vpack.c.b16 %v1701, %v1697
        %v2194 = vpack.c.b16 %v1702, %v1698
        %v2195 = vpack.c.b16 %v1703, %v1699
        %v2196 = vpack.c.b16 %v1704, %v1700
        %v2197 = vpack.c.b16 %v1709, %v1705
        %v2198 = vpack.c.b16 %v1710, %v1706
        %v2199 = vpack.c.b16 %v1711, %v1707
        %v2200 = vpack.c.b16 %v1712, %v1708
        %v2201 = vpack.c.b16 %v1717, %v1713
        %v2202 = vpack.c.b16 %v1718, %v1714
        %v2203 = vpack.c.b16 %v1719, %v1715
        %v2204 = vpack.c.b16 %v1720, %v1716
        %v2205 = vpack.c.b16 %v1725, %v1721
        %v2206 = vpack.c.b16 %v1726, %v1722
        %v2207 = vpack.c.b16 %v1727, %v1723
        %v2208 = vpack.c.b16 %v1728, %v1724
        %v2209 = vpack.c.b16 %v1733, %v1729
        %v2210 = vpack.c.b16 %v1734, %v1730
        %v2211 = vpack.c.b16 %v1735, %v1731
        %v2212 = vpack.c.b16 %v1736, %v1732
        %v2213 = vpack.c.b16 %v1741, %v1737
        %v2214 = vpack.c.b16 %v1742, %v1738
        %v2215 = vpack.c.b16 %v1743, %v1739
        %v2216 = vpack.c.b16 %v1744, %v1740
        %v2217 = vpack.c.b16 %v1749, %v1745
        %v2218 = vpack.c.b16 %v1750, %v1746
        %v2219 = vpack.c.b16 %v1751, %v1747
        %v2220 = vpack.c.b16 %v1752, %v1748
        %v2221 = vpack.c.b16 %v1757, %v1753
        %v2222 = vpack.c.b16 %v1758, %v1754
        %v2223 = vpack.c.b16 %v1759, %v1755
        %v2224 = vpack.c.b16 %v1760, %v1756
        %v2225 = vpack.c.b16 %v1765, %v1761
        %v2226 = vpack.c.b16 %v1766, %v1762
        %v2227 = vpack.c.b16 %v1767, %v1763
        %v2228 = vpack.c.b16 %v1768, %v1764
        %v2229 = vpack.c.b16 %v1773, %v1769
        %v2230 = vpack.c.b16 %v1774, %v1770
        %v2231 = vpack.c.b16 %v1775, %v1771
        %v2232 = vpack.c.b16 %v1776, %v1772
        %v2233 = vpack.c.b16 %v1781, %v1777
        %v2234 = vpack.c.b16 %v1782, %v1778
        %v2235 = vpack.c.b16 %v1783, %v1779
        %v2236 = vpack.c.b16 %v1784, %v1780
        %v2237 = vpack.c.b16 %v1789, %v1785
        %v2238 = vpack.c.b16 %v1790, %v1786
        %v2239 = vpack.c.b16 %v1791, %v1787
        %v2240 = vpack.c.b16 %v1792, %v1788
        %v2241 = vpack.c.b16 %v1797, %v1793
        %v2242 = vpack.c.b16 %v1798, %v1794
        %v2243 = vpack.c.b16 %v1799, %v1795
        %v2244 = vpack.c.b16 %v1800, %v1796
        %v2245 = vpack.c.b16 %v1805, %v1801
        %v2246 = vpack.c.b16 %v1806, %v1802
        %v2247 = vpack.c.b16 %v1807, %v1803
        %v2248 = vpack.c.b16 %v1808, %v1804
        %v2249 = vpack.c.b16 %v1813, %v1809
        %v2250 = vpack.c.b16 %v1814, %v1810
        %v2251 = vpack.c.b16 %v1815, %v1811
        %v2252 = vpack.c.b16 %v1816, %v1812
        %v2253 = vpack.c.b16 %v1821, %v1817
        %v2254 = vpack.c.b16 %v1822, %v1818
        %v2255 = vpack.c.b16 %v1823, %v1819
        %v2256 = vpack.c.b16 %v1824, %v1820
        %v2257 = vpack.c.b16 %v1829, %v1825
        %v2258 = vpack.c.b16 %v1830, %v1826
        %v2259 = vpack.c.b16 %v1831, %v1827
        %v2260 = vpack.c.b16 %v1832, %v1828
        %v2261 = vpack.c.b16 %v1837, %v1833
        %v2262 = vpack.c.b16 %v1838, %v1834
        %v2263 = vpack.c.b16 %v1839, %v1835
        %v2264 = vpack.c.b16 %v1840, %v1836
        %v2265 = vpack.c.b16 %v1845, %v1841
        %v2266 = vpack.c.b16 %v1846, %v1842
        %v2267 = vpack.c.b16 %v1847, %v1843
        %v2268 = vpack.c.b16 %v1848, %v1844
        %v2269 = vpack.c.b16 %v1853, %v1849
        %v2270 = vpack.c.b16 %v1854, %v1850
        %v2271 = vpack.c.b16 %v1855, %v1851
        %v2272 = vpack.c.b16 %v1856, %v1852
        %v2273 = vpack.c.b16 %v1861, %v1857
        %v2274 = vpack.c.b16 %v1862, %v1858
        %v2275 = vpack.c.b16 %v1863, %v1859
        %v2276 = vpack.c.b16 %v1864, %v1860
        %v2277 = vpack.c.b16 %v1869, %v1865
        %v2278 = vpack.c.b16 %v1870, %v1866
        %v2279 = vpack.c.b16 %v1871, %v1867
        %v2280 = vpack.c.b16 %v1872, %v1868
        %v2281 = vpack.c.b16 %v1877, %v1873
        %v2282 = vpack.c.b16 %v1878, %v1874
        %v2283 = vpack.c.b16 %v1879, %v1875
        %v2284 = vpack.c.b16 %v1880, %v1876
        %v2285 = vpack.c.b16 %v1885, %v1881
        %v2286 = vpack.c.b16 %v1886, %v1882
        %v2287 = vpack.c.b16 %v1887, %v1883
        %v2288 = vpack.c.b16 %v1888, %v1884
        %v2289 = vpack.c.b16 %v1893, %v1889
        %v2290 = vpack.c.b16 %v1894, %v1890
        %v2291 = vpack.c.b16 %v1895, %v1891
        %v2292 = vpack.c.b16 %v1896, %v1892
        %v2293 = vpack.c.b16 %v1901, %v1897
        %v2294 = vpack.c.b16 %v1902, %v1898
        %v2295 = vpack.c.b16 %v1903, %v1899
        %v2296 = vpack.c.b16 %v1904, %v1900
        %v2297 = vpack.c.b16 %v1909, %v1905
        %v2298 = vpack.c.b16 %v1910, %v1906
        %v2299 = vpack.c.b16 %v1911, %v1907
        %v2300 = vpack.c.b16 %v1912, %v1908
        %v2301 = vpack.c.b16 %v1917, %v1913
        %v2302 = vpack.c.b16 %v1918, %v1914
        %v2303 = vpack.c.b16 %v1919, %v1915
        %v2304 = vpack.c.b16 %v1920, %v1916
        %v2305 = vpack.c.b16 %v1925, %v1921
        %v2306 = vpack.c.b16 %v1926, %v1922
        %v2307 = vpack.c.b16 %v1927, %v1923
        %v2308 = vpack.c.b16 %v1928, %v1924
        %v2309 = vpack.c.b16 %v1933, %v1929
        %v2310 = vpack.c.b16 %v1934, %v1930
        %v2311 = vpack.c.b16 %v1935, %v1931
        %v2312 = vpack.c.b16 %v1936, %v1932
        %v2313 = vpack.c.b16 %v1941, %v1937
        %v2314 = vpack.c.b16 %v1942, %v1938
        %v2315 = vpack.c.b16 %v1943, %v1939
        %v2316 = vpack.c.b16 %v1944, %v1940
        %v2317 = vpack.c.b16 %v1949, %v1945
        %v2318 = vpack.c.b16 %v1950, %v1946
        %v2319 = vpack.c.b16 %v1951, %v1947
        %v2320 = vpack.c.b16 %v1952, %v1948
        %v2321 = vpack.c.b16 %v1957, %v1953
        %v2322 = vpack.c.b16 %v1958, %v1954
        %v2323 = vpack.c.b16 %v1959, %v1955
        %v2324 = vpack.c.b16 %v1960, %v1956
        %v2325 = vpack.c.b16 %v1965, %v1961
        %v2326 = vpack.c.b16 %v1966, %v1962
        %v2327 = vpack.c.b16 %v1967, %v1963
        %v2328 = vpack.c.b16 %v1968, %v1964
        %v2329 = vpack.c.b16 %v1973, %v1969
        %v2330 = vpack.c.b16 %v1974, %v1970
        %v2331 = vpack.c.b16 %v1975, %v1971
        %v2332 = vpack.c.b16 %v1976, %v1972
        %v2333 = vpack.c.b16 %v1981, %v1977
        %v2334 = vpack.c.b16 %v1982, %v1978
        %v2335 = vpack.c.b16 %v1983, %v1979
        %v2336 = vpack.c.b16 %v1984, %v1980
        %v2337 = vpack.c.b16 %v1989, %v1985
        %v2338 = vpack.c.b16 %v1990, %v1986
        %v2339 = vpack.c.b16 %v1991, %v1987
        %v2340 = vpack.c.b16 %v1992, %v1988
        %v2341 = vpack.c.b16 %v1997, %v1993
        %v2342 = vpack.c.b16 %v1998, %v1994
        %v2343 = vpack.c.b16 %v1999, %v1995
        %v2344 = vpack.c.b16 %v2000, %v1996
        %v2345 = vpack.c.b16 %v2005, %v2001
        %v2346 = vpack.c.b16 %v2006, %v2002
        %v2347 = vpack.c.b16 %v2007, %v2003
        %v2348 = vpack.c.b16 %v2008, %v2004
        %v2349 = vpack.c.b16 %v2013, %v2009
        %v2350 = vpack.c.b16 %v2014, %v2010
        %v2351 = vpack.c.b16 %v2015, %v2011
        %v2352 = vpack.c.b16 %v2016, %v2012
        %v2353 = vpack.c.b16 %v2021, %v2017
        %v2354 = vpack.c.b16 %v2022, %v2018
        %v2355 = vpack.c.b16 %v2023, %v2019
        %v2356 = vpack.c.b16 %v2024, %v2020
        %v2357 = vpack.c.b16 %v2029, %v2025
        %v2358 = vpack.c.b16 %v2030, %v2026
        %v2359 = vpack.c.b16 %v2031, %v2027
        %v2360 = vpack.c.b16 %v2032, %v2028
        %v2361 = vpack.c.b16 %v2037, %v2033
        %v2362 = vpack.c.b16 %v2038, %v2034
        %v2363 = vpack.c.b16 %v2039, %v2035
        %v2364 = vpack.c.b16 %v2040, %v2036
        %v2365 = vpack.c.b16 %v2045, %v2041
        %v2366 = vpack.c.b16 %v2046, %v2042
        %v2367 = vpack.c.b16 %v2047, %v2043
        %v2368 = vpack.c.b16 %v2048, %v2044
        %v2369 = vpack.c.b16 %v2053, %v2049
        %v2370 = vpack.c.b16 %v2054, %v2050
        %v2371 = vpack.c.b16 %v2055, %v2051
        %v2372 = vpack.c.b16 %v2056, %v2052
        %v2373 = vpack.c.b16 %v2061, %v2057
        %v2374 = vpack.c.b16 %v2062, %v2058
        %v2375 = vpack.c.b16 %v2063, %v2059
        %v2376 = vpack.c.b16 %v2064, %v2060
        %v2377 = vpack.c.b16 %v2069, %v2065
        %v2378 = vpack.c.b16 %v2070, %v2066
        %v2379 = vpack.c.b16 %v2071, %v2067
        %v2380 = vpack.c.b16 %v2072, %v2068
        %v2381 = vpack.c.b16 %v2077, %v2073
        %v2382 = vpack.c.b16 %v2078, %v2074
        %v2383 = vpack.c.b16 %v2079, %v2075
        %v2384 = vpack.c.b16 %v2080, %v2076
        %v2385 = vpack.c.b16 %v2085, %v2081
        %v2386 = vpack.c.b16 %v2086, %v2082
        %v2387 = vpack.c.b16 %v2087, %v2083
        %v2388 = vpack.c.b16 %v2088, %v2084
        %v2389 = vpack.c.b16 %v2093, %v2089
        %v2390 = vpack.c.b16 %v2094, %v2090
        %v2391 = vpack.c.b16 %v2095, %v2091
        %v2392 = vpack.c.b16 %v2096, %v2092
        %v2393 = vpack.c.b16 %v2101, %v2097
        %v2394 = vpack.c.b16 %v2102, %v2098
        %v2395 = vpack.c.b16 %v2103, %v2099
        %v2396 = vpack.c.b16 %v2104, %v2100
        %v2397 = vpack.c.b16 %v2109, %v2105
        %v2398 = vpack.c.b16 %v2110, %v2106
        %v2399 = vpack.c.b16 %v2111, %v2107
        %v2400 = vpack.c.b16 %v2112, %v2108
        %v2401 = vpack.c.b16 %v2117, %v2113
        %v2402 = vpack.c.b16 %v2118, %v2114
        %v2403 = vpack.c.b16 %v2119, %v2115
        %v2404 = vpack.c.b16 %v2120, %v2116
        %v2405 = vpack.c.b16 %v2125, %v2121
        %v2406 = vpack.c.b16 %v2126, %v2122
        %v2407 = vpack.c.b16 %v2127, %v2123
        %v2408 = vpack.c.b16 %v2128, %v2124
        %v2409 = vpack.c.b16 %v2133, %v2129
        %v2410 = vpack.c.b16 %v2134, %v2130
        %v2411 = vpack.c.b16 %v2135, %v2131
        %v2412 = vpack.c.b16 %v2136, %v2132
        %v2413 = vpack.c.b16 %v2141, %v2137
        %v2414 = vpack.c.b16 %v2142, %v2138
        %v2415 = vpack.c.b16 %v2143, %v2139
        %v2416 = vpack.c.b16 %v2144, %v2140
        %v2417 = vpack.c.b16 %v2149, %v2145
        %v2418 = vpack.c.b16 %v2150, %v2146
        %v2419 = vpack.c.b16 %v2151, %v2147
        %v2420 = vpack.c.b16 %v2152, %v2148
        %v2421 = vpack.c.b16 %v2157, %v2153
        %v2422 = vpack.c.b16 %v2158, %v2154
        %v2423 = vpack.c.b16 %v2159, %v2155
        %v2424 = vpack.c.b16 %v2160, %v2156
        %v2425 = vpack.c.b16 %v2165, %v2161
        %v2426 = vpack.c.b16 %v2166, %v2162
        %v2427 = vpack.c.b16 %v2167, %v2163
        %v2428 = vpack.c.b16 %v2168, %v2164
        %v2429 = vpack.c.b16 %v2173, %v2169
        %v2430 = vpack.c.b16 %v2174, %v2170
        %v2431 = vpack.c.b16 %v2175, %v2171
        %v2432 = vpack.c.b16 %v2176, %v2172
        %2689 = vmatprep.subr.bf16.mxu0 %v2178
        %2690 = vmatpush1.bf16.msra.mxu0 %v2177
        %2691 = vmatprep.subr.bf16.mxu0 %v2182
        %2692 = vmatpush1.bf16.msra.mxu0 %v2181
        %2693 = vmatprep.subr.bf16.mxu0 %v2186
        %2694 = vmatpush1.bf16.msra.mxu0 %v2185
        %2695 = vmatprep.subr.bf16.mxu0 %v2190
        %2696 = vmatpush1.bf16.msra.mxu0 %v2189
        %2697 = vmatprep.subr.bf16.mxu0 %v2194
        %2698 = vmatpush1.bf16.msra.mxu0 %v2193
        %2699 = vmatprep.subr.bf16.mxu0 %v2198
        %2700 = vmatpush1.bf16.msra.mxu0 %v2197
        %2701 = vmatprep.subr.bf16.mxu0 %v2202
        %2702 = vmatpush1.bf16.msra.mxu0 %v2201
        %2703 = vmatprep.subr.bf16.mxu0 %v2206
        %2704 = vmatpush1.bf16.msra.mxu0 %v2205
        %2705 = vmatprep.subr.bf16.mxu0 %v2210
        %2706 = vmatpush1.bf16.msra.mxu0 %v2209
        %2707 = vmatprep.subr.bf16.mxu0 %v2214
        %2708 = vmatpush1.bf16.msra.mxu0 %v2213
        %2709 = vmatprep.subr.bf16.mxu0 %v2218
        %2710 = vmatpush1.bf16.msra.mxu0 %v2217
        %2711 = vmatprep.subr.bf16.mxu0 %v2222
        %2712 = vmatpush1.bf16.msra.mxu0 %v2221
        %2713 = vmatprep.subr.bf16.mxu0 %v2226
        %2714 = vmatpush1.bf16.msra.mxu0 %v2225
        %2715 = vmatprep.subr.bf16.mxu0 %v2230
        %2716 = vmatpush1.bf16.msra.mxu0 %v2229
        %2717 = vmatprep.subr.bf16.mxu0 %v2234
        %2718 = vmatpush1.bf16.msra.mxu0 %v2233
        %2719 = vmatprep.subr.bf16.mxu0 %v2238
        %2720 = vmatpush1.bf16.msra.mxu0 %v2237
        %2721 = vmatprep.mubr.bf16.mxu0 %v1154
        %2722 = vmatmul.mubr.bf16.gmra.mrb[0].mxu0 %v1153
        %v2723 = vpop.f32.mrb[0].mxu0
        %v2724 = vadd.f32 %v752, %v2723
        %v2725 = vpop.f32.mrb[0].mxu0
        %v2726 = vadd.f32 %v756, %v2725
        %v2727 = vpop.f32.mrb[0].mxu0
        %v2728 = vadd.f32 %v752, %v2727
        %v2729 = vpop.f32.mrb[0].mxu0
        %v2730 = vadd.f32 %v756, %v2729
        %2731 = vmatprep.mubr.bf16.mxu0 %v1162
        %2732 = vmatmul.mubr.bf16.gmra.mrb[0].mxu0 %v1161
        %v2733 = vpop.f32.mrb[0].mxu0
        %v2734 = vadd.f32 %v752, %v2733
        %v2735 = vpop.f32.mrb[0].mxu0
        %v2736 = vadd.f32 %v756, %v2735
        %v2737 = vpop.f32.mrb[0].mxu0
        %v2738 = vadd.f32 %v752, %v2737
        %v2739 = vpop.f32.mrb[0].mxu0
        %v2740 = vadd.f32 %v756, %v2739
        %2741 = vmatprep.mubr.bf16.mxu0 %v1170
        %2742 = vmatmul.mubr.bf16.gmra.mrb[0].mxu0 %v1169
        %v2743 = vpop.f32.mrb[0].mxu0
        %v2744 = vadd.f32 %v752, %v2743
        %v2745 = vpop.f32.mrb[0].mxu0
        %v2746 = vadd.f32 %v756, %v2745
        %v2747 = vpop.f32.mrb[0].mxu0
        %v2748 = vadd.f32 %v752, %v2747
        %v2749 = vpop.f32.mrb[0].mxu0
        %v2750 = vadd.f32 %v756, %v2749
        %2751 = vmatprep.mubr.bf16.mxu0 %v1178
        %2752 = vmatmul.mubr.bf16.gmra.mrb[0].mxu0 %v1177
        %v2753 = vpop.f32.mrb[0].mxu0
        %v2754 = vadd.f32 %v752, %v2753
        %v2755 = vpop.f32.mrb[0].mxu0
        %v2756 = vadd.f32 %v756, %v2755
        %v2757 = vpop.f32.mrb[0].mxu0
        %v2758 = vadd.f32 %v752, %v2757
        %v2759 = vpop.f32.mrb[0].mxu0
        %v2760 = vadd.f32 %v756, %v2759
        %2761 = vmatprep.mubr.bf16.mxu0 %v1186
        %2762 = vmatmul.mubr.bf16.gmra.mrb[0].mxu0 %v1185
        %v2763 = vpop.f32.mrb[0].mxu0
        %v2764 = vadd.f32 %v752, %v2763
        %v2765 = vpop.f32.mrb[0].mxu0
        %v2766 = vadd.f32 %v756, %v2765
        %v2767 = vpop.f32.mrb[0].mxu0
        %v2768 = vadd.f32 %v752, %v2767
        %v2769 = vpop.f32.mrb[0].mxu0
        %v2770 = vadd.f32 %v756, %v2769
        %2771 = vmatprep.mubr.bf16.mxu0 %v1194
        %2772 = vmatmul.mubr.bf16.gmra.mrb[0].mxu0 %v1193
        %v2773 = vpop.f32.mrb[0].mxu0
        %v2774 = vadd.f32 %v752, %v2773
        %v2775 = vpop.f32.mrb[0].mxu0
        %v2776 = vadd.f32 %v756, %v2775
        %v2777 = vpop.f32.mrb[0].mxu0
        %v2778 = vadd.f32 %v752, %v2777
        %v2779 = vpop.f32.mrb[0].mxu0
        %v2780 = vadd.f32 %v756, %v2779
        %2781 = vmatprep.mubr.bf16.mxu0 %v1202
        %2782 = vmatmul.mubr.bf16.gmra.mrb[0].mxu0 %v1201
        %v2783 = vpop.f32.mrb[0].mxu0
        %v2784 = vadd.f32 %v752, %v2783
        %v2785 = vpop.f32.mrb[0].mxu0
        %v2786 = vadd.f32 %v756, %v2785
        %v2787 = vpop.f32.mrb[0].mxu0
        %v2788 = vadd.f32 %v752, %v2787
        %v2789 = vpop.f32.mrb[0].mxu0
        %v2790 = vadd.f32 %v756, %v2789
        %2791 = vmatprep.mubr.bf16.mxu0 %v1210
        %2792 = vmatmul.mubr.bf16.gmra.mrb[0].mxu0 %v1209
        %v2793 = vpop.f32.mrb[0].mxu0
        %v2794 = vadd.f32 %v752, %v2793
        %v2795 = vpop.f32.mrb[0].mxu0
        %v2796 = vadd.f32 %v756, %v2795
        %v2797 = vpop.f32.mrb[0].mxu0
        %v2798 = vadd.f32 %v752, %v2797
        %v2799 = vpop.f32.mrb[0].mxu0
        %v2800 = vadd.f32 %v756, %v2799
        %2801 = vmatprep.mubr.bf16.mxu0 %v1218
        %2802 = vmatmul.mubr.bf16.gmra.mrb[0].mxu0 %v1217
        %v2803 = vpop.f32.mrb[0].mxu0
        %v2804 = vadd.f32 %v752, %v2803
        %v2805 = vpop.f32.mrb[0].mxu0
        %v2806 = vadd.f32 %v756, %v2805
        %v2807 = vpop.f32.mrb[0].mxu0
        %v2808 = vadd.f32 %v752, %v2807
        %v2809 = vpop.f32.mrb[0].mxu0
        %v2810 = vadd.f32 %v756, %v2809
        %2811 = vmatprep.mubr.bf16.mxu0 %v1226
        %2812 = vmatmul.mubr.bf16.gmra.mrb[0].mxu0 %v1225
        %v2813 = vpop.f32.mrb[0].mxu0
        %v2814 = vadd.f32 %v752, %v2813
        %v2815 = vpop.f32.mrb[0].mxu0
        %v2816 = vadd.f32 %v756, %v2815
        %v2817 = vpop.f32.mrb[0].mxu0
        %v2818 = vadd.f32 %v752, %v2817
        %v2819 = vpop.f32.mrb[0].mxu0
        %v2820 = vadd.f32 %v756, %v2819
        %2821 = vmatprep.mubr.bf16.mxu0 %v1234
        %2822 = vmatmul.mubr.bf16.gmra.mrb[0].mxu0 %v1233
        %v2823 = vpop.f32.mrb[0].mxu0
        %v2824 = vadd.f32 %v752, %v2823
        %v2825 = vpop.f32.mrb[0].mxu0
        %v2826 = vadd.f32 %v756, %v2825
        %v2827 = vpop.f32.mrb[0].mxu0
        %v2828 = vadd.f32 %v752, %v2827
        %v2829 = vpop.f32.mrb[0].mxu0
        %v2830 = vadd.f32 %v756, %v2829
        %2831 = vmatprep.mubr.bf16.mxu0 %v1242
        %2832 = vmatmul.mubr.bf16.gmra.mrb[0].mxu0 %v1241
        %v2833 = vpop.f32.mrb[0].mxu0
        %v2834 = vadd.f32 %v752, %v2833
        %v2835 = vpop.f32.mrb[0].mxu0
        %v2836 = vadd.f32 %v756, %v2835
        %v2837 = vpop.f32.mrb[0].mxu0
        %v2838 = vadd.f32 %v752, %v2837
        %v2839 = vpop.f32.mrb[0].mxu0
        %v2840 = vadd.f32 %v756, %v2839
        %2841 = vmatprep.mubr.bf16.mxu0 %v1250
        %2842 = vmatmul.mubr.bf16.gmra.mrb[0].mxu0 %v1249
        %v2843 = vpop.f32.mrb[0].mxu0
        %v2844 = vadd.f32 %v752, %v2843
        %v2845 = vpop.f32.mrb[0].mxu0
        %v2846 = vadd.f32 %v756, %v2845
        %v2847 = vpop.f32.mrb[0].mxu0
        %v2848 = vadd.f32 %v752, %v2847
        %v2849 = vpop.f32.mrb[0].mxu0
        %v2850 = vadd.f32 %v756, %v2849
        %2851 = vmatprep.mubr.bf16.mxu0 %v1258
        %2852 = vmatmul.mubr.bf16.gmra.mrb[0].mxu0 %v1257
        %v2853 = vpop.f32.mrb[0].mxu0
        %v2854 = vadd.f32 %v752, %v2853
        %v2855 = vpop.f32.mrb[0].mxu0
        %v2856 = vadd.f32 %v756, %v2855
        %v2857 = vpop.f32.mrb[0].mxu0
        %v2858 = vadd.f32 %v752, %v2857
        %v2859 = vpop.f32.mrb[0].mxu0
        %v2860 = vadd.f32 %v756, %v2859
        %2861 = vmatprep.mubr.bf16.mxu0 %v1266
        %2862 = vmatmul.mubr.bf16.gmra.mrb[0].mxu0 %v1265
        %v2863 = vpop.f32.mrb[0].mxu0
        %v2864 = vadd.f32 %v752, %v2863
        %v2865 = vpop.f32.mrb[0].mxu0
        %v2866 = vadd.f32 %v756, %v2865
        %v2867 = vpop.f32.mrb[0].mxu0
        %v2868 = vadd.f32 %v752, %v2867
        %v2869 = vpop.f32.mrb[0].mxu0
        %v2870 = vadd.f32 %v756, %v2869
        %2871 = vmatprep.mubr.bf16.mxu0 %v1274
        %2872 = vmatmul.mubr.bf16.gmra.mrb[0].mxu0 %v1273
        %v2873 = vpop.f32.mrb[0].mxu0
        %v2874 = vadd.f32 %v752, %v2873
        %v2875 = vpop.f32.mrb[0].mxu0
        %v2876 = vadd.f32 %v756, %v2875
        %v2877 = vpop.f32.mrb[0].mxu0
        %v2878 = vadd.f32 %v752, %v2877
        %v2879 = vpop.f32.mrb[0].mxu0
        %v2880 = vadd.f32 %v756, %v2879
        %2881 = vdwg.mxu0
        %2882 = vmatprep.subr.bf16.mxu0 %v2242
        %2883 = vmatpush1.bf16.msra.mxu0 %v2241
        %2884 = vmatprep.subr.bf16.mxu0 %v2246
        %2885 = vmatpush1.bf16.msra.mxu0 %v2245
        %2886 = vmatprep.subr.bf16.mxu0 %v2250
        %2887 = vmatpush1.bf16.msra.mxu0 %v2249
        %2888 = vmatprep.subr.bf16.mxu0 %v2254
        %2889 = vmatpush1.bf16.msra.mxu0 %v2253
        %2890 = vmatprep.subr.bf16.mxu0 %v2258
        %2891 = vmatpush1.bf16.msra.mxu0 %v2257
        %2892 = vmatprep.subr.bf16.mxu0 %v2262
        %2893 = vmatpush1.bf16.msra.mxu0 %v2261
        %2894 = vmatprep.subr.bf16.mxu0 %v2266
        %2895 = vmatpush1.bf16.msra.mxu0 %v2265
        %2896 = vmatprep.subr.bf16.mxu0 %v2270
        %2897 = vmatpush1.bf16.msra.mxu0 %v2269
        %2898 = vmatprep.subr.bf16.mxu0 %v2274
        %2899 = vmatpush1.bf16.msra.mxu0 %v2273
        %2900 = vmatprep.subr.bf16.mxu0 %v2278
        %2901 = vmatpush1.bf16.msra.mxu0 %v2277
        %2902 = vmatprep.subr.bf16.mxu0 %v2282
        %2903 = vmatpush1.bf16.msra.mxu0 %v2281
        %2904 = vmatprep.subr.bf16.mxu0 %v2286
        %2905 = vmatpush1.bf16.msra.mxu0 %v2285
        %2906 = vmatprep.subr.bf16.mxu0 %v2290
        %2907 = vmatpush1.bf16.msra.mxu0 %v2289
        %2908 = vmatprep.subr.bf16.mxu0 %v2294
        %2909 = vmatpush1.bf16.msra.mxu0 %v2293
        %2910 = vmatprep.subr.bf16.mxu0 %v2298
        %2911 = vmatpush1.bf16.msra.mxu0 %v2297
        %2912 = vmatprep.subr.bf16.mxu0 %v2302
        %2913 = vmatpush1.bf16.msra.mxu0 %v2301
        %2914 = vmatprep.mubr.bf16.mxu0 %v1156
        %2915 = vmatmul.mubr.bf16.gmra.mrb[0].mxu0 %v1155
        %v2916 = vpop.f32.mrb[0].mxu0
        %v2917 = vadd.f32 %v2724, %v2916
        %v2918 = vpop.f32.mrb[0].mxu0
        %v2919 = vadd.f32 %v2726, %v2918
        %v2920 = vpop.f32.mrb[0].mxu0
        %v2921 = vadd.f32 %v2728, %v2920
        %v2922 = vpop.f32.mrb[0].mxu0
        %v2923 = vadd.f32 %v2730, %v2922
        %2924 = vmatprep.mubr.bf16.mxu0 %v1164
        %2925 = vmatmul.mubr.bf16.gmra.mrb[0].mxu0 %v1163
        %v2926 = vpop.f32.mrb[0].mxu0
        %v2927 = vadd.f32 %v2734, %v2926
        %v2928 = vpop.f32.mrb[0].mxu0
        %v2929 = vadd.f32 %v2736, %v2928
        %v2930 = vpop.f32.mrb[0].mxu0
        %v2931 = vadd.f32 %v2738, %v2930
        %v2932 = vpop.f32.mrb[0].mxu0
        %v2933 = vadd.f32 %v2740, %v2932
        %2934 = vmatprep.mubr.bf16.mxu0 %v1172
        %2935 = vmatmul.mubr.bf16.gmra.mrb[0].mxu0 %v1171
        %v2936 = vpop.f32.mrb[0].mxu0
        %v2937 = vadd.f32 %v2744, %v2936
        %v2938 = vpop.f32.mrb[0].mxu0
        %v2939 = vadd.f32 %v2746, %v2938
        %v2940 = vpop.f32.mrb[0].mxu0
        %v2941 = vadd.f32 %v2748, %v2940
        %v2942 = vpop.f32.mrb[0].mxu0
        %v2943 = vadd.f32 %v2750, %v2942
        %2944 = vmatprep.mubr.bf16.mxu0 %v1180
        %2945 = vmatmul.mubr.bf16.gmra.mrb[0].mxu0 %v1179
        %v2946 = vpop.f32.mrb[0].mxu0
        %v2947 = vadd.f32 %v2754, %v2946
        %v2948 = vpop.f32.mrb[0].mxu0
        %v2949 = vadd.f32 %v2756, %v2948
        %v2950 = vpop.f32.mrb[0].mxu0
        %v2951 = vadd.f32 %v2758, %v2950
        %v2952 = vpop.f32.mrb[0].mxu0
        %v2953 = vadd.f32 %v2760, %v2952
        %2954 = vmatprep.mubr.bf16.mxu0 %v1188
        %2955 = vmatmul.mubr.bf16.gmra.mrb[0].mxu0 %v1187
        %v2956 = vpop.f32.mrb[0].mxu0
        %v2957 = vadd.f32 %v2764, %v2956
        %v2958 = vpop.f32.mrb[0].mxu0
        %v2959 = vadd.f32 %v2766, %v2958
        %v2960 = vpop.f32.mrb[0].mxu0
        %v2961 = vadd.f32 %v2768, %v2960
        %v2962 = vpop.f32.mrb[0].mxu0
        %v2963 = vadd.f32 %v2770, %v2962
        %2964 = vmatprep.mubr.bf16.mxu0 %v1196
        %2965 = vmatmul.mubr.bf16.gmra.mrb[0].mxu0 %v1195
        %v2966 = vpop.f32.mrb[0].mxu0
        %v2967 = vadd.f32 %v2774, %v2966
        %v2968 = vpop.f32.mrb[0].mxu0
        %v2969 = vadd.f32 %v2776, %v2968
        %v2970 = vpop.f32.mrb[0].mxu0
        %v2971 = vadd.f32 %v2778, %v2970
        %v2972 = vpop.f32.mrb[0].mxu0
        %v2973 = vadd.f32 %v2780, %v2972
        %2974 = vmatprep.mubr.bf16.mxu0 %v1204
        %2975 = vmatmul.mubr.bf16.gmra.mrb[0].mxu0 %v1203
        %v2976 = vpop.f32.mrb[0].mxu0
        %v2977 = vadd.f32 %v2784, %v2976
        %v2978 = vpop.f32.mrb[0].mxu0
        %v2979 = vadd.f32 %v2786, %v2978
        %v2980 = vpop.f32.mrb[0].mxu0
        %v2981 = vadd.f32 %v2788, %v2980
        %v2982 = vpop.f32.mrb[0].mxu0
        %v2983 = vadd.f32 %v2790, %v2982
        %2984 = vmatprep.mubr.bf16.mxu0 %v1212
        %2985 = vmatmul.mubr.bf16.gmra.mrb[0].mxu0 %v1211
        %v2986 = vpop.f32.mrb[0].mxu0
        %v2987 = vadd.f32 %v2794, %v2986
        %v2988 = vpop.f32.mrb[0].mxu0
        %v2989 = vadd.f32 %v2796, %v2988
        %v2990 = vpop.f32.mrb[0].mxu0
        %v2991 = vadd.f32 %v2798, %v2990
        %v2992 = vpop.f32.mrb[0].mxu0
        %v2993 = vadd.f32 %v2800, %v2992
        %2994 = vmatprep.mubr.bf16.mxu0 %v1220
        %2995 = vmatmul.mubr.bf16.gmra.mrb[0].mxu0 %v1219
        %v2996 = vpop.f32.mrb[0].mxu0
        %v2997 = vadd.f32 %v2804, %v2996
        %v2998 = vpop.f32.mrb[0].mxu0
        %v2999 = vadd.f32 %v2806, %v2998
        %v3000 = vpop.f32.mrb[0].mxu0
        %v3001 = vadd.f32 %v2808, %v3000
        %v3002 = vpop.f32.mrb[0].mxu0
        %v3003 = vadd.f32 %v2810, %v3002
        %3004 = vmatprep.mubr.bf16.mxu0 %v1228
        %3005 = vmatmul.mubr.bf16.gmra.mrb[0].mxu0 %v1227
        %v3006 = vpop.f32.mrb[0].mxu0
        %v3007 = vadd.f32 %v2814, %v3006
        %v3008 = vpop.f32.mrb[0].mxu0
        %v3009 = vadd.f32 %v2816, %v3008
        %v3010 = vpop.f32.mrb[0].mxu0
        %v3011 = vadd.f32 %v2818, %v3010
        %v3012 = vpop.f32.mrb[0].mxu0
        %v3013 = vadd.f32 %v2820, %v3012
        %3014 = vmatprep.mubr.bf16.mxu0 %v1236
        %3015 = vmatmul.mubr.bf16.gmra.mrb[0].mxu0 %v1235
        %v3016 = vpop.f32.mrb[0].mxu0
        %v3017 = vadd.f32 %v2824, %v3016
        %v3018 = vpop.f32.mrb[0].mxu0
        %v3019 = vadd.f32 %v2826, %v3018
        %v3020 = vpop.f32.mrb[0].mxu0
        %v3021 = vadd.f32 %v2828, %v3020
        %v3022 = vpop.f32.mrb[0].mxu0
        %v3023 = vadd.f32 %v2830, %v3022
        %3024 = vmatprep.mubr.bf16.mxu0 %v1244
        %3025 = vmatmul.mubr.bf16.gmra.mrb[0].mxu0 %v1243
        %v3026 = vpop.f32.mrb[0].mxu0
        %v3027 = vadd.f32 %v2834, %v3026
        %v3028 = vpop.f32.mrb[0].mxu0
        %v3029 = vadd.f32 %v2836, %v3028
        %v3030 = vpop.f32.mrb[0].mxu0
        %v3031 = vadd.f32 %v2838, %v3030
        %v3032 = vpop.f32.mrb[0].mxu0
        %v3033 = vadd.f32 %v2840, %v3032
        %3034 = vmatprep.mubr.bf16.mxu0 %v1252
        %3035 = vmatmul.mubr.bf16.gmra.mrb[0].mxu0 %v1251
        %v3036 = vpop.f32.mrb[0].mxu0
        %v3037 = vadd.f32 %v2844, %v3036
        %v3038 = vpop.f32.mrb[0].mxu0
        %v3039 = vadd.f32 %v2846, %v3038
        %v3040 = vpop.f32.mrb[0].mxu0
        %v3041 = vadd.f32 %v2848, %v3040
        %v3042 = vpop.f32.mrb[0].mxu0
        %v3043 = vadd.f32 %v2850, %v3042
        %3044 = vmatprep.mubr.bf16.mxu0 %v1260
        %3045 = vmatmul.mubr.bf16.gmra.mrb[0].mxu0 %v1259
        %v3046 = vpop.f32.mrb[0].mxu0
        %v3047 = vadd.f32 %v2854, %v3046
        %v3048 = vpop.f32.mrb[0].mxu0
        %v3049 = vadd.f32 %v2856, %v3048
        %v3050 = vpop.f32.mrb[0].mxu0
        %v3051 = vadd.f32 %v2858, %v3050
        %v3052 = vpop.f32.mrb[0].mxu0
        %v3053 = vadd.f32 %v2860, %v3052
        %3054 = vmatprep.mubr.bf16.mxu0 %v1268
        %3055 = vmatmul.mubr.bf16.gmra.mrb[0].mxu0 %v1267
        %v3056 = vpop.f32.mrb[0].mxu0
        %v3057 = vadd.f32 %v2864, %v3056
        %v3058 = vpop.f32.mrb[0].mxu0
        %v3059 = vadd.f32 %v2866, %v3058
        %v3060 = vpop.f32.mrb[0].mxu0
        %v3061 = vadd.f32 %v2868, %v3060
        %v3062 = vpop.f32.mrb[0].mxu0
        %v3063 = vadd.f32 %v2870, %v3062
        %3064 = vmatprep.mubr.bf16.mxu0 %v1276
        %3065 = vmatmul.mubr.bf16.gmra.mrb[0].mxu0 %v1275
        %v3066 = vpop.f32.mrb[0].mxu0
        %v3067 = vadd.f32 %v2874, %v3066
        %v3068 = vpop.f32.mrb[0].mxu0
        %v3069 = vadd.f32 %v2876, %v3068
        %v3070 = vpop.f32.mrb[0].mxu0
        %v3071 = vadd.f32 %v2878, %v3070
        %v3072 = vpop.f32.mrb[0].mxu0
        %v3073 = vadd.f32 %v2880, %v3072
        %3074 = vdwg.mxu0
        %3075 = vmatprep.subr.bf16.mxu0 %v2306
        %3076 = vmatpush1.bf16.msra.mxu0 %v2305
        %3077 = vmatprep.subr.bf16.mxu0 %v2310
        %3078 = vmatpush1.bf16.msra.mxu0 %v2309
        %3079 = vmatprep.subr.bf16.mxu0 %v2314
        %3080 = vmatpush1.bf16.msra.mxu0 %v2313
        %3081 = vmatprep.subr.bf16.mxu0 %v2318
        %3082 = vmatpush1.bf16.msra.mxu0 %v2317
        %3083 = vmatprep.subr.bf16.mxu0 %v2322
        %3084 = vmatpush1.bf16.msra.mxu0 %v2321
        %3085 = vmatprep.subr.bf16.mxu0 %v2326
        %3086 = vmatpush1.bf16.msra.mxu0 %v2325
        %3087 = vmatprep.subr.bf16.mxu0 %v2330
        %3088 = vmatpush1.bf16.msra.mxu0 %v2329
        %3089 = vmatprep.subr.bf16.mxu0 %v2334
        %3090 = vmatpush1.bf16.msra.mxu0 %v2333
        %3091 = vmatprep.subr.bf16.mxu0 %v2338
        %3092 = vmatpush1.bf16.msra.mxu0 %v2337
        %3093 = vmatprep.subr.bf16.mxu0 %v2342
        %3094 = vmatpush1.bf16.msra.mxu0 %v2341
        %3095 = vmatprep.subr.bf16.mxu0 %v2346
        %3096 = vmatpush1.bf16.msra.mxu0 %v2345
        %3097 = vmatprep.subr.bf16.mxu0 %v2350
        %3098 = vmatpush1.bf16.msra.mxu0 %v2349
        %3099 = vmatprep.subr.bf16.mxu0 %v2354
        %3100 = vmatpush1.bf16.msra.mxu0 %v2353
        %3101 = vmatprep.subr.bf16.mxu0 %v2358
        %3102 = vmatpush1.bf16.msra.mxu0 %v2357
        %3103 = vmatprep.subr.bf16.mxu0 %v2362
        %3104 = vmatpush1.bf16.msra.mxu0 %v2361
        %3105 = vmatprep.subr.bf16.mxu0 %v2366
        %3106 = vmatpush1.bf16.msra.mxu0 %v2365
        %3107 = vmatprep.mubr.bf16.mxu0 %v1158
        %3108 = vmatmul.mubr.bf16.gmra.mrb[0].mxu0 %v1157
        %v3109 = vpop.f32.mrb[0].mxu0
        %v3110 = vadd.f32 %v2917, %v3109
        %v3111 = vpop.f32.mrb[0].mxu0
        %v3112 = vadd.f32 %v2919, %v3111
        %v3113 = vpop.f32.mrb[0].mxu0
        %v3114 = vadd.f32 %v2921, %v3113
        %v3115 = vpop.f32.mrb[0].mxu0
        %v3116 = vadd.f32 %v2923, %v3115
        %3117 = vmatprep.mubr.bf16.mxu0 %v1166
        %3118 = vmatmul.mubr.bf16.gmra.mrb[0].mxu0 %v1165
        %v3119 = vpop.f32.mrb[0].mxu0
        %v3120 = vadd.f32 %v2927, %v3119
        %v3121 = vpop.f32.mrb[0].mxu0
        %v3122 = vadd.f32 %v2929, %v3121
        %v3123 = vpop.f32.mrb[0].mxu0
        %v3124 = vadd.f32 %v2931, %v3123
        %v3125 = vpop.f32.mrb[0].mxu0
        %v3126 = vadd.f32 %v2933, %v3125
        %3127 = vmatprep.mubr.bf16.mxu0 %v1174
        %3128 = vmatmul.mubr.bf16.gmra.mrb[0].mxu0 %v1173
        %v3129 = vpop.f32.mrb[0].mxu0
        %v3130 = vadd.f32 %v2937, %v3129
        %v3131 = vpop.f32.mrb[0].mxu0
        %v3132 = vadd.f32 %v2939, %v3131
        %v3133 = vpop.f32.mrb[0].mxu0
        %v3134 = vadd.f32 %v2941, %v3133
        %v3135 = vpop.f32.mrb[0].mxu0
        %v3136 = vadd.f32 %v2943, %v3135
        %3137 = vmatprep.mubr.bf16.mxu0 %v1182
        %3138 = vmatmul.mubr.bf16.gmra.mrb[0].mxu0 %v1181
        %v3139 = vpop.f32.mrb[0].mxu0
        %v3140 = vadd.f32 %v2947, %v3139
        %v3141 = vpop.f32.mrb[0].mxu0
        %v3142 = vadd.f32 %v2949, %v3141
        %v3143 = vpop.f32.mrb[0].mxu0
        %v3144 = vadd.f32 %v2951, %v3143
        %v3145 = vpop.f32.mrb[0].mxu0
        %v3146 = vadd.f32 %v2953, %v3145
        %3147 = vmatprep.mubr.bf16.mxu0 %v1190
        %3148 = vmatmul.mubr.bf16.gmra.mrb[0].mxu0 %v1189
        %v3149 = vpop.f32.mrb[0].mxu0
        %v3150 = vadd.f32 %v2957, %v3149
        %v3151 = vpop.f32.mrb[0].mxu0
        %v3152 = vadd.f32 %v2959, %v3151
        %v3153 = vpop.f32.mrb[0].mxu0
        %v3154 = vadd.f32 %v2961, %v3153
        %v3155 = vpop.f32.mrb[0].mxu0
        %v3156 = vadd.f32 %v2963, %v3155
        %3157 = vmatprep.mubr.bf16.mxu0 %v1198
        %3158 = vmatmul.mubr.bf16.gmra.mrb[0].mxu0 %v1197
        %v3159 = vpop.f32.mrb[0].mxu0
        %v3160 = vadd.f32 %v2967, %v3159
        %v3161 = vpop.f32.mrb[0].mxu0
        %v3162 = vadd.f32 %v2969, %v3161
        %v3163 = vpop.f32.mrb[0].mxu0
        %v3164 = vadd.f32 %v2971, %v3163
        %v3165 = vpop.f32.mrb[0].mxu0
        %v3166 = vadd.f32 %v2973, %v3165
        %3167 = vmatprep.mubr.bf16.mxu0 %v1206
        %3168 = vmatmul.mubr.bf16.gmra.mrb[0].mxu0 %v1205
        %v3169 = vpop.f32.mrb[0].mxu0
        %v3170 = vadd.f32 %v2977, %v3169
        %v3171 = vpop.f32.mrb[0].mxu0
        %v3172 = vadd.f32 %v2979, %v3171
        %v3173 = vpop.f32.mrb[0].mxu0
        %v3174 = vadd.f32 %v2981, %v3173
        %v3175 = vpop.f32.mrb[0].mxu0
        %v3176 = vadd.f32 %v2983, %v3175
        %3177 = vmatprep.mubr.bf16.mxu0 %v1214
        %3178 = vmatmul.mubr.bf16.gmra.mrb[0].mxu0 %v1213
        %v3179 = vpop.f32.mrb[0].mxu0
        %v3180 = vadd.f32 %v2987, %v3179
        %v3181 = vpop.f32.mrb[0].mxu0
        %v3182 = vadd.f32 %v2989, %v3181
        %v3183 = vpop.f32.mrb[0].mxu0
        %v3184 = vadd.f32 %v2991, %v3183
        %v3185 = vpop.f32.mrb[0].mxu0
        %v3186 = vadd.f32 %v2993, %v3185
        %3187 = vmatprep.mubr.bf16.mxu0 %v1222
        %3188 = vmatmul.mubr.bf16.gmra.mrb[0].mxu0 %v1221
        %v3189 = vpop.f32.mrb[0].mxu0
        %v3190 = vadd.f32 %v2997, %v3189
        %v3191 = vpop.f32.mrb[0].mxu0
        %v3192 = vadd.f32 %v2999, %v3191
        %v3193 = vpop.f32.mrb[0].mxu0
        %v3194 = vadd.f32 %v3001, %v3193
        %v3195 = vpop.f32.mrb[0].mxu0
        %v3196 = vadd.f32 %v3003, %v3195
        %3197 = vmatprep.mubr.bf16.mxu0 %v1230
        %3198 = vmatmul.mubr.bf16.gmra.mrb[0].mxu0 %v1229
        %v3199 = vpop.f32.mrb[0].mxu0
        %v3200 = vadd.f32 %v3007, %v3199
        %v3201 = vpop.f32.mrb[0].mxu0
        %v3202 = vadd.f32 %v3009, %v3201
        %v3203 = vpop.f32.mrb[0].mxu0
        %v3204 = vadd.f32 %v3011, %v3203
        %v3205 = vpop.f32.mrb[0].mxu0
        %v3206 = vadd.f32 %v3013, %v3205
        %3207 = vmatprep.mubr.bf16.mxu0 %v1238
        %3208 = vmatmul.mubr.bf16.gmra.mrb[0].mxu0 %v1237
        %v3209 = vpop.f32.mrb[0].mxu0
        %v3210 = vadd.f32 %v3017, %v3209
        %v3211 = vpop.f32.mrb[0].mxu0
        %v3212 = vadd.f32 %v3019, %v3211
        %v3213 = vpop.f32.mrb[0].mxu0
        %v3214 = vadd.f32 %v3021, %v3213
        %v3215 = vpop.f32.mrb[0].mxu0
        %v3216 = vadd.f32 %v3023, %v3215
        %3217 = vmatprep.mubr.bf16.mxu0 %v1246
        %3218 = vmatmul.mubr.bf16.gmra.mrb[0].mxu0 %v1245
        %v3219 = vpop.f32.mrb[0].mxu0
        %v3220 = vadd.f32 %v3027, %v3219
        %v3221 = vpop.f32.mrb[0].mxu0
        %v3222 = vadd.f32 %v3029, %v3221
        %v3223 = vpop.f32.mrb[0].mxu0
        %v3224 = vadd.f32 %v3031, %v3223
        %v3225 = vpop.f32.mrb[0].mxu0
        %v3226 = vadd.f32 %v3033, %v3225
        %3227 = vmatprep.mubr.bf16.mxu0 %v1254
        %3228 = vmatmul.mubr.bf16.gmra.mrb[0].mxu0 %v1253
        %v3229 = vpop.f32.mrb[0].mxu0
        %v3230 = vadd.f32 %v3037, %v3229
        %v3231 = vpop.f32.mrb[0].mxu0
        %v3232 = vadd.f32 %v3039, %v3231
        %v3233 = vpop.f32.mrb[0].mxu0
        %v3234 = vadd.f32 %v3041, %v3233
        %v3235 = vpop.f32.mrb[0].mxu0
        %v3236 = vadd.f32 %v3043, %v3235
        %3237 = vmatprep.mubr.bf16.mxu0 %v1262
        %3238 = vmatmul.mubr.bf16.gmra.mrb[0].mxu0 %v1261
        %v3239 = vpop.f32.mrb[0].mxu0
        %v3240 = vadd.f32 %v3047, %v3239
        %v3241 = vpop.f32.mrb[0].mxu0
        %v3242 = vadd.f32 %v3049, %v3241
        %v3243 = vpop.f32.mrb[0].mxu0
        %v3244 = vadd.f32 %v3051, %v3243
        %v3245 = vpop.f32.mrb[0].mxu0
        %v3246 = vadd.f32 %v3053, %v3245
        %3247 = vmatprep.mubr.bf16.mxu0 %v1270
        %3248 = vmatmul.mubr.bf16.gmra.mrb[0].mxu0 %v1269
        %v3249 = vpop.f32.mrb[0].mxu0
        %v3250 = vadd.f32 %v3057, %v3249
        %v3251 = vpop.f32.mrb[0].mxu0
        %v3252 = vadd.f32 %v3059, %v3251
        %v3253 = vpop.f32.mrb[0].mxu0
        %v3254 = vadd.f32 %v3061, %v3253
        %v3255 = vpop.f32.mrb[0].mxu0
        %v3256 = vadd.f32 %v3063, %v3255
        %3257 = vmatprep.mubr.bf16.mxu0 %v1278
        %3258 = vmatmul.mubr.bf16.gmra.mrb[0].mxu0 %v1277
        %v3259 = vpop.f32.mrb[0].mxu0
        %v3260 = vadd.f32 %v3067, %v3259
        %v3261 = vpop.f32.mrb[0].mxu0
        %v3262 = vadd.f32 %v3069, %v3261
        %v3263 = vpop.f32.mrb[0].mxu0
        %v3264 = vadd.f32 %v3071, %v3263
        %v3265 = vpop.f32.mrb[0].mxu0
        %v3266 = vadd.f32 %v3073, %v3265
        %3267 = vdwg.mxu0
        %3268 = vmatprep.subr.bf16.mxu0 %v2370
        %3269 = vmatpush1.bf16.msra.mxu0 %v2369
        %3270 = vmatprep.subr.bf16.mxu0 %v2374
        %3271 = vmatpush1.bf16.msra.mxu0 %v2373
        %3272 = vmatprep.subr.bf16.mxu0 %v2378
        %3273 = vmatpush1.bf16.msra.mxu0 %v2377
        %3274 = vmatprep.subr.bf16.mxu0 %v2382
        %3275 = vmatpush1.bf16.msra.mxu0 %v2381
        %3276 = vmatprep.subr.bf16.mxu0 %v2386
        %3277 = vmatpush1.bf16.msra.mxu0 %v2385
        %3278 = vmatprep.subr.bf16.mxu0 %v2390
        %3279 = vmatpush1.bf16.msra.mxu0 %v2389
        %3280 = vmatprep.subr.bf16.mxu0 %v2394
        %3281 = vmatpush1.bf16.msra.mxu0 %v2393
        %3282 = vmatprep.subr.bf16.mxu0 %v2398
        %3283 = vmatpush1.bf16.msra.mxu0 %v2397
        %3284 = vmatprep.subr.bf16.mxu0 %v2402
        %3285 = vmatpush1.bf16.msra.mxu0 %v2401
        %3286 = vmatprep.subr.bf16.mxu0 %v2406
        %3287 = vmatpush1.bf16.msra.mxu0 %v2405
        %3288 = vmatprep.subr.bf16.mxu0 %v2410
        %3289 = vmatpush1.bf16.msra.mxu0 %v2409
        %3290 = vmatprep.subr.bf16.mxu0 %v2414
        %3291 = vmatpush1.bf16.msra.mxu0 %v2413
        %3292 = vmatprep.subr.bf16.mxu0 %v2418
        %3293 = vmatpush1.bf16.msra.mxu0 %v2417
        %3294 = vmatprep.subr.bf16.mxu0 %v2422
        %3295 = vmatpush1.bf16.msra.mxu0 %v2421
        %3296 = vmatprep.subr.bf16.mxu0 %v2426
        %3297 = vmatpush1.bf16.msra.mxu0 %v2425
        %3298 = vmatprep.subr.bf16.mxu0 %v2430
        %3299 = vmatpush1.bf16.msra.mxu0 %v2429
        %3300 = vmatprep.mubr.bf16.mxu0 %v1160
        %3301 = vmatmul.mubr.bf16.gmra.mrb[0].mxu0 %v1159
        %v3302 = vpop.f32.mrb[0].mxu0
        %v3303 = vadd.f32 %v3110, %v3302
        %v3304 = vpop.f32.mrb[0].mxu0
        %v3305 = vadd.f32 %v3112, %v3304
        %v3306 = vpop.f32.mrb[0].mxu0
        %v3307 = vadd.f32 %v3114, %v3306
        %v3308 = vpop.f32.mrb[0].mxu0
        %v3309 = vadd.f32 %v3116, %v3308
        %3310 = vmatprep.mubr.bf16.mxu0 %v1168
        %3311 = vmatmul.mubr.bf16.gmra.mrb[0].mxu0 %v1167
        %v3312 = vpop.f32.mrb[0].mxu0
        %v3313 = vadd.f32 %v3120, %v3312
        %v3314 = vpop.f32.mrb[0].mxu0
        %v3315 = vadd.f32 %v3122, %v3314
        %v3316 = vpop.f32.mrb[0].mxu0
        %v3317 = vadd.f32 %v3124, %v3316
        %v3318 = vpop.f32.mrb[0].mxu0
        %v3319 = vadd.f32 %v3126, %v3318
        %3320 = vmatprep.mubr.bf16.mxu0 %v1176
        %3321 = vmatmul.mubr.bf16.gmra.mrb[0].mxu0 %v1175
        %v3322 = vpop.f32.mrb[0].mxu0
        %v3323 = vadd.f32 %v3130, %v3322
        %v3324 = vpop.f32.mrb[0].mxu0
        %v3325 = vadd.f32 %v3132, %v3324
        %v3326 = vpop.f32.mrb[0].mxu0
        %v3327 = vadd.f32 %v3134, %v3326
        %v3328 = vpop.f32.mrb[0].mxu0
        %v3329 = vadd.f32 %v3136, %v3328
        %3330 = vmatprep.mubr.bf16.mxu0 %v1184
        %3331 = vmatmul.mubr.bf16.gmra.mrb[0].mxu0 %v1183
        %v3332 = vpop.f32.mrb[0].mxu0
        %v3333 = vadd.f32 %v3140, %v3332
        %v3334 = vpop.f32.mrb[0].mxu0
        %v3335 = vadd.f32 %v3142, %v3334
        %v3336 = vpop.f32.mrb[0].mxu0
        %v3337 = vadd.f32 %v3144, %v3336
        %v3338 = vpop.f32.mrb[0].mxu0
        %v3339 = vadd.f32 %v3146, %v3338
        %3340 = vmatprep.mubr.bf16.mxu0 %v1192
        %3341 = vmatmul.mubr.bf16.gmra.mrb[0].mxu0 %v1191
        %v3342 = vpop.f32.mrb[0].mxu0
        %v3343 = vadd.f32 %v3150, %v3342
        %v3344 = vpop.f32.mrb[0].mxu0
        %v3345 = vadd.f32 %v3152, %v3344
        %v3346 = vpop.f32.mrb[0].mxu0
        %v3347 = vadd.f32 %v3154, %v3346
        %v3348 = vpop.f32.mrb[0].mxu0
        %v3349 = vadd.f32 %v3156, %v3348
        %3350 = vmatprep.mubr.bf16.mxu0 %v1200
        %3351 = vmatmul.mubr.bf16.gmra.mrb[0].mxu0 %v1199
        %v3352 = vpop.f32.mrb[0].mxu0
        %v3353 = vadd.f32 %v3160, %v3352
        %v3354 = vpop.f32.mrb[0].mxu0
        %v3355 = vadd.f32 %v3162, %v3354
        %v3356 = vpop.f32.mrb[0].mxu0
        %v3357 = vadd.f32 %v3164, %v3356
        %v3358 = vpop.f32.mrb[0].mxu0
        %v3359 = vadd.f32 %v3166, %v3358
        %3360 = vmatprep.mubr.bf16.mxu0 %v1208
        %3361 = vmatmul.mubr.bf16.gmra.mrb[0].mxu0 %v1207
        %v3362 = vpop.f32.mrb[0].mxu0
        %v3363 = vadd.f32 %v3170, %v3362
        %v3364 = vpop.f32.mrb[0].mxu0
        %v3365 = vadd.f32 %v3172, %v3364
        %v3366 = vpop.f32.mrb[0].mxu0
        %v3367 = vadd.f32 %v3174, %v3366
        %v3368 = vpop.f32.mrb[0].mxu0
        %v3369 = vadd.f32 %v3176, %v3368
        %3370 = vmatprep.mubr.bf16.mxu0 %v1216
        %3371 = vmatmul.mubr.bf16.gmra.mrb[0].mxu0 %v1215
        %v3372 = vpop.f32.mrb[0].mxu0
        %v3373 = vadd.f32 %v3180, %v3372
        %v3374 = vpop.f32.mrb[0].mxu0
        %v3375 = vadd.f32 %v3182, %v3374
        %v3376 = vpop.f32.mrb[0].mxu0
        %v3377 = vadd.f32 %v3184, %v3376
        %v3378 = vpop.f32.mrb[0].mxu0
        %v3379 = vadd.f32 %v3186, %v3378
        %3380 = vmatprep.mubr.bf16.mxu0 %v1224
        %3381 = vmatmul.mubr.bf16.gmra.mrb[0].mxu0 %v1223
        %v3382 = vpop.f32.mrb[0].mxu0
        %v3383 = vadd.f32 %v3190, %v3382
        %v3384 = vpop.f32.mrb[0].mxu0
        %v3385 = vadd.f32 %v3192, %v3384
        %v3386 = vpop.f32.mrb[0].mxu0
        %v3387 = vadd.f32 %v3194, %v3386
        %v3388 = vpop.f32.mrb[0].mxu0
        %v3389 = vadd.f32 %v3196, %v3388
        %3390 = vmatprep.mubr.bf16.mxu0 %v1232
        %3391 = vmatmul.mubr.bf16.gmra.mrb[0].mxu0 %v1231
        %v3392 = vpop.f32.mrb[0].mxu0
        %v3393 = vadd.f32 %v3200, %v3392
        %v3394 = vpop.f32.mrb[0].mxu0
        %v3395 = vadd.f32 %v3202, %v3394
        %v3396 = vpop.f32.mrb[0].mxu0
        %v3397 = vadd.f32 %v3204, %v3396
        %v3398 = vpop.f32.mrb[0].mxu0
        %v3399 = vadd.f32 %v3206, %v3398
        %3400 = vmatprep.mubr.bf16.mxu0 %v1240
        %3401 = vmatmul.mubr.bf16.gmra.mrb[0].mxu0 %v1239
        %v3402 = vpop.f32.mrb[0].mxu0
        %v3403 = vadd.f32 %v3210, %v3402
        %v3404 = vpop.f32.mrb[0].mxu0
        %v3405 = vadd.f32 %v3212, %v3404
        %v3406 = vpop.f32.mrb[0].mxu0
        %v3407 = vadd.f32 %v3214, %v3406
        %v3408 = vpop.f32.mrb[0].mxu0
        %v3409 = vadd.f32 %v3216, %v3408
        %3410 = vmatprep.mubr.bf16.mxu0 %v1248
        %3411 = vmatmul.mubr.bf16.gmra.mrb[0].mxu0 %v1247
        %v3412 = vpop.f32.mrb[0].mxu0
        %v3413 = vadd.f32 %v3220, %v3412
        %v3414 = vpop.f32.mrb[0].mxu0
        %v3415 = vadd.f32 %v3222, %v3414
        %v3416 = vpop.f32.mrb[0].mxu0
        %v3417 = vadd.f32 %v3224, %v3416
        %v3418 = vpop.f32.mrb[0].mxu0
        %v3419 = vadd.f32 %v3226, %v3418
        %3420 = vmatprep.mubr.bf16.mxu0 %v1256
        %3421 = vmatmul.mubr.bf16.gmra.mrb[0].mxu0 %v1255
        %v3422 = vpop.f32.mrb[0].mxu0
        %v3423 = vadd.f32 %v3230, %v3422
        %v3424 = vpop.f32.mrb[0].mxu0
        %v3425 = vadd.f32 %v3232, %v3424
        %v3426 = vpop.f32.mrb[0].mxu0
        %v3427 = vadd.f32 %v3234, %v3426
        %v3428 = vpop.f32.mrb[0].mxu0
        %v3429 = vadd.f32 %v3236, %v3428
        %3430 = vmatprep.mubr.bf16.mxu0 %v1264
        %3431 = vmatmul.mubr.bf16.gmra.mrb[0].mxu0 %v1263
        %v3432 = vpop.f32.mrb[0].mxu0
        %v3433 = vadd.f32 %v3240, %v3432
        %v3434 = vpop.f32.mrb[0].mxu0
        %v3435 = vadd.f32 %v3242, %v3434
        %v3436 = vpop.f32.mrb[0].mxu0
        %v3437 = vadd.f32 %v3244, %v3436
        %v3438 = vpop.f32.mrb[0].mxu0
        %v3439 = vadd.f32 %v3246, %v3438
        %3440 = vmatprep.mubr.bf16.mxu0 %v1272
        %3441 = vmatmul.mubr.bf16.gmra.mrb[0].mxu0 %v1271
        %v3442 = vpop.f32.mrb[0].mxu0
        %v3443 = vadd.f32 %v3250, %v3442
        %v3444 = vpop.f32.mrb[0].mxu0
        %v3445 = vadd.f32 %v3252, %v3444
        %v3446 = vpop.f32.mrb[0].mxu0
        %v3447 = vadd.f32 %v3254, %v3446
        %v3448 = vpop.f32.mrb[0].mxu0
        %v3449 = vadd.f32 %v3256, %v3448
        %3450 = vmatprep.mubr.bf16.mxu0 %v1280
        %3451 = vmatmul.mubr.bf16.gmra.mrb[0].mxu0 %v1279
        %v3452 = vpop.f32.mrb[0].mxu0
        %v3453 = vadd.f32 %v3260, %v3452
        %v3454 = vpop.f32.mrb[0].mxu0
        %v3455 = vadd.f32 %v3262, %v3454
        %v3456 = vpop.f32.mrb[0].mxu0
        %v3457 = vadd.f32 %v3264, %v3456
        %v3458 = vpop.f32.mrb[0].mxu0
        %v3459 = vadd.f32 %v3266, %v3458
        %3460 = vdwg.mxu0
        %3461 = vmatprep.subr.bf16.mxu0 %v2180
        %3462 = vmatpush1.bf16.msra.mxu0 %v2179
        %3463 = vmatprep.subr.bf16.mxu0 %v2184
        %3464 = vmatpush1.bf16.msra.mxu0 %v2183
        %3465 = vmatprep.subr.bf16.mxu0 %v2188
        %3466 = vmatpush1.bf16.msra.mxu0 %v2187
        %3467 = vmatprep.subr.bf16.mxu0 %v2192
        %3468 = vmatpush1.bf16.msra.mxu0 %v2191
        %3469 = vmatprep.subr.bf16.mxu0 %v2196
        %3470 = vmatpush1.bf16.msra.mxu0 %v2195
        %3471 = vmatprep.subr.bf16.mxu0 %v2200
        %3472 = vmatpush1.bf16.msra.mxu0 %v2199
        %3473 = vmatprep.subr.bf16.mxu0 %v2204
        %3474 = vmatpush1.bf16.msra.mxu0 %v2203
        %3475 = vmatprep.subr.bf16.mxu0 %v2208
        %3476 = vmatpush1.bf16.msra.mxu0 %v2207
        %3477 = vmatprep.subr.bf16.mxu0 %v2212
        %3478 = vmatpush1.bf16.msra.mxu0 %v2211
        %3479 = vmatprep.subr.bf16.mxu0 %v2216
        %3480 = vmatpush1.bf16.msra.mxu0 %v2215
        %3481 = vmatprep.subr.bf16.mxu0 %v2220
        %3482 = vmatpush1.bf16.msra.mxu0 %v2219
        %3483 = vmatprep.subr.bf16.mxu0 %v2224
        %3484 = vmatpush1.bf16.msra.mxu0 %v2223
        %3485 = vmatprep.subr.bf16.mxu0 %v2228
        %3486 = vmatpush1.bf16.msra.mxu0 %v2227
        %3487 = vmatprep.subr.bf16.mxu0 %v2232
        %3488 = vmatpush1.bf16.msra.mxu0 %v2231
        %3489 = vmatprep.subr.bf16.mxu0 %v2236
        %3490 = vmatpush1.bf16.msra.mxu0 %v2235
        %3491 = vmatprep.subr.bf16.mxu0 %v2240
        %3492 = vmatpush1.bf16.msra.mxu0 %v2239
        %3493 = vmatprep.mubr.bf16.mxu0 %v1154
        %3494 = vmatmul.mubr.bf16.gmra.mrb[0].mxu0 %v1153
        %v3495 = vpop.f32.mrb[0].mxu0
        %v3496 = vadd.f32 %v760, %v3495
        %v3497 = vpop.f32.mrb[0].mxu0
        %v3498 = vadd.f32 %v764, %v3497
        %v3499 = vpop.f32.mrb[0].mxu0
        %v3500 = vadd.f32 %v760, %v3499
        %v3501 = vpop.f32.mrb[0].mxu0
        %v3502 = vadd.f32 %v764, %v3501
        %3503 = vmatprep.mubr.bf16.mxu0 %v1162
        %3504 = vmatmul.mubr.bf16.gmra.mrb[0].mxu0 %v1161
        %v3505 = vpop.f32.mrb[0].mxu0
        %v3506 = vadd.f32 %v760, %v3505
        %v3507 = vpop.f32.mrb[0].mxu0
        %v3508 = vadd.f32 %v764, %v3507
        %v3509 = vpop.f32.mrb[0].mxu0
        %v3510 = vadd.f32 %v760, %v3509
        %v3511 = vpop.f32.mrb[0].mxu0
        %v3512 = vadd.f32 %v764, %v3511
        %3513 = vmatprep.mubr.bf16.mxu0 %v1170
        %3514 = vmatmul.mubr.bf16.gmra.mrb[0].mxu0 %v1169
        %v3515 = vpop.f32.mrb[0].mxu0
        %v3516 = vadd.f32 %v760, %v3515
        %v3517 = vpop.f32.mrb[0].mxu0
        %v3518 = vadd.f32 %v764, %v3517
        %v3519 = vpop.f32.mrb[0].mxu0
        %v3520 = vadd.f32 %v760, %v3519
        %v3521 = vpop.f32.mrb[0].mxu0
        %v3522 = vadd.f32 %v764, %v3521
        %3523 = vmatprep.mubr.bf16.mxu0 %v1178
        %3524 = vmatmul.mubr.bf16.gmra.mrb[0].mxu0 %v1177
        %v3525 = vpop.f32.mrb[0].mxu0
        %v3526 = vadd.f32 %v760, %v3525
        %v3527 = vpop.f32.mrb[0].mxu0
        %v3528 = vadd.f32 %v764, %v3527
        %v3529 = vpop.f32.mrb[0].mxu0
        %v3530 = vadd.f32 %v760, %v3529
        %v3531 = vpop.f32.mrb[0].mxu0
        %v3532 = vadd.f32 %v764, %v3531
        %3533 = vmatprep.mubr.bf16.mxu0 %v1186
        %3534 = vmatmul.mubr.bf16.gmra.mrb[0].mxu0 %v1185
        %v3535 = vpop.f32.mrb[0].mxu0
        %v3536 = vadd.f32 %v760, %v3535
        %v3537 = vpop.f32.mrb[0].mxu0
        %v3538 = vadd.f32 %v764, %v3537
        %v3539 = vpop.f32.mrb[0].mxu0
        %v3540 = vadd.f32 %v760, %v3539
        %v3541 = vpop.f32.mrb[0].mxu0
        %v3542 = vadd.f32 %v764, %v3541
        %3543 = vmatprep.mubr.bf16.mxu0 %v1194
        %3544 = vmatmul.mubr.bf16.gmra.mrb[0].mxu0 %v1193
        %v3545 = vpop.f32.mrb[0].mxu0
        %v3546 = vadd.f32 %v760, %v3545
        %v3547 = vpop.f32.mrb[0].mxu0
        %v3548 = vadd.f32 %v764, %v3547
        %v3549 = vpop.f32.mrb[0].mxu0
        %v3550 = vadd.f32 %v760, %v3549
        %v3551 = vpop.f32.mrb[0].mxu0
        %v3552 = vadd.f32 %v764, %v3551
        %3553 = vmatprep.mubr.bf16.mxu0 %v1202
        %3554 = vmatmul.mubr.bf16.gmra.mrb[0].mxu0 %v1201
        %v3555 = vpop.f32.mrb[0].mxu0
        %v3556 = vadd.f32 %v760, %v3555
        %v3557 = vpop.f32.mrb[0].mxu0
        %v3558 = vadd.f32 %v764, %v3557
        %v3559 = vpop.f32.mrb[0].mxu0
        %v3560 = vadd.f32 %v760, %v3559
        %v3561 = vpop.f32.mrb[0].mxu0
        %v3562 = vadd.f32 %v764, %v3561
        %3563 = vmatprep.mubr.bf16.mxu0 %v1210
        %3564 = vmatmul.mubr.bf16.gmra.mrb[0].mxu0 %v1209
        %v3565 = vpop.f32.mrb[0].mxu0
        %v3566 = vadd.f32 %v760, %v3565
        %v3567 = vpop.f32.mrb[0].mxu0
        %v3568 = vadd.f32 %v764, %v3567
        %v3569 = vpop.f32.mrb[0].mxu0
        %v3570 = vadd.f32 %v760, %v3569
        %v3571 = vpop.f32.mrb[0].mxu0
        %v3572 = vadd.f32 %v764, %v3571
        %3573 = vmatprep.mubr.bf16.mxu0 %v1218
        %3574 = vmatmul.mubr.bf16.gmra.mrb[0].mxu0 %v1217
        %v3575 = vpop.f32.mrb[0].mxu0
        %v3576 = vadd.f32 %v760, %v3575
        %v3577 = vpop.f32.mrb[0].mxu0
        %v3578 = vadd.f32 %v764, %v3577
        %v3579 = vpop.f32.mrb[0].mxu0
        %v3580 = vadd.f32 %v760, %v3579
        %v3581 = vpop.f32.mrb[0].mxu0
        %v3582 = vadd.f32 %v764, %v3581
        %3583 = vmatprep.mubr.bf16.mxu0 %v1226
        %3584 = vmatmul.mubr.bf16.gmra.mrb[0].mxu0 %v1225
        %v3585 = vpop.f32.mrb[0].mxu0
        %v3586 = vadd.f32 %v760, %v3585
        %v3587 = vpop.f32.mrb[0].mxu0
        %v3588 = vadd.f32 %v764, %v3587
        %v3589 = vpop.f32.mrb[0].mxu0
        %v3590 = vadd.f32 %v760, %v3589
        %v3591 = vpop.f32.mrb[0].mxu0
        %v3592 = vadd.f32 %v764, %v3591
        %3593 = vmatprep.mubr.bf16.mxu0 %v1234
        %3594 = vmatmul.mubr.bf16.gmra.mrb[0].mxu0 %v1233
        %v3595 = vpop.f32.mrb[0].mxu0
        %v3596 = vadd.f32 %v760, %v3595
        %v3597 = vpop.f32.mrb[0].mxu0
        %v3598 = vadd.f32 %v764, %v3597
        %v3599 = vpop.f32.mrb[0].mxu0
        %v3600 = vadd.f32 %v760, %v3599
        %v3601 = vpop.f32.mrb[0].mxu0
        %v3602 = vadd.f32 %v764, %v3601
        %3603 = vmatprep.mubr.bf16.mxu0 %v1242
        %3604 = vmatmul.mubr.bf16.gmra.mrb[0].mxu0 %v1241
        %v3605 = vpop.f32.mrb[0].mxu0
        %v3606 = vadd.f32 %v760, %v3605
        %v3607 = vpop.f32.mrb[0].mxu0
        %v3608 = vadd.f32 %v764, %v3607
        %v3609 = vpop.f32.mrb[0].mxu0
        %v3610 = vadd.f32 %v760, %v3609
        %v3611 = vpop.f32.mrb[0].mxu0
        %v3612 = vadd.f32 %v764, %v3611
        %3613 = vmatprep.mubr.bf16.mxu0 %v1250
        %3614 = vmatmul.mubr.bf16.gmra.mrb[0].mxu0 %v1249
        %v3615 = vpop.f32.mrb[0].mxu0
        %v3616 = vadd.f32 %v760, %v3615
        %v3617 = vpop.f32.mrb[0].mxu0
        %v3618 = vadd.f32 %v764, %v3617
        %v3619 = vpop.f32.mrb[0].mxu0
        %v3620 = vadd.f32 %v760, %v3619
        %v3621 = vpop.f32.mrb[0].mxu0
        %v3622 = vadd.f32 %v764, %v3621
        %3623 = vmatprep.mubr.bf16.mxu0 %v1258
        %3624 = vmatmul.mubr.bf16.gmra.mrb[0].mxu0 %v1257
        %v3625 = vpop.f32.mrb[0].mxu0
        %v3626 = vadd.f32 %v760, %v3625
        %v3627 = vpop.f32.mrb[0].mxu0
        %v3628 = vadd.f32 %v764, %v3627
        %v3629 = vpop.f32.mrb[0].mxu0
        %v3630 = vadd.f32 %v760, %v3629
        %v3631 = vpop.f32.mrb[0].mxu0
        %v3632 = vadd.f32 %v764, %v3631
        %3633 = vmatprep.mubr.bf16.mxu0 %v1266
        %3634 = vmatmul.mubr.bf16.gmra.mrb[0].mxu0 %v1265
        %v3635 = vpop.f32.mrb[0].mxu0
        %v3636 = vadd.f32 %v760, %v3635
        %v3637 = vpop.f32.mrb[0].mxu0
        %v3638 = vadd.f32 %v764, %v3637
        %v3639 = vpop.f32.mrb[0].mxu0
        %v3640 = vadd.f32 %v760, %v3639
        %v3641 = vpop.f32.mrb[0].mxu0
        %v3642 = vadd.f32 %v764, %v3641
        %3643 = vmatprep.mubr.bf16.mxu0 %v1274
        %3644 = vmatmul.mubr.bf16.gmra.mrb[0].mxu0 %v1273
        %v3645 = vpop.f32.mrb[0].mxu0
        %v3646 = vadd.f32 %v760, %v3645
        %v3647 = vpop.f32.mrb[0].mxu0
        %v3648 = vadd.f32 %v764, %v3647
        %v3649 = vpop.f32.mrb[0].mxu0
        %v3650 = vadd.f32 %v760, %v3649
        %v3651 = vpop.f32.mrb[0].mxu0
        %v3652 = vadd.f32 %v764, %v3651
        %3653 = vdwg.mxu0
        %3654 = vmatprep.subr.bf16.mxu0 %v2244
        %3655 = vmatpush1.bf16.msra.mxu0 %v2243
        %3656 = vmatprep.subr.bf16.mxu0 %v2248
        %3657 = vmatpush1.bf16.msra.mxu0 %v2247
        %3658 = vmatprep.subr.bf16.mxu0 %v2252
        %3659 = vmatpush1.bf16.msra.mxu0 %v2251
        %3660 = vmatprep.subr.bf16.mxu0 %v2256
        %3661 = vmatpush1.bf16.msra.mxu0 %v2255
        %3662 = vmatprep.subr.bf16.mxu0 %v2260
        %3663 = vmatpush1.bf16.msra.mxu0 %v2259
        %3664 = vmatprep.subr.bf16.mxu0 %v2264
        %3665 = vmatpush1.bf16.msra.mxu0 %v2263
        %3666 = vmatprep.subr.bf16.mxu0 %v2268
        %3667 = vmatpush1.bf16.msra.mxu0 %v2267
        %3668 = vmatprep.subr.bf16.mxu0 %v2272
        %3669 = vmatpush1.bf16.msra.mxu0 %v2271
        %3670 = vmatprep.subr.bf16.mxu0 %v2276
        %3671 = vmatpush1.bf16.msra.mxu0 %v2275
        %3672 = vmatprep.subr.bf16.mxu0 %v2280
        %3673 = vmatpush1.bf16.msra.mxu0 %v2279
        %3674 = vmatprep.subr.bf16.mxu0 %v2284
        %3675 = vmatpush1.bf16.msra.mxu0 %v2283
        %3676 = vmatprep.subr.bf16.mxu0 %v2288
        %3677 = vmatpush1.bf16.msra.mxu0 %v2287
        %3678 = vmatprep.subr.bf16.mxu0 %v2292
        %3679 = vmatpush1.bf16.msra.mxu0 %v2291
        %3680 = vmatprep.subr.bf16.mxu0 %v2296
        %3681 = vmatpush1.bf16.msra.mxu0 %v2295
        %3682 = vmatprep.subr.bf16.mxu0 %v2300
        %3683 = vmatpush1.bf16.msra.mxu0 %v2299
        %3684 = vmatprep.subr.bf16.mxu0 %v2304
        %3685 = vmatpush1.bf16.msra.mxu0 %v2303
        %3686 = vmatprep.mubr.bf16.mxu0 %v1156
        %3687 = vmatmul.mubr.bf16.gmra.mrb[0].mxu0 %v1155
        %v3688 = vpop.f32.mrb[0].mxu0
        %v3689 = vadd.f32 %v3496, %v3688
        %v3690 = vpop.f32.mrb[0].mxu0
        %v3691 = vadd.f32 %v3498, %v3690
        %v3692 = vpop.f32.mrb[0].mxu0
        %v3693 = vadd.f32 %v3500, %v3692
        %v3694 = vpop.f32.mrb[0].mxu0
        %v3695 = vadd.f32 %v3502, %v3694
        %3696 = vmatprep.mubr.bf16.mxu0 %v1164
        %3697 = vmatmul.mubr.bf16.gmra.mrb[0].mxu0 %v1163
        %v3698 = vpop.f32.mrb[0].mxu0
        %v3699 = vadd.f32 %v3506, %v3698
        %v3700 = vpop.f32.mrb[0].mxu0
        %v3701 = vadd.f32 %v3508, %v3700
        %v3702 = vpop.f32.mrb[0].mxu0
        %v3703 = vadd.f32 %v3510, %v3702
        %v3704 = vpop.f32.mrb[0].mxu0
        %v3705 = vadd.f32 %v3512, %v3704
        %3706 = vmatprep.mubr.bf16.mxu0 %v1172
        %3707 = vmatmul.mubr.bf16.gmra.mrb[0].mxu0 %v1171
        %v3708 = vpop.f32.mrb[0].mxu0
        %v3709 = vadd.f32 %v3516, %v3708
        %v3710 = vpop.f32.mrb[0].mxu0
        %v3711 = vadd.f32 %v3518, %v3710
        %v3712 = vpop.f32.mrb[0].mxu0
        %v3713 = vadd.f32 %v3520, %v3712
        %v3714 = vpop.f32.mrb[0].mxu0
        %v3715 = vadd.f32 %v3522, %v3714
        %3716 = vmatprep.mubr.bf16.mxu0 %v1180
        %3717 = vmatmul.mubr.bf16.gmra.mrb[0].mxu0 %v1179
        %v3718 = vpop.f32.mrb[0].mxu0
        %v3719 = vadd.f32 %v3526, %v3718
        %v3720 = vpop.f32.mrb[0].mxu0
        %v3721 = vadd.f32 %v3528, %v3720
        %v3722 = vpop.f32.mrb[0].mxu0
        %v3723 = vadd.f32 %v3530, %v3722
        %v3724 = vpop.f32.mrb[0].mxu0
        %v3725 = vadd.f32 %v3532, %v3724
        %3726 = vmatprep.mubr.bf16.mxu0 %v1188
        %3727 = vmatmul.mubr.bf16.gmra.mrb[0].mxu0 %v1187
        %v3728 = vpop.f32.mrb[0].mxu0
        %v3729 = vadd.f32 %v3536, %v3728
        %v3730 = vpop.f32.mrb[0].mxu0
        %v3731 = vadd.f32 %v3538, %v3730
        %v3732 = vpop.f32.mrb[0].mxu0
        %v3733 = vadd.f32 %v3540, %v3732
        %v3734 = vpop.f32.mrb[0].mxu0
        %v3735 = vadd.f32 %v3542, %v3734
        %3736 = vmatprep.mubr.bf16.mxu0 %v1196
        %3737 = vmatmul.mubr.bf16.gmra.mrb[0].mxu0 %v1195
        %v3738 = vpop.f32.mrb[0].mxu0
        %v3739 = vadd.f32 %v3546, %v3738
        %v3740 = vpop.f32.mrb[0].mxu0
        %v3741 = vadd.f32 %v3548, %v3740
        %v3742 = vpop.f32.mrb[0].mxu0
        %v3743 = vadd.f32 %v3550, %v3742
        %v3744 = vpop.f32.mrb[0].mxu0
        %v3745 = vadd.f32 %v3552, %v3744
        %3746 = vmatprep.mubr.bf16.mxu0 %v1204
        %3747 = vmatmul.mubr.bf16.gmra.mrb[0].mxu0 %v1203
        %v3748 = vpop.f32.mrb[0].mxu0
        %v3749 = vadd.f32 %v3556, %v3748
        %v3750 = vpop.f32.mrb[0].mxu0
        %v3751 = vadd.f32 %v3558, %v3750
        %v3752 = vpop.f32.mrb[0].mxu0
        %v3753 = vadd.f32 %v3560, %v3752
        %v3754 = vpop.f32.mrb[0].mxu0
        %v3755 = vadd.f32 %v3562, %v3754
        %3756 = vmatprep.mubr.bf16.mxu0 %v1212
        %3757 = vmatmul.mubr.bf16.gmra.mrb[0].mxu0 %v1211
        %v3758 = vpop.f32.mrb[0].mxu0
        %v3759 = vadd.f32 %v3566, %v3758
        %v3760 = vpop.f32.mrb[0].mxu0
        %v3761 = vadd.f32 %v3568, %v3760
        %v3762 = vpop.f32.mrb[0].mxu0
        %v3763 = vadd.f32 %v3570, %v3762
        %v3764 = vpop.f32.mrb[0].mxu0
        %v3765 = vadd.f32 %v3572, %v3764
        %3766 = vmatprep.mubr.bf16.mxu0 %v1220
        %3767 = vmatmul.mubr.bf16.gmra.mrb[0].mxu0 %v1219
        %v3768 = vpop.f32.mrb[0].mxu0
        %v3769 = vadd.f32 %v3576, %v3768
        %v3770 = vpop.f32.mrb[0].mxu0
        %v3771 = vadd.f32 %v3578, %v3770
        %v3772 = vpop.f32.mrb[0].mxu0
        %v3773 = vadd.f32 %v3580, %v3772
        %v3774 = vpop.f32.mrb[0].mxu0
        %v3775 = vadd.f32 %v3582, %v3774
        %3776 = vmatprep.mubr.bf16.mxu0 %v1228
        %3777 = vmatmul.mubr.bf16.gmra.mrb[0].mxu0 %v1227
        %v3778 = vpop.f32.mrb[0].mxu0
        %v3779 = vadd.f32 %v3586, %v3778
        %v3780 = vpop.f32.mrb[0].mxu0
        %v3781 = vadd.f32 %v3588, %v3780
        %v3782 = vpop.f32.mrb[0].mxu0
        %v3783 = vadd.f32 %v3590, %v3782
        %v3784 = vpop.f32.mrb[0].mxu0
        %v3785 = vadd.f32 %v3592, %v3784
        %3786 = vmatprep.mubr.bf16.mxu0 %v1236
        %3787 = vmatmul.mubr.bf16.gmra.mrb[0].mxu0 %v1235
        %v3788 = vpop.f32.mrb[0].mxu0
        %v3789 = vadd.f32 %v3596, %v3788
        %v3790 = vpop.f32.mrb[0].mxu0
        %v3791 = vadd.f32 %v3598, %v3790
        %v3792 = vpop.f32.mrb[0].mxu0
        %v3793 = vadd.f32 %v3600, %v3792
        %v3794 = vpop.f32.mrb[0].mxu0
        %v3795 = vadd.f32 %v3602, %v3794
        %3796 = vmatprep.mubr.bf16.mxu0 %v1244
        %3797 = vmatmul.mubr.bf16.gmra.mrb[0].mxu0 %v1243
        %v3798 = vpop.f32.mrb[0].mxu0
        %v3799 = vadd.f32 %v3606, %v3798
        %v3800 = vpop.f32.mrb[0].mxu0
        %v3801 = vadd.f32 %v3608, %v3800
        %v3802 = vpop.f32.mrb[0].mxu0
        %v3803 = vadd.f32 %v3610, %v3802
        %v3804 = vpop.f32.mrb[0].mxu0
        %v3805 = vadd.f32 %v3612, %v3804
        %3806 = vmatprep.mubr.bf16.mxu0 %v1252
        %3807 = vmatmul.mubr.bf16.gmra.mrb[0].mxu0 %v1251
        %v3808 = vpop.f32.mrb[0].mxu0
        %v3809 = vadd.f32 %v3616, %v3808
        %v3810 = vpop.f32.mrb[0].mxu0
        %v3811 = vadd.f32 %v3618, %v3810
        %v3812 = vpop.f32.mrb[0].mxu0
        %v3813 = vadd.f32 %v3620, %v3812
        %v3814 = vpop.f32.mrb[0].mxu0
        %v3815 = vadd.f32 %v3622, %v3814
        %3816 = vmatprep.mubr.bf16.mxu0 %v1260
        %3817 = vmatmul.mubr.bf16.gmra.mrb[0].mxu0 %v1259
        %v3818 = vpop.f32.mrb[0].mxu0
        %v3819 = vadd.f32 %v3626, %v3818
        %v3820 = vpop.f32.mrb[0].mxu0
        %v3821 = vadd.f32 %v3628, %v3820
        %v3822 = vpop.f32.mrb[0].mxu0
        %v3823 = vadd.f32 %v3630, %v3822
        %v3824 = vpop.f32.mrb[0].mxu0
        %v3825 = vadd.f32 %v3632, %v3824
        %3826 = vmatprep.mubr.bf16.mxu0 %v1268
        %3827 = vmatmul.mubr.bf16.gmra.mrb[0].mxu0 %v1267
        %v3828 = vpop.f32.mrb[0].mxu0
        %v3829 = vadd.f32 %v3636, %v3828
        %v3830 = vpop.f32.mrb[0].mxu0
        %v3831 = vadd.f32 %v3638, %v3830
        %v3832 = vpop.f32.mrb[0].mxu0
        %v3833 = vadd.f32 %v3640, %v3832
        %v3834 = vpop.f32.mrb[0].mxu0
        %v3835 = vadd.f32 %v3642, %v3834
        %3836 = vmatprep.mubr.bf16.mxu0 %v1276
        %3837 = vmatmul.mubr.bf16.gmra.mrb[0].mxu0 %v1275
        %v3838 = vpop.f32.mrb[0].mxu0
        %v3839 = vadd.f32 %v3646, %v3838
        %v3840 = vpop.f32.mrb[0].mxu0
        %v3841 = vadd.f32 %v3648, %v3840
        %v3842 = vpop.f32.mrb[0].mxu0
        %v3843 = vadd.f32 %v3650, %v3842
        %v3844 = vpop.f32.mrb[0].mxu0
        %v3845 = vadd.f32 %v3652, %v3844
        %3846 = vdwg.mxu0
        %3847 = vmatprep.subr.bf16.mxu0 %v2308
        %3848 = vmatpush1.bf16.msra.mxu0 %v2307
        %3849 = vmatprep.subr.bf16.mxu0 %v2312
        %3850 = vmatpush1.bf16.msra.mxu0 %v2311
        %3851 = vmatprep.subr.bf16.mxu0 %v2316
        %3852 = vmatpush1.bf16.msra.mxu0 %v2315
        %3853 = vmatprep.subr.bf16.mxu0 %v2320
        %3854 = vmatpush1.bf16.msra.mxu0 %v2319
        %3855 = vmatprep.subr.bf16.mxu0 %v2324
        %3856 = vmatpush1.bf16.msra.mxu0 %v2323
        %3857 = vmatprep.subr.bf16.mxu0 %v2328
        %3858 = vmatpush1.bf16.msra.mxu0 %v2327
        %3859 = vmatprep.subr.bf16.mxu0 %v2332
        %3860 = vmatpush1.bf16.msra.mxu0 %v2331
        %3861 = vmatprep.subr.bf16.mxu0 %v2336
        %3862 = vmatpush1.bf16.msra.mxu0 %v2335
        %3863 = vmatprep.subr.bf16.mxu0 %v2340
        %3864 = vmatpush1.bf16.msra.mxu0 %v2339
        %3865 = vmatprep.subr.bf16.mxu0 %v2344
        %3866 = vmatpush1.bf16.msra.mxu0 %v2343
        %3867 = vmatprep.subr.bf16.mxu0 %v2348
        %3868 = vmatpush1.bf16.msra.mxu0 %v2347
        %3869 = vmatprep.subr.bf16.mxu0 %v2352
        %3870 = vmatpush1.bf16.msra.mxu0 %v2351
        %3871 = vmatprep.subr.bf16.mxu0 %v2356
        %3872 = vmatpush1.bf16.msra.mxu0 %v2355
        %3873 = vmatprep.subr.bf16.mxu0 %v2360
        %3874 = vmatpush1.bf16.msra.mxu0 %v2359
        %3875 = vmatprep.subr.bf16.mxu0 %v2364
        %3876 = vmatpush1.bf16.msra.mxu0 %v2363
        %3877 = vmatprep.subr.bf16.mxu0 %v2368
        %3878 = vmatpush1.bf16.msra.mxu0 %v2367
        %3879 = vmatprep.mubr.bf16.mxu0 %v1158
        %3880 = vmatmul.mubr.bf16.gmra.mrb[0].mxu0 %v1157
        %v3881 = vpop.f32.mrb[0].mxu0
        %v3882 = vadd.f32 %v3689, %v3881
        %v3883 = vpop.f32.mrb[0].mxu0
        %v3884 = vadd.f32 %v3691, %v3883
        %v3885 = vpop.f32.mrb[0].mxu0
        %v3886 = vadd.f32 %v3693, %v3885
        %v3887 = vpop.f32.mrb[0].mxu0
        %v3888 = vadd.f32 %v3695, %v3887
        %3889 = vmatprep.mubr.bf16.mxu0 %v1166
        %3890 = vmatmul.mubr.bf16.gmra.mrb[0].mxu0 %v1165
        %v3891 = vpop.f32.mrb[0].mxu0
        %v3892 = vadd.f32 %v3699, %v3891
        %v3893 = vpop.f32.mrb[0].mxu0
        %v3894 = vadd.f32 %v3701, %v3893
        %v3895 = vpop.f32.mrb[0].mxu0
        %v3896 = vadd.f32 %v3703, %v3895
        %v3897 = vpop.f32.mrb[0].mxu0
        %v3898 = vadd.f32 %v3705, %v3897
        %3899 = vmatprep.mubr.bf16.mxu0 %v1174
        %3900 = vmatmul.mubr.bf16.gmra.mrb[0].mxu0 %v1173
        %v3901 = vpop.f32.mrb[0].mxu0
        %v3902 = vadd.f32 %v3709, %v3901
        %v3903 = vpop.f32.mrb[0].mxu0
        %v3904 = vadd.f32 %v3711, %v3903
        %v3905 = vpop.f32.mrb[0].mxu0
        %v3906 = vadd.f32 %v3713, %v3905
        %v3907 = vpop.f32.mrb[0].mxu0
        %v3908 = vadd.f32 %v3715, %v3907
        %3909 = vmatprep.mubr.bf16.mxu0 %v1182
        %3910 = vmatmul.mubr.bf16.gmra.mrb[0].mxu0 %v1181
        %v3911 = vpop.f32.mrb[0].mxu0
        %v3912 = vadd.f32 %v3719, %v3911
        %v3913 = vpop.f32.mrb[0].mxu0
        %v3914 = vadd.f32 %v3721, %v3913
        %v3915 = vpop.f32.mrb[0].mxu0
        %v3916 = vadd.f32 %v3723, %v3915
        %v3917 = vpop.f32.mrb[0].mxu0
        %v3918 = vadd.f32 %v3725, %v3917
        %3919 = vmatprep.mubr.bf16.mxu0 %v1190
        %3920 = vmatmul.mubr.bf16.gmra.mrb[0].mxu0 %v1189
        %v3921 = vpop.f32.mrb[0].mxu0
        %v3922 = vadd.f32 %v3729, %v3921
        %v3923 = vpop.f32.mrb[0].mxu0
        %v3924 = vadd.f32 %v3731, %v3923
        %v3925 = vpop.f32.mrb[0].mxu0
        %v3926 = vadd.f32 %v3733, %v3925
        %v3927 = vpop.f32.mrb[0].mxu0
        %v3928 = vadd.f32 %v3735, %v3927
        %3929 = vmatprep.mubr.bf16.mxu0 %v1198
        %3930 = vmatmul.mubr.bf16.gmra.mrb[0].mxu0 %v1197
        %v3931 = vpop.f32.mrb[0].mxu0
        %v3932 = vadd.f32 %v3739, %v3931
        %v3933 = vpop.f32.mrb[0].mxu0
        %v3934 = vadd.f32 %v3741, %v3933
        %v3935 = vpop.f32.mrb[0].mxu0
        %v3936 = vadd.f32 %v3743, %v3935
        %v3937 = vpop.f32.mrb[0].mxu0
        %v3938 = vadd.f32 %v3745, %v3937
        %3939 = vmatprep.mubr.bf16.mxu0 %v1206
        %3940 = vmatmul.mubr.bf16.gmra.mrb[0].mxu0 %v1205
        %v3941 = vpop.f32.mrb[0].mxu0
        %v3942 = vadd.f32 %v3749, %v3941
        %v3943 = vpop.f32.mrb[0].mxu0
        %v3944 = vadd.f32 %v3751, %v3943
        %v3945 = vpop.f32.mrb[0].mxu0
        %v3946 = vadd.f32 %v3753, %v3945
        %v3947 = vpop.f32.mrb[0].mxu0
        %v3948 = vadd.f32 %v3755, %v3947
        %3949 = vmatprep.mubr.bf16.mxu0 %v1214
        %3950 = vmatmul.mubr.bf16.gmra.mrb[0].mxu0 %v1213
        %v3951 = vpop.f32.mrb[0].mxu0
        %v3952 = vadd.f32 %v3759, %v3951
        %v3953 = vpop.f32.mrb[0].mxu0
        %v3954 = vadd.f32 %v3761, %v3953
        %v3955 = vpop.f32.mrb[0].mxu0
        %v3956 = vadd.f32 %v3763, %v3955
        %v3957 = vpop.f32.mrb[0].mxu0
        %v3958 = vadd.f32 %v3765, %v3957
        %3959 = vmatprep.mubr.bf16.mxu0 %v1222
        %3960 = vmatmul.mubr.bf16.gmra.mrb[0].mxu0 %v1221
        %v3961 = vpop.f32.mrb[0].mxu0
        %v3962 = vadd.f32 %v3769, %v3961
        %v3963 = vpop.f32.mrb[0].mxu0
        %v3964 = vadd.f32 %v3771, %v3963
        %v3965 = vpop.f32.mrb[0].mxu0
        %v3966 = vadd.f32 %v3773, %v3965
        %v3967 = vpop.f32.mrb[0].mxu0
        %v3968 = vadd.f32 %v3775, %v3967
        %3969 = vmatprep.mubr.bf16.mxu0 %v1230
        %3970 = vmatmul.mubr.bf16.gmra.mrb[0].mxu0 %v1229
        %v3971 = vpop.f32.mrb[0].mxu0
        %v3972 = vadd.f32 %v3779, %v3971
        %v3973 = vpop.f32.mrb[0].mxu0
        %v3974 = vadd.f32 %v3781, %v3973
        %v3975 = vpop.f32.mrb[0].mxu0
        %v3976 = vadd.f32 %v3783, %v3975
        %v3977 = vpop.f32.mrb[0].mxu0
        %v3978 = vadd.f32 %v3785, %v3977
        %3979 = vmatprep.mubr.bf16.mxu0 %v1238
        %3980 = vmatmul.mubr.bf16.gmra.mrb[0].mxu0 %v1237
        %v3981 = vpop.f32.mrb[0].mxu0
        %v3982 = vadd.f32 %v3789, %v3981
        %v3983 = vpop.f32.mrb[0].mxu0
        %v3984 = vadd.f32 %v3791, %v3983
        %v3985 = vpop.f32.mrb[0].mxu0
        %v3986 = vadd.f32 %v3793, %v3985
        %v3987 = vpop.f32.mrb[0].mxu0
        %v3988 = vadd.f32 %v3795, %v3987
        %3989 = vmatprep.mubr.bf16.mxu0 %v1246
        %3990 = vmatmul.mubr.bf16.gmra.mrb[0].mxu0 %v1245
        %v3991 = vpop.f32.mrb[0].mxu0
        %v3992 = vadd.f32 %v3799, %v3991
        %v3993 = vpop.f32.mrb[0].mxu0
        %v3994 = vadd.f32 %v3801, %v3993
        %v3995 = vpop.f32.mrb[0].mxu0
        %v3996 = vadd.f32 %v3803, %v3995
        %v3997 = vpop.f32.mrb[0].mxu0
        %v3998 = vadd.f32 %v3805, %v3997
        %3999 = vmatprep.mubr.bf16.mxu0 %v1254
        %4000 = vmatmul.mubr.bf16.gmra.mrb[0].mxu0 %v1253
        %v4001 = vpop.f32.mrb[0].mxu0
        %v4002 = vadd.f32 %v3809, %v4001
        %v4003 = vpop.f32.mrb[0].mxu0
        %v4004 = vadd.f32 %v3811, %v4003
        %v4005 = vpop.f32.mrb[0].mxu0
        %v4006 = vadd.f32 %v3813, %v4005
        %v4007 = vpop.f32.mrb[0].mxu0
        %v4008 = vadd.f32 %v3815, %v4007
        %4009 = vmatprep.mubr.bf16.mxu0 %v1262
        %4010 = vmatmul.mubr.bf16.gmra.mrb[0].mxu0 %v1261
        %v4011 = vpop.f32.mrb[0].mxu0
        %v4012 = vadd.f32 %v3819, %v4011
        %v4013 = vpop.f32.mrb[0].mxu0
        %v4014 = vadd.f32 %v3821, %v4013
        %v4015 = vpop.f32.mrb[0].mxu0
        %v4016 = vadd.f32 %v3823, %v4015
        %v4017 = vpop.f32.mrb[0].mxu0
        %v4018 = vadd.f32 %v3825, %v4017
        %4019 = vmatprep.mubr.bf16.mxu0 %v1270
        %4020 = vmatmul.mubr.bf16.gmra.mrb[0].mxu0 %v1269
        %v4021 = vpop.f32.mrb[0].mxu0
        %v4022 = vadd.f32 %v3829, %v4021
        %v4023 = vpop.f32.mrb[0].mxu0
        %v4024 = vadd.f32 %v3831, %v4023
        %v4025 = vpop.f32.mrb[0].mxu0
        %v4026 = vadd.f32 %v3833, %v4025
        %v4027 = vpop.f32.mrb[0].mxu0
        %v4028 = vadd.f32 %v3835, %v4027
        %4029 = vmatprep.mubr.bf16.mxu0 %v1278
        %4030 = vmatmul.mubr.bf16.gmra.mrb[0].mxu0 %v1277
        %v4031 = vpop.f32.mrb[0].mxu0
        %v4032 = vadd.f32 %v3839, %v4031
        %v4033 = vpop.f32.mrb[0].mxu0
        %v4034 = vadd.f32 %v3841, %v4033
        %v4035 = vpop.f32.mrb[0].mxu0
        %v4036 = vadd.f32 %v3843, %v4035
        %v4037 = vpop.f32.mrb[0].mxu0
        %v4038 = vadd.f32 %v3845, %v4037
        %4039 = vdwg.mxu0
        %4040 = vmatprep.subr.bf16.mxu0 %v2372
        %4041 = vmatpush1.bf16.msra.mxu0 %v2371
        %4042 = vmatprep.subr.bf16.mxu0 %v2376
        %4043 = vmatpush1.bf16.msra.mxu0 %v2375
        %4044 = vmatprep.subr.bf16.mxu0 %v2380
        %4045 = vmatpush1.bf16.msra.mxu0 %v2379
        %4046 = vmatprep.subr.bf16.mxu0 %v2384
        %4047 = vmatpush1.bf16.msra.mxu0 %v2383
        %4048 = vmatprep.subr.bf16.mxu0 %v2388
        %4049 = vmatpush1.bf16.msra.mxu0 %v2387
        %4050 = vmatprep.subr.bf16.mxu0 %v2392
        %4051 = vmatpush1.bf16.msra.mxu0 %v2391
        %4052 = vmatprep.subr.bf16.mxu0 %v2396
        %4053 = vmatpush1.bf16.msra.mxu0 %v2395
        %4054 = vmatprep.subr.bf16.mxu0 %v2400
        %4055 = vmatpush1.bf16.msra.mxu0 %v2399
        %4056 = vmatprep.subr.bf16.mxu0 %v2404
        %4057 = vmatpush1.bf16.msra.mxu0 %v2403
        %4058 = vmatprep.subr.bf16.mxu0 %v2408
        %4059 = vmatpush1.bf16.msra.mxu0 %v2407
        %4060 = vmatprep.subr.bf16.mxu0 %v2412
        %4061 = vmatpush1.bf16.msra.mxu0 %v2411
        %4062 = vmatprep.subr.bf16.mxu0 %v2416
        %4063 = vmatpush1.bf16.msra.mxu0 %v2415
        %4064 = vmatprep.subr.bf16.mxu0 %v2420
        %4065 = vmatpush1.bf16.msra.mxu0 %v2419
        %4066 = vmatprep.subr.bf16.mxu0 %v2424
        %4067 = vmatpush1.bf16.msra.mxu0 %v2423
        %4068 = vmatprep.subr.bf16.mxu0 %v2428
        %4069 = vmatpush1.bf16.msra.mxu0 %v2427
        %4070 = vmatprep.subr.bf16.mxu0 %v2432
        %4071 = vmatpush1.bf16.msra.mxu0 %v2431
        %4072 = vmatprep.mubr.bf16.mxu0 %v1160
        %4073 = vmatmul.mubr.bf16.gmra.mrb[0].mxu0 %v1159
        %v4074 = vpop.f32.mrb[0].mxu0
        %v4075 = vadd.f32 %v3882, %v4074
        %v4076 = vpop.f32.mrb[0].mxu0
        %v4077 = vadd.f32 %v3884, %v4076
        %v4078 = vpop.f32.mrb[0].mxu0
        %v4079 = vadd.f32 %v3886, %v4078
        %v4080 = vpop.f32.mrb[0].mxu0
        %v4081 = vadd.f32 %v3888, %v4080
        %4082 = vmatprep.mubr.bf16.mxu0 %v1168
        %4083 = vmatmul.mubr.bf16.gmra.mrb[0].mxu0 %v1167
        %v4084 = vpop.f32.mrb[0].mxu0
        %v4085 = vadd.f32 %v3892, %v4084
        %v4086 = vpop.f32.mrb[0].mxu0
        %v4087 = vadd.f32 %v3894, %v4086
        %v4088 = vpop.f32.mrb[0].mxu0
        %v4089 = vadd.f32 %v3896, %v4088
        %v4090 = vpop.f32.mrb[0].mxu0
        %v4091 = vadd.f32 %v3898, %v4090
        %4092 = vmatprep.mubr.bf16.mxu0 %v1176
        %4093 = vmatmul.mubr.bf16.gmra.mrb[0].mxu0 %v1175
        %v4094 = vpop.f32.mrb[0].mxu0
        %v4095 = vadd.f32 %v3902, %v4094
        %v4096 = vpop.f32.mrb[0].mxu0
        %v4097 = vadd.f32 %v3904, %v4096
        %v4098 = vpop.f32.mrb[0].mxu0
        %v4099 = vadd.f32 %v3906, %v4098
        %v4100 = vpop.f32.mrb[0].mxu0
        %v4101 = vadd.f32 %v3908, %v4100
        %4102 = vmatprep.mubr.bf16.mxu0 %v1184
        %4103 = vmatmul.mubr.bf16.gmra.mrb[0].mxu0 %v1183
        %v4104 = vpop.f32.mrb[0].mxu0
        %v4105 = vadd.f32 %v3912, %v4104
        %v4106 = vpop.f32.mrb[0].mxu0
        %v4107 = vadd.f32 %v3914, %v4106
        %v4108 = vpop.f32.mrb[0].mxu0
        %v4109 = vadd.f32 %v3916, %v4108
        %v4110 = vpop.f32.mrb[0].mxu0
        %v4111 = vadd.f32 %v3918, %v4110
        %4112 = vmatprep.mubr.bf16.mxu0 %v1192
        %4113 = vmatmul.mubr.bf16.gmra.mrb[0].mxu0 %v1191
        %v4114 = vpop.f32.mrb[0].mxu0
        %v4115 = vadd.f32 %v3922, %v4114
        %v4116 = vpop.f32.mrb[0].mxu0
        %v4117 = vadd.f32 %v3924, %v4116
        %v4118 = vpop.f32.mrb[0].mxu0
        %v4119 = vadd.f32 %v3926, %v4118
        %v4120 = vpop.f32.mrb[0].mxu0
        %v4121 = vadd.f32 %v3928, %v4120
        %4122 = vmatprep.mubr.bf16.mxu0 %v1200
        %4123 = vmatmul.mubr.bf16.gmra.mrb[0].mxu0 %v1199
        %v4124 = vpop.f32.mrb[0].mxu0
        %v4125 = vadd.f32 %v3932, %v4124
        %v4126 = vpop.f32.mrb[0].mxu0
        %v4127 = vadd.f32 %v3934, %v4126
        %v4128 = vpop.f32.mrb[0].mxu0
        %v4129 = vadd.f32 %v3936, %v4128
        %v4130 = vpop.f32.mrb[0].mxu0
        %v4131 = vadd.f32 %v3938, %v4130
        %4132 = vmatprep.mubr.bf16.mxu0 %v1208
        %4133 = vmatmul.mubr.bf16.gmra.mrb[0].mxu0 %v1207
        %v4134 = vpop.f32.mrb[0].mxu0
        %v4135 = vadd.f32 %v3942, %v4134
        %v4136 = vpop.f32.mrb[0].mxu0
        %v4137 = vadd.f32 %v3944, %v4136
        %v4138 = vpop.f32.mrb[0].mxu0
        %v4139 = vadd.f32 %v3946, %v4138
        %v4140 = vpop.f32.mrb[0].mxu0
        %v4141 = vadd.f32 %v3948, %v4140
        %4142 = vmatprep.mubr.bf16.mxu0 %v1216
        %4143 = vmatmul.mubr.bf16.gmra.mrb[0].mxu0 %v1215
        %v4144 = vpop.f32.mrb[0].mxu0
        %v4145 = vadd.f32 %v3952, %v4144
        %v4146 = vpop.f32.mrb[0].mxu0
        %v4147 = vadd.f32 %v3954, %v4146
        %v4148 = vpop.f32.mrb[0].mxu0
        %v4149 = vadd.f32 %v3956, %v4148
        %v4150 = vpop.f32.mrb[0].mxu0
        %v4151 = vadd.f32 %v3958, %v4150
        %4152 = vmatprep.mubr.bf16.mxu0 %v1224
        %4153 = vmatmul.mubr.bf16.gmra.mrb[0].mxu0 %v1223
        %v4154 = vpop.f32.mrb[0].mxu0
        %v4155 = vadd.f32 %v3962, %v4154
        %v4156 = vpop.f32.mrb[0].mxu0
        %v4157 = vadd.f32 %v3964, %v4156
        %v4158 = vpop.f32.mrb[0].mxu0
        %v4159 = vadd.f32 %v3966, %v4158
        %v4160 = vpop.f32.mrb[0].mxu0
        %v4161 = vadd.f32 %v3968, %v4160
        %4162 = vmatprep.mubr.bf16.mxu0 %v1232
        %4163 = vmatmul.mubr.bf16.gmra.mrb[0].mxu0 %v1231
        %v4164 = vpop.f32.mrb[0].mxu0
        %v4165 = vadd.f32 %v3972, %v4164
        %v4166 = vpop.f32.mrb[0].mxu0
        %v4167 = vadd.f32 %v3974, %v4166
        %v4168 = vpop.f32.mrb[0].mxu0
        %v4169 = vadd.f32 %v3976, %v4168
        %v4170 = vpop.f32.mrb[0].mxu0
        %v4171 = vadd.f32 %v3978, %v4170
        %4172 = vmatprep.mubr.bf16.mxu0 %v1240
        %4173 = vmatmul.mubr.bf16.gmra.mrb[0].mxu0 %v1239
        %v4174 = vpop.f32.mrb[0].mxu0
        %v4175 = vadd.f32 %v3982, %v4174
        %v4176 = vpop.f32.mrb[0].mxu0
        %v4177 = vadd.f32 %v3984, %v4176
        %v4178 = vpop.f32.mrb[0].mxu0
        %v4179 = vadd.f32 %v3986, %v4178
        %v4180 = vpop.f32.mrb[0].mxu0
        %v4181 = vadd.f32 %v3988, %v4180
        %4182 = vmatprep.mubr.bf16.mxu0 %v1248
        %4183 = vmatmul.mubr.bf16.gmra.mrb[0].mxu0 %v1247
        %v4184 = vpop.f32.mrb[0].mxu0
        %v4185 = vadd.f32 %v3992, %v4184
        %v4186 = vpop.f32.mrb[0].mxu0
        %v4187 = vadd.f32 %v3994, %v4186
        %v4188 = vpop.f32.mrb[0].mxu0
        %v4189 = vadd.f32 %v3996, %v4188
        %v4190 = vpop.f32.mrb[0].mxu0
        %v4191 = vadd.f32 %v3998, %v4190
        %4192 = vmatprep.mubr.bf16.mxu0 %v1256
        %4193 = vmatmul.mubr.bf16.gmra.mrb[0].mxu0 %v1255
        %v4194 = vpop.f32.mrb[0].mxu0
        %v4195 = vadd.f32 %v4002, %v4194
        %v4196 = vpop.f32.mrb[0].mxu0
        %v4197 = vadd.f32 %v4004, %v4196
        %v4198 = vpop.f32.mrb[0].mxu0
        %v4199 = vadd.f32 %v4006, %v4198
        %v4200 = vpop.f32.mrb[0].mxu0
        %v4201 = vadd.f32 %v4008, %v4200
        %4202 = vmatprep.mubr.bf16.mxu0 %v1264
        %4203 = vmatmul.mubr.bf16.gmra.mrb[0].mxu0 %v1263
        %v4204 = vpop.f32.mrb[0].mxu0
        %v4205 = vadd.f32 %v4012, %v4204
        %v4206 = vpop.f32.mrb[0].mxu0
        %v4207 = vadd.f32 %v4014, %v4206
        %v4208 = vpop.f32.mrb[0].mxu0
        %v4209 = vadd.f32 %v4016, %v4208
        %v4210 = vpop.f32.mrb[0].mxu0
        %v4211 = vadd.f32 %v4018, %v4210
        %4212 = vmatprep.mubr.bf16.mxu0 %v1272
        %4213 = vmatmul.mubr.bf16.gmra.mrb[0].mxu0 %v1271
        %v4214 = vpop.f32.mrb[0].mxu0
        %v4215 = vadd.f32 %v4022, %v4214
        %v4216 = vpop.f32.mrb[0].mxu0
        %v4217 = vadd.f32 %v4024, %v4216
        %v4218 = vpop.f32.mrb[0].mxu0
        %v4219 = vadd.f32 %v4026, %v4218
        %v4220 = vpop.f32.mrb[0].mxu0
        %v4221 = vadd.f32 %v4028, %v4220
        %4222 = vmatprep.mubr.bf16.mxu0 %v1280
        %4223 = vmatmul.mubr.bf16.gmra.mrb[0].mxu0 %v1279
        %v4224 = vpop.f32.mrb[0].mxu0
        %v4225 = vadd.f32 %v4032, %v4224
        %v4226 = vpop.f32.mrb[0].mxu0
        %v4227 = vadd.f32 %v4034, %v4226
        %v4228 = vpop.f32.mrb[0].mxu0
        %v4229 = vadd.f32 %v4036, %v4228
        %v4230 = vpop.f32.mrb[0].mxu0
        %v4231 = vadd.f32 %v4038, %v4230
        %4232 = vdwg.mxu0
        %v4233 = vmax.f32 %v3303, 0.0
        %v4234 = vmax.f32 %v3305, 0.0
        %v4235 = vmax.f32 %v4075, 0.0
        %v4236 = vmax.f32 %v4077, 0.0
        %v4237 = vmax.f32 %v3307, 0.0
        %v4238 = vmax.f32 %v3309, 0.0
        %v4239 = vmax.f32 %v4079, 0.0
        %v4240 = vmax.f32 %v4081, 0.0
        %v4241 = vmax.f32 %v3313, 0.0
        %v4242 = vmax.f32 %v3315, 0.0
        %v4243 = vmax.f32 %v4085, 0.0
        %v4244 = vmax.f32 %v4087, 0.0
        %v4245 = vmax.f32 %v3317, 0.0
        %v4246 = vmax.f32 %v3319, 0.0
        %v4247 = vmax.f32 %v4089, 0.0
        %v4248 = vmax.f32 %v4091, 0.0
        %v4249 = vmax.f32 %v3323, 0.0
        %v4250 = vmax.f32 %v3325, 0.0
        %v4251 = vmax.f32 %v4095, 0.0
        %v4252 = vmax.f32 %v4097, 0.0
        %v4253 = vmax.f32 %v3327, 0.0
        %v4254 = vmax.f32 %v3329, 0.0
        %v4255 = vmax.f32 %v4099, 0.0
        %v4256 = vmax.f32 %v4101, 0.0
        %v4257 = vmax.f32 %v3333, 0.0
        %v4258 = vmax.f32 %v3335, 0.0
        %v4259 = vmax.f32 %v4105, 0.0
        %v4260 = vmax.f32 %v4107, 0.0
        %v4261 = vmax.f32 %v3337, 0.0
        %v4262 = vmax.f32 %v3339, 0.0
        %v4263 = vmax.f32 %v4109, 0.0
        %v4264 = vmax.f32 %v4111, 0.0
        %v4265 = vmax.f32 %v3343, 0.0
        %v4266 = vmax.f32 %v3345, 0.0
        %v4267 = vmax.f32 %v4115, 0.0
        %v4268 = vmax.f32 %v4117, 0.0
        %v4269 = vmax.f32 %v3347, 0.0
        %v4270 = vmax.f32 %v3349, 0.0
        %v4271 = vmax.f32 %v4119, 0.0
        %v4272 = vmax.f32 %v4121, 0.0
        %v4273 = vmax.f32 %v3353, 0.0
        %v4274 = vmax.f32 %v3355, 0.0
        %v4275 = vmax.f32 %v4125, 0.0
        %v4276 = vmax.f32 %v4127, 0.0
        %v4277 = vmax.f32 %v3357, 0.0
        %v4278 = vmax.f32 %v3359, 0.0
        %v4279 = vmax.f32 %v4129, 0.0
        %v4280 = vmax.f32 %v4131, 0.0
        %v4281 = vmax.f32 %v3363, 0.0
        %v4282 = vmax.f32 %v3365, 0.0
        %v4283 = vmax.f32 %v4135, 0.0
        %v4284 = vmax.f32 %v4137, 0.0
        %v4285 = vmax.f32 %v3367, 0.0
        %v4286 = vmax.f32 %v3369, 0.0
        %v4287 = vmax.f32 %v4139, 0.0
        %v4288 = vmax.f32 %v4141, 0.0
        %v4289 = vmax.f32 %v3373, 0.0
        %v4290 = vmax.f32 %v3375, 0.0
        %v4291 = vmax.f32 %v4145, 0.0
        %v4292 = vmax.f32 %v4147, 0.0
        %v4293 = vmax.f32 %v3377, 0.0
        %v4294 = vmax.f32 %v3379, 0.0
        %v4295 = vmax.f32 %v4149, 0.0
        %v4296 = vmax.f32 %v4151, 0.0
        %v4297 = vmax.f32 %v3383, 0.0
        %v4298 = vmax.f32 %v3385, 0.0
        %v4299 = vmax.f32 %v4155, 0.0
        %v4300 = vmax.f32 %v4157, 0.0
        %v4301 = vmax.f32 %v3387, 0.0
        %v4302 = vmax.f32 %v3389, 0.0
        %v4303 = vmax.f32 %v4159, 0.0
        %v4304 = vmax.f32 %v4161, 0.0
        %v4305 = vmax.f32 %v3393, 0.0
        %v4306 = vmax.f32 %v3395, 0.0
        %v4307 = vmax.f32 %v4165, 0.0
        %v4308 = vmax.f32 %v4167, 0.0
        %v4309 = vmax.f32 %v3397, 0.0
        %v4310 = vmax.f32 %v3399, 0.0
        %v4311 = vmax.f32 %v4169, 0.0
        %v4312 = vmax.f32 %v4171, 0.0
        %v4313 = vmax.f32 %v3403, 0.0
        %v4314 = vmax.f32 %v3405, 0.0
        %v4315 = vmax.f32 %v4175, 0.0
        %v4316 = vmax.f32 %v4177, 0.0
        %v4317 = vmax.f32 %v3407, 0.0
        %v4318 = vmax.f32 %v3409, 0.0
        %v4319 = vmax.f32 %v4179, 0.0
        %v4320 = vmax.f32 %v4181, 0.0
        %v4321 = vmax.f32 %v3413, 0.0
        %v4322 = vmax.f32 %v3415, 0.0
        %v4323 = vmax.f32 %v4185, 0.0
        %v4324 = vmax.f32 %v4187, 0.0
        %v4325 = vmax.f32 %v3417, 0.0
        %v4326 = vmax.f32 %v3419, 0.0
        %v4327 = vmax.f32 %v4189, 0.0
        %v4328 = vmax.f32 %v4191, 0.0
        %v4329 = vmax.f32 %v3423, 0.0
        %v4330 = vmax.f32 %v3425, 0.0
        %v4331 = vmax.f32 %v4195, 0.0
        %v4332 = vmax.f32 %v4197, 0.0
        %v4333 = vmax.f32 %v3427, 0.0
        %v4334 = vmax.f32 %v3429, 0.0
        %v4335 = vmax.f32 %v4199, 0.0
        %v4336 = vmax.f32 %v4201, 0.0
        %v4337 = vmax.f32 %v3433, 0.0
        %v4338 = vmax.f32 %v3435, 0.0
        %v4339 = vmax.f32 %v4205, 0.0
        %v4340 = vmax.f32 %v4207, 0.0
        %v4341 = vmax.f32 %v3437, 0.0
        %v4342 = vmax.f32 %v3439, 0.0
        %v4343 = vmax.f32 %v4209, 0.0
        %v4344 = vmax.f32 %v4211, 0.0
        %v4345 = vmax.f32 %v3443, 0.0
        %v4346 = vmax.f32 %v3445, 0.0
        %v4347 = vmax.f32 %v4215, 0.0
        %v4348 = vmax.f32 %v4217, 0.0
        %v4349 = vmax.f32 %v3447, 0.0
        %v4350 = vmax.f32 %v3449, 0.0
        %v4351 = vmax.f32 %v4219, 0.0
        %v4352 = vmax.f32 %v4221, 0.0
        %v4353 = vmax.f32 %v3453, 0.0
        %v4354 = vmax.f32 %v3455, 0.0
        %v4355 = vmax.f32 %v4225, 0.0
        %v4356 = vmax.f32 %v4227, 0.0
        %v4357 = vmax.f32 %v3457, 0.0
        %v4358 = vmax.f32 %v3459, 0.0
        %v4359 = vmax.f32 %v4229, 0.0
        %v4360 = vmax.f32 %v4231, 0.0
        %v4361 = vpack.c.bf16 %v4237, %v4233
        %v4362 = vpack.c.bf16 %v4238, %v4234
        %v4363 = vpack.c.bf16 %v4239, %v4235
        %v4364 = vpack.c.bf16 %v4240, %v4236
        %v4365 = vpack.c.bf16 %v4245, %v4241
        %v4366 = vpack.c.bf16 %v4246, %v4242
        %v4367 = vpack.c.bf16 %v4247, %v4243
        %v4368 = vpack.c.bf16 %v4248, %v4244
        %v4369 = vpack.c.bf16 %v4253, %v4249
        %v4370 = vpack.c.bf16 %v4254, %v4250
        %v4371 = vpack.c.bf16 %v4255, %v4251
        %v4372 = vpack.c.bf16 %v4256, %v4252
        %v4373 = vpack.c.bf16 %v4261, %v4257
        %v4374 = vpack.c.bf16 %v4262, %v4258
        %v4375 = vpack.c.bf16 %v4263, %v4259
        %v4376 = vpack.c.bf16 %v4264, %v4260
        %v4377 = vpack.c.bf16 %v4269, %v4265
        %v4378 = vpack.c.bf16 %v4270, %v4266
        %v4379 = vpack.c.bf16 %v4271, %v4267
        %v4380 = vpack.c.bf16 %v4272, %v4268
        %v4381 = vpack.c.bf16 %v4277, %v4273
        %v4382 = vpack.c.bf16 %v4278, %v4274
        %v4383 = vpack.c.bf16 %v4279, %v4275
        %v4384 = vpack.c.bf16 %v4280, %v4276
        %v4385 = vpack.c.bf16 %v4285, %v4281
        %v4386 = vpack.c.bf16 %v4286, %v4282
        %v4387 = vpack.c.bf16 %v4287, %v4283
        %v4388 = vpack.c.bf16 %v4288, %v4284
        %v4389 = vpack.c.bf16 %v4293, %v4289
        %v4390 = vpack.c.bf16 %v4294, %v4290
        %v4391 = vpack.c.bf16 %v4295, %v4291
        %v4392 = vpack.c.bf16 %v4296, %v4292
        %v4393 = vpack.c.bf16 %v4301, %v4297
        %v4394 = vpack.c.bf16 %v4302, %v4298
        %v4395 = vpack.c.bf16 %v4303, %v4299
        %v4396 = vpack.c.bf16 %v4304, %v4300
        %v4397 = vpack.c.bf16 %v4309, %v4305
        %v4398 = vpack.c.bf16 %v4310, %v4306
        %v4399 = vpack.c.bf16 %v4311, %v4307
        %v4400 = vpack.c.bf16 %v4312, %v4308
        %v4401 = vpack.c.bf16 %v4317, %v4313
        %v4402 = vpack.c.bf16 %v4318, %v4314
        %v4403 = vpack.c.bf16 %v4319, %v4315
        %v4404 = vpack.c.bf16 %v4320, %v4316
        %v4405 = vpack.c.bf16 %v4325, %v4321
        %v4406 = vpack.c.bf16 %v4326, %v4322
        %v4407 = vpack.c.bf16 %v4327, %v4323
        %v4408 = vpack.c.bf16 %v4328, %v4324
        %v4409 = vpack.c.bf16 %v4333, %v4329
        %v4410 = vpack.c.bf16 %v4334, %v4330
        %v4411 = vpack.c.bf16 %v4335, %v4331
        %v4412 = vpack.c.bf16 %v4336, %v4332
        %v4413 = vpack.c.bf16 %v4341, %v4337
        %v4414 = vpack.c.bf16 %v4342, %v4338
        %v4415 = vpack.c.bf16 %v4343, %v4339
        %v4416 = vpack.c.bf16 %v4344, %v4340
        %v4417 = vpack.c.bf16 %v4349, %v4345
        %v4418 = vpack.c.bf16 %v4350, %v4346
        %v4419 = vpack.c.bf16 %v4351, %v4347
        %v4420 = vpack.c.bf16 %v4352, %v4348
        %v4421 = vpack.c.bf16 %v4357, %v4353
        %v4422 = vpack.c.bf16 %v4358, %v4354
        %v4423 = vpack.c.bf16 %v4359, %v4355
        %v4424 = vpack.c.bf16 %v4360, %v4356
        %v4425 = vld [vmem:[#allocation7] sm:$0xff]
        %v4426 = vld [vmem:[#allocation7 + $0x8] sm:$0xff]
        %v4427 = vld [vmem:[#allocation7 + $0x10] sm:$0xff]
        %v4428 = vld [vmem:[#allocation7 + $0x18] sm:$0xff]
        %v4429 = vld [vmem:[#allocation7 + $0x20] sm:$0xff]
        %v4430 = vld [vmem:[#allocation7 + $0x28] sm:$0xff]
        %v4431 = vld [vmem:[#allocation7 + $0x30] sm:$0xff]
        %v4432 = vld [vmem:[#allocation7 + $0x38] sm:$0xff]
        %v4433 = vld [vmem:[#allocation7 + $0x40] sm:$0xff]
        %v4434 = vld [vmem:[#allocation7 + $0x48] sm:$0xff]
        %v4435 = vld [vmem:[#allocation7 + $0x50] sm:$0xff]
        %v4436 = vld [vmem:[#allocation7 + $0x58] sm:$0xff]
        %v4437 = vld [vmem:[#allocation7 + $0x60] sm:$0xff]
        %v4438 = vld [vmem:[#allocation7 + $0x68] sm:$0xff]
        %v4439 = vld [vmem:[#allocation7 + $0x70] sm:$0xff]
        %v4440 = vld [vmem:[#allocation7 + $0x78] sm:$0xff]
        %v4441 = vld [vmem:[#allocation7 + $0x80] sm:$0xff]
        %v4442 = vld [vmem:[#allocation7 + $0x88] sm:$0xff]
        %v4443 = vld [vmem:[#allocation7 + $0x90] sm:$0xff]
        %v4444 = vld [vmem:[#allocation7 + $0x98] sm:$0xff]
        %v4445 = vld [vmem:[#allocation7 + $0xa0] sm:$0xff]
        %v4446 = vld [vmem:[#allocation7 + $0xa8] sm:$0xff]
        %v4447 = vld [vmem:[#allocation7 + $0xb0] sm:$0xff]
        %v4448 = vld [vmem:[#allocation7 + $0xb8] sm:$0xff]
        %v4449 = vld [vmem:[#allocation7 + $0xc0] sm:$0xff]
        %v4450 = vld [vmem:[#allocation7 + $0xc8] sm:$0xff]
        %v4451 = vld [vmem:[#allocation7 + $0xd0] sm:$0xff]
        %v4452 = vld [vmem:[#allocation7 + $0xd8] sm:$0xff]
        %v4453 = vld [vmem:[#allocation7 + $0xe0] sm:$0xff]
        %v4454 = vld [vmem:[#allocation7 + $0xe8] sm:$0xff]
        %v4455 = vld [vmem:[#allocation7 + $0xf0] sm:$0xff]
        %v4456 = vld [vmem:[#allocation7 + $0xf8] sm:$0xff]
        %v4457 = vld [vmem:[#allocation7 + $0x100] sm:$0xff]
        %v4458 = vld [vmem:[#allocation7 + $0x108] sm:$0xff]
        %v4459 = vld [vmem:[#allocation7 + $0x110] sm:$0xff]
        %v4460 = vld [vmem:[#allocation7 + $0x118] sm:$0xff]
        %v4461 = vld [vmem:[#allocation7 + $0x120] sm:$0xff]
        %v4462 = vld [vmem:[#allocation7 + $0x128] sm:$0xff]
        %v4463 = vld [vmem:[#allocation7 + $0x130] sm:$0xff]
        %v4464 = vld [vmem:[#allocation7 + $0x138] sm:$0xff]
        %v4465 = vld [vmem:[#allocation7 + $0x140] sm:$0xff]
        %v4466 = vld [vmem:[#allocation7 + $0x148] sm:$0xff]
        %v4467 = vld [vmem:[#allocation7 + $0x150] sm:$0xff]
        %v4468 = vld [vmem:[#allocation7 + $0x158] sm:$0xff]
        %v4469 = vld [vmem:[#allocation7 + $0x160] sm:$0xff]
        %v4470 = vld [vmem:[#allocation7 + $0x168] sm:$0xff]
        %v4471 = vld [vmem:[#allocation7 + $0x170] sm:$0xff]
        %v4472 = vld [vmem:[#allocation7 + $0x178] sm:$0xff]
        %v4473 = vld [vmem:[#allocation7 + $0x180] sm:$0xff]
        %v4474 = vld [vmem:[#allocation7 + $0x188] sm:$0xff]
        %v4475 = vld [vmem:[#allocation7 + $0x190] sm:$0xff]
        %v4476 = vld [vmem:[#allocation7 + $0x198] sm:$0xff]
        %v4477 = vld [vmem:[#allocation7 + $0x1a0] sm:$0xff]
        %v4478 = vld [vmem:[#allocation7 + $0x1a8] sm:$0xff]
        %v4479 = vld [vmem:[#allocation7 + $0x1b0] sm:$0xff]
        %v4480 = vld [vmem:[#allocation7 + $0x1b8] sm:$0xff]
        %v4481 = vld [vmem:[#allocation7 + $0x1c0] sm:$0xff]
        %v4482 = vld [vmem:[#allocation7 + $0x1c8] sm:$0xff]
        %v4483 = vld [vmem:[#allocation7 + $0x1d0] sm:$0xff]
        %v4484 = vld [vmem:[#allocation7 + $0x1d8] sm:$0xff]
        %v4485 = vld [vmem:[#allocation7 + $0x1e0] sm:$0xff]
        %v4486 = vld [vmem:[#allocation7 + $0x1e8] sm:$0xff]
        %v4487 = vld [vmem:[#allocation7 + $0x1f0] sm:$0xff]
        %v4488 = vld [vmem:[#allocation7 + $0x1f8] sm:$0xff]
        %v4489 = vld [vmem:[%s4] sm:$0x3]
        %v4491 = vlaneseq
        %v4492 = vshrl.u32 %v4491, 7
        %v4493 = vsub.s32 0, %v4492
        %v4494 = vrot.slane %v4489, %v4493
        %v4495 = vlaneseq
        %v4496 = vshrl.u32 %v4495, 7
        %v4497 = vsub.s32 1, %v4496
        %v4498 = vrot.slane %v4489, %v4497
        %v4565 = vunpack.c.l.b16 %v4425
        %v4566 = vunpack.c.h.b16 %v4425
        %v4567 = vunpack.c.l.b16 %v4426
        %v4568 = vunpack.c.h.b16 %v4426
        %v4569 = vunpack.c.l.b16 %v4427
        %v4570 = vunpack.c.h.b16 %v4427
        %v4571 = vunpack.c.l.b16 %v4428
        %v4572 = vunpack.c.h.b16 %v4428
        %v4573 = vunpack.c.l.b16 %v4429
        %v4574 = vunpack.c.h.b16 %v4429
        %v4575 = vunpack.c.l.b16 %v4430
        %v4576 = vunpack.c.h.b16 %v4430
        %v4577 = vunpack.c.l.b16 %v4431
        %v4578 = vunpack.c.h.b16 %v4431
        %v4579 = vunpack.c.l.b16 %v4432
        %v4580 = vunpack.c.h.b16 %v4432
        %v4581 = vunpack.c.l.b16 %v4433
        %v4582 = vunpack.c.h.b16 %v4433
        %v4583 = vunpack.c.l.b16 %v4434
        %v4584 = vunpack.c.h.b16 %v4434
        %v4585 = vunpack.c.l.b16 %v4435
        %v4586 = vunpack.c.h.b16 %v4435
        %v4587 = vunpack.c.l.b16 %v4436
        %v4588 = vunpack.c.h.b16 %v4436
        %v4589 = vunpack.c.l.b16 %v4437
        %v4590 = vunpack.c.h.b16 %v4437
        %v4591 = vunpack.c.l.b16 %v4438
        %v4592 = vunpack.c.h.b16 %v4438
        %v4593 = vunpack.c.l.b16 %v4439
        %v4594 = vunpack.c.h.b16 %v4439
        %v4595 = vunpack.c.l.b16 %v4440
        %v4596 = vunpack.c.h.b16 %v4440
        %v4597 = vunpack.c.l.b16 %v4441
        %v4598 = vunpack.c.h.b16 %v4441
        %v4599 = vunpack.c.l.b16 %v4442
        %v4600 = vunpack.c.h.b16 %v4442
        %v4601 = vunpack.c.l.b16 %v4443
        %v4602 = vunpack.c.h.b16 %v4443
        %v4603 = vunpack.c.l.b16 %v4444
        %v4604 = vunpack.c.h.b16 %v4444
        %v4605 = vunpack.c.l.b16 %v4445
        %v4606 = vunpack.c.h.b16 %v4445
        %v4607 = vunpack.c.l.b16 %v4446
        %v4608 = vunpack.c.h.b16 %v4446
        %v4609 = vunpack.c.l.b16 %v4447
        %v4610 = vunpack.c.h.b16 %v4447
        %v4611 = vunpack.c.l.b16 %v4448
        %v4612 = vunpack.c.h.b16 %v4448
        %v4613 = vunpack.c.l.b16 %v4449
        %v4614 = vunpack.c.h.b16 %v4449
        %v4615 = vunpack.c.l.b16 %v4450
        %v4616 = vunpack.c.h.b16 %v4450
        %v4617 = vunpack.c.l.b16 %v4451
        %v4618 = vunpack.c.h.b16 %v4451
        %v4619 = vunpack.c.l.b16 %v4452
        %v4620 = vunpack.c.h.b16 %v4452
        %v4621 = vunpack.c.l.b16 %v4453
        %v4622 = vunpack.c.h.b16 %v4453
        %v4623 = vunpack.c.l.b16 %v4454
        %v4624 = vunpack.c.h.b16 %v4454
        %v4625 = vunpack.c.l.b16 %v4455
        %v4626 = vunpack.c.h.b16 %v4455
        %v4627 = vunpack.c.l.b16 %v4456
        %v4628 = vunpack.c.h.b16 %v4456
        %v4629 = vunpack.c.l.b16 %v4457
        %v4630 = vunpack.c.h.b16 %v4457
        %v4631 = vunpack.c.l.b16 %v4458
        %v4632 = vunpack.c.h.b16 %v4458
        %v4633 = vunpack.c.l.b16 %v4459
        %v4634 = vunpack.c.h.b16 %v4459
        %v4635 = vunpack.c.l.b16 %v4460
        %v4636 = vunpack.c.h.b16 %v4460
        %v4637 = vunpack.c.l.b16 %v4461
        %v4638 = vunpack.c.h.b16 %v4461
        %v4639 = vunpack.c.l.b16 %v4462
        %v4640 = vunpack.c.h.b16 %v4462
        %v4641 = vunpack.c.l.b16 %v4463
        %v4642 = vunpack.c.h.b16 %v4463
        %v4643 = vunpack.c.l.b16 %v4464
        %v4644 = vunpack.c.h.b16 %v4464
        %v4645 = vunpack.c.l.b16 %v4465
        %v4646 = vunpack.c.h.b16 %v4465
        %v4647 = vunpack.c.l.b16 %v4466
        %v4648 = vunpack.c.h.b16 %v4466
        %v4649 = vunpack.c.l.b16 %v4467
        %v4650 = vunpack.c.h.b16 %v4467
        %v4651 = vunpack.c.l.b16 %v4468
        %v4652 = vunpack.c.h.b16 %v4468
        %v4653 = vunpack.c.l.b16 %v4469
        %v4654 = vunpack.c.h.b16 %v4469
        %v4655 = vunpack.c.l.b16 %v4470
        %v4656 = vunpack.c.h.b16 %v4470
        %v4657 = vunpack.c.l.b16 %v4471
        %v4658 = vunpack.c.h.b16 %v4471
        %v4659 = vunpack.c.l.b16 %v4472
        %v4660 = vunpack.c.h.b16 %v4472
        %v4661 = vunpack.c.l.b16 %v4473
        %v4662 = vunpack.c.h.b16 %v4473
        %v4663 = vunpack.c.l.b16 %v4474
        %v4664 = vunpack.c.h.b16 %v4474
        %v4665 = vunpack.c.l.b16 %v4475
        %v4666 = vunpack.c.h.b16 %v4475
        %v4667 = vunpack.c.l.b16 %v4476
        %v4668 = vunpack.c.h.b16 %v4476
        %v4669 = vunpack.c.l.b16 %v4477
        %v4670 = vunpack.c.h.b16 %v4477
        %v4671 = vunpack.c.l.b16 %v4478
        %v4672 = vunpack.c.h.b16 %v4478
        %v4673 = vunpack.c.l.b16 %v4479
        %v4674 = vunpack.c.h.b16 %v4479
        %v4675 = vunpack.c.l.b16 %v4480
        %v4676 = vunpack.c.h.b16 %v4480
        %v4677 = vunpack.c.l.b16 %v4481
        %v4678 = vunpack.c.h.b16 %v4481
        %v4679 = vunpack.c.l.b16 %v4482
        %v4680 = vunpack.c.h.b16 %v4482
        %v4681 = vunpack.c.l.b16 %v4483
        %v4682 = vunpack.c.h.b16 %v4483
        %v4683 = vunpack.c.l.b16 %v4484
        %v4684 = vunpack.c.h.b16 %v4484
        %v4685 = vunpack.c.l.b16 %v4485
        %v4686 = vunpack.c.h.b16 %v4485
        %v4687 = vunpack.c.l.b16 %v4486
        %v4688 = vunpack.c.h.b16 %v4486
        %v4689 = vunpack.c.l.b16 %v4487
        %v4690 = vunpack.c.h.b16 %v4487
        %v4691 = vunpack.c.l.b16 %v4488
        %v4692 = vunpack.c.h.b16 %v4488
        %v4693 = vpack.c.b16 %v4567, %v4565
        %v4694 = vpack.c.b16 %v4568, %v4566
        %v4695 = vpack.c.b16 %v4571, %v4569
        %v4696 = vpack.c.b16 %v4572, %v4570
        %v4697 = vpack.c.b16 %v4575, %v4573
        %v4698 = vpack.c.b16 %v4576, %v4574
        %v4699 = vpack.c.b16 %v4579, %v4577
        %v4700 = vpack.c.b16 %v4580, %v4578
        %v4701 = vpack.c.b16 %v4583, %v4581
        %v4702 = vpack.c.b16 %v4584, %v4582
        %v4703 = vpack.c.b16 %v4587, %v4585
        %v4704 = vpack.c.b16 %v4588, %v4586
        %v4705 = vpack.c.b16 %v4591, %v4589
        %v4706 = vpack.c.b16 %v4592, %v4590
        %v4707 = vpack.c.b16 %v4595, %v4593
        %v4708 = vpack.c.b16 %v4596, %v4594
        %v4709 = vpack.c.b16 %v4599, %v4597
        %v4710 = vpack.c.b16 %v4600, %v4598
        %v4711 = vpack.c.b16 %v4603, %v4601
        %v4712 = vpack.c.b16 %v4604, %v4602
        %v4713 = vpack.c.b16 %v4607, %v4605
        %v4714 = vpack.c.b16 %v4608, %v4606
        %v4715 = vpack.c.b16 %v4611, %v4609
        %v4716 = vpack.c.b16 %v4612, %v4610
        %v4717 = vpack.c.b16 %v4615, %v4613
        %v4718 = vpack.c.b16 %v4616, %v4614
        %v4719 = vpack.c.b16 %v4619, %v4617
        %v4720 = vpack.c.b16 %v4620, %v4618
        %v4721 = vpack.c.b16 %v4623, %v4621
        %v4722 = vpack.c.b16 %v4624, %v4622
        %v4723 = vpack.c.b16 %v4627, %v4625
        %v4724 = vpack.c.b16 %v4628, %v4626
        %v4725 = vpack.c.b16 %v4631, %v4629
        %v4726 = vpack.c.b16 %v4632, %v4630
        %v4727 = vpack.c.b16 %v4635, %v4633
        %v4728 = vpack.c.b16 %v4636, %v4634
        %v4729 = vpack.c.b16 %v4639, %v4637
        %v4730 = vpack.c.b16 %v4640, %v4638
        %v4731 = vpack.c.b16 %v4643, %v4641
        %v4732 = vpack.c.b16 %v4644, %v4642
        %v4733 = vpack.c.b16 %v4647, %v4645
        %v4734 = vpack.c.b16 %v4648, %v4646
        %v4735 = vpack.c.b16 %v4651, %v4649
        %v4736 = vpack.c.b16 %v4652, %v4650
        %v4737 = vpack.c.b16 %v4655, %v4653
        %v4738 = vpack.c.b16 %v4656, %v4654
        %v4739 = vpack.c.b16 %v4659, %v4657
        %v4740 = vpack.c.b16 %v4660, %v4658
        %v4741 = vpack.c.b16 %v4663, %v4661
        %v4742 = vpack.c.b16 %v4664, %v4662
        %v4743 = vpack.c.b16 %v4667, %v4665
        %v4744 = vpack.c.b16 %v4668, %v4666
        %v4745 = vpack.c.b16 %v4671, %v4669
        %v4746 = vpack.c.b16 %v4672, %v4670
        %v4747 = vpack.c.b16 %v4675, %v4673
        %v4748 = vpack.c.b16 %v4676, %v4674
        %v4749 = vpack.c.b16 %v4679, %v4677
        %v4750 = vpack.c.b16 %v4680, %v4678
        %v4751 = vpack.c.b16 %v4683, %v4681
        %v4752 = vpack.c.b16 %v4684, %v4682
        %v4753 = vpack.c.b16 %v4687, %v4685
        %v4754 = vpack.c.b16 %v4688, %v4686
        %v4755 = vpack.c.b16 %v4691, %v4689
        %v4756 = vpack.c.b16 %v4692, %v4690
        %4821 = vmatprep.subr.bf16.mxu0 %v4694
        %4822 = vmatpush1.bf16.msra.mxu0 %v4693
        %4823 = vmatprep.subr.bf16.mxu0 %v4696
        %4824 = vmatpush1.bf16.msra.mxu0 %v4695
        %4825 = vmatprep.subr.bf16.mxu0 %v4698
        %4826 = vmatpush1.bf16.msra.mxu0 %v4697
        %4827 = vmatprep.subr.bf16.mxu0 %v4700
        %4828 = vmatpush1.bf16.msra.mxu0 %v4699
        %4829 = vmatprep.subr.bf16.mxu0 %v4702
        %4830 = vmatpush1.bf16.msra.mxu0 %v4701
        %4831 = vmatprep.subr.bf16.mxu0 %v4704
        %4832 = vmatpush1.bf16.msra.mxu0 %v4703
        %4833 = vmatprep.subr.bf16.mxu0 %v4706
        %4834 = vmatpush1.bf16.msra.mxu0 %v4705
        %4835 = vmatprep.subr.bf16.mxu0 %v4708
        %4836 = vmatpush1.bf16.msra.mxu0 %v4707
        %4837 = vmatprep.subr.bf16.mxu0 %v4710
        %4838 = vmatpush1.bf16.msra.mxu0 %v4709
        %4839 = vmatprep.subr.bf16.mxu0 %v4712
        %4840 = vmatpush1.bf16.msra.mxu0 %v4711
        %4841 = vmatprep.subr.bf16.mxu0 %v4714
        %4842 = vmatpush1.bf16.msra.mxu0 %v4713
        %4843 = vmatprep.subr.bf16.mxu0 %v4716
        %4844 = vmatpush1.bf16.msra.mxu0 %v4715
        %4845 = vmatprep.subr.bf16.mxu0 %v4718
        %4846 = vmatpush1.bf16.msra.mxu0 %v4717
        %4847 = vmatprep.subr.bf16.mxu0 %v4720
        %4848 = vmatpush1.bf16.msra.mxu0 %v4719
        %4849 = vmatprep.subr.bf16.mxu0 %v4722
        %4850 = vmatpush1.bf16.msra.mxu0 %v4721
        %4851 = vmatprep.subr.bf16.mxu0 %v4724
        %4852 = vmatpush1.bf16.msra.mxu0 %v4723
        %4853 = vmatprep.mubr.bf16.mxu0 %v4362
        %4854 = vmatmul.mubr.bf16.gmra.mrb[0].mxu0 %v4361
        %v4855 = vpop.f32.mrb[0].mxu0
        %v4856 = vadd.f32 %v4494, %v4855
        %v4857 = vpop.f32.mrb[0].mxu0
        %v4858 = vadd.f32 %v4498, %v4857
        %v4859 = vpop.f32.mrb[0].mxu0
        %v4860 = vadd.f32 %v4494, %v4859
        %v4861 = vpop.f32.mrb[0].mxu0
        %v4862 = vadd.f32 %v4498, %v4861
        %4863 = vmatprep.mubr.bf16.mxu0 %v4366
        %4864 = vmatmul.mubr.bf16.gmra.mrb[0].mxu0 %v4365
        %v4865 = vpop.f32.mrb[0].mxu0
        %v4866 = vadd.f32 %v4494, %v4865
        %v4867 = vpop.f32.mrb[0].mxu0
        %v4868 = vadd.f32 %v4498, %v4867
        %v4869 = vpop.f32.mrb[0].mxu0
        %v4870 = vadd.f32 %v4494, %v4869
        %v4871 = vpop.f32.mrb[0].mxu0
        %v4872 = vadd.f32 %v4498, %v4871
        %4873 = vmatprep.mubr.bf16.mxu0 %v4370
        %4874 = vmatmul.mubr.bf16.gmra.mrb[0].mxu0 %v4369
        %v4875 = vpop.f32.mrb[0].mxu0
        %v4876 = vadd.f32 %v4494, %v4875
        %v4877 = vpop.f32.mrb[0].mxu0
        %v4878 = vadd.f32 %v4498, %v4877
        %v4879 = vpop.f32.mrb[0].mxu0
        %v4880 = vadd.f32 %v4494, %v4879
        %v4881 = vpop.f32.mrb[0].mxu0
        %v4882 = vadd.f32 %v4498, %v4881
        %4883 = vmatprep.mubr.bf16.mxu0 %v4374
        %4884 = vmatmul.mubr.bf16.gmra.mrb[0].mxu0 %v4373
        %v4885 = vpop.f32.mrb[0].mxu0
        %v4886 = vadd.f32 %v4494, %v4885
        %v4887 = vpop.f32.mrb[0].mxu0
        %v4888 = vadd.f32 %v4498, %v4887
        %v4889 = vpop.f32.mrb[0].mxu0
        %v4890 = vadd.f32 %v4494, %v4889
        %v4891 = vpop.f32.mrb[0].mxu0
        %v4892 = vadd.f32 %v4498, %v4891
        %4893 = vmatprep.mubr.bf16.mxu0 %v4378
        %4894 = vmatmul.mubr.bf16.gmra.mrb[0].mxu0 %v4377
        %v4895 = vpop.f32.mrb[0].mxu0
        %v4896 = vadd.f32 %v4494, %v4895
        %v4897 = vpop.f32.mrb[0].mxu0
        %v4898 = vadd.f32 %v4498, %v4897
        %v4899 = vpop.f32.mrb[0].mxu0
        %v4900 = vadd.f32 %v4494, %v4899
        %v4901 = vpop.f32.mrb[0].mxu0
        %v4902 = vadd.f32 %v4498, %v4901
        %4903 = vmatprep.mubr.bf16.mxu0 %v4382
        %4904 = vmatmul.mubr.bf16.gmra.mrb[0].mxu0 %v4381
        %v4905 = vpop.f32.mrb[0].mxu0
        %v4906 = vadd.f32 %v4494, %v4905
        %v4907 = vpop.f32.mrb[0].mxu0
        %v4908 = vadd.f32 %v4498, %v4907
        %v4909 = vpop.f32.mrb[0].mxu0
        %v4910 = vadd.f32 %v4494, %v4909
        %v4911 = vpop.f32.mrb[0].mxu0
        %v4912 = vadd.f32 %v4498, %v4911
        %4913 = vmatprep.mubr.bf16.mxu0 %v4386
        %4914 = vmatmul.mubr.bf16.gmra.mrb[0].mxu0 %v4385
        %v4915 = vpop.f32.mrb[0].mxu0
        %v4916 = vadd.f32 %v4494, %v4915
        %v4917 = vpop.f32.mrb[0].mxu0
        %v4918 = vadd.f32 %v4498, %v4917
        %v4919 = vpop.f32.mrb[0].mxu0
        %v4920 = vadd.f32 %v4494, %v4919
        %v4921 = vpop.f32.mrb[0].mxu0
        %v4922 = vadd.f32 %v4498, %v4921
        %4923 = vmatprep.mubr.bf16.mxu0 %v4390
        %4924 = vmatmul.mubr.bf16.gmra.mrb[0].mxu0 %v4389
        %v4925 = vpop.f32.mrb[0].mxu0
        %v4926 = vadd.f32 %v4494, %v4925
        %v4927 = vpop.f32.mrb[0].mxu0
        %v4928 = vadd.f32 %v4498, %v4927
        %v4929 = vpop.f32.mrb[0].mxu0
        %v4930 = vadd.f32 %v4494, %v4929
        %v4931 = vpop.f32.mrb[0].mxu0
        %v4932 = vadd.f32 %v4498, %v4931
        %4933 = vmatprep.mubr.bf16.mxu0 %v4394
        %4934 = vmatmul.mubr.bf16.gmra.mrb[0].mxu0 %v4393
        %v4935 = vpop.f32.mrb[0].mxu0
        %v4936 = vadd.f32 %v4494, %v4935
        %v4937 = vpop.f32.mrb[0].mxu0
        %v4938 = vadd.f32 %v4498, %v4937
        %v4939 = vpop.f32.mrb[0].mxu0
        %v4940 = vadd.f32 %v4494, %v4939
        %v4941 = vpop.f32.mrb[0].mxu0
        %v4942 = vadd.f32 %v4498, %v4941
        %4943 = vmatprep.mubr.bf16.mxu0 %v4398
        %4944 = vmatmul.mubr.bf16.gmra.mrb[0].mxu0 %v4397
        %v4945 = vpop.f32.mrb[0].mxu0
        %v4946 = vadd.f32 %v4494, %v4945
        %v4947 = vpop.f32.mrb[0].mxu0
        %v4948 = vadd.f32 %v4498, %v4947
        %v4949 = vpop.f32.mrb[0].mxu0
        %v4950 = vadd.f32 %v4494, %v4949
        %v4951 = vpop.f32.mrb[0].mxu0
        %v4952 = vadd.f32 %v4498, %v4951
        %4953 = vmatprep.mubr.bf16.mxu0 %v4402
        %4954 = vmatmul.mubr.bf16.gmra.mrb[0].mxu0 %v4401
        %v4955 = vpop.f32.mrb[0].mxu0
        %v4956 = vadd.f32 %v4494, %v4955
        %v4957 = vpop.f32.mrb[0].mxu0
        %v4958 = vadd.f32 %v4498, %v4957
        %v4959 = vpop.f32.mrb[0].mxu0
        %v4960 = vadd.f32 %v4494, %v4959
        %v4961 = vpop.f32.mrb[0].mxu0
        %v4962 = vadd.f32 %v4498, %v4961
        %4963 = vmatprep.mubr.bf16.mxu0 %v4406
        %4964 = vmatmul.mubr.bf16.gmra.mrb[0].mxu0 %v4405
        %v4965 = vpop.f32.mrb[0].mxu0
        %v4966 = vadd.f32 %v4494, %v4965
        %v4967 = vpop.f32.mrb[0].mxu0
        %v4968 = vadd.f32 %v4498, %v4967
        %v4969 = vpop.f32.mrb[0].mxu0
        %v4970 = vadd.f32 %v4494, %v4969
        %v4971 = vpop.f32.mrb[0].mxu0
        %v4972 = vadd.f32 %v4498, %v4971
        %4973 = vmatprep.mubr.bf16.mxu0 %v4410
        %4974 = vmatmul.mubr.bf16.gmra.mrb[0].mxu0 %v4409
        %v4975 = vpop.f32.mrb[0].mxu0
        %v4976 = vadd.f32 %v4494, %v4975
        %v4977 = vpop.f32.mrb[0].mxu0
        %v4978 = vadd.f32 %v4498, %v4977
        %v4979 = vpop.f32.mrb[0].mxu0
        %v4980 = vadd.f32 %v4494, %v4979
        %v4981 = vpop.f32.mrb[0].mxu0
        %v4982 = vadd.f32 %v4498, %v4981
        %4983 = vmatprep.mubr.bf16.mxu0 %v4414
        %4984 = vmatmul.mubr.bf16.gmra.mrb[0].mxu0 %v4413
        %v4985 = vpop.f32.mrb[0].mxu0
        %v4986 = vadd.f32 %v4494, %v4985
        %v4987 = vpop.f32.mrb[0].mxu0
        %v4988 = vadd.f32 %v4498, %v4987
        %v4989 = vpop.f32.mrb[0].mxu0
        %v4990 = vadd.f32 %v4494, %v4989
        %v4991 = vpop.f32.mrb[0].mxu0
        %v4992 = vadd.f32 %v4498, %v4991
        %4993 = vmatprep.mubr.bf16.mxu0 %v4418
        %4994 = vmatmul.mubr.bf16.gmra.mrb[0].mxu0 %v4417
        %v4995 = vpop.f32.mrb[0].mxu0
        %v4996 = vadd.f32 %v4494, %v4995
        %v4997 = vpop.f32.mrb[0].mxu0
        %v4998 = vadd.f32 %v4498, %v4997
        %v4999 = vpop.f32.mrb[0].mxu0
        %v5000 = vadd.f32 %v4494, %v4999
        %v5001 = vpop.f32.mrb[0].mxu0
        %v5002 = vadd.f32 %v4498, %v5001
        %5003 = vmatprep.mubr.bf16.mxu0 %v4422
        %5004 = vmatmul.mubr.bf16.gmra.mrb[0].mxu0 %v4421
        %v5005 = vpop.f32.mrb[0].mxu0
        %v5006 = vadd.f32 %v4494, %v5005
        %v5007 = vpop.f32.mrb[0].mxu0
        %v5008 = vadd.f32 %v4498, %v5007
        %v5009 = vpop.f32.mrb[0].mxu0
        %v5010 = vadd.f32 %v4494, %v5009
        %v5011 = vpop.f32.mrb[0].mxu0
        %v5012 = vadd.f32 %v4498, %v5011
        %5013 = vdwg.mxu0
        %5014 = vmatprep.subr.bf16.mxu0 %v4726
        %5015 = vmatpush1.bf16.msra.mxu0 %v4725
        %5016 = vmatprep.subr.bf16.mxu0 %v4728
        %5017 = vmatpush1.bf16.msra.mxu0 %v4727
        %5018 = vmatprep.subr.bf16.mxu0 %v4730
        %5019 = vmatpush1.bf16.msra.mxu0 %v4729
        %5020 = vmatprep.subr.bf16.mxu0 %v4732
        %5021 = vmatpush1.bf16.msra.mxu0 %v4731
        %5022 = vmatprep.subr.bf16.mxu0 %v4734
        %5023 = vmatpush1.bf16.msra.mxu0 %v4733
        %5024 = vmatprep.subr.bf16.mxu0 %v4736
        %5025 = vmatpush1.bf16.msra.mxu0 %v4735
        %5026 = vmatprep.subr.bf16.mxu0 %v4738
        %5027 = vmatpush1.bf16.msra.mxu0 %v4737
        %5028 = vmatprep.subr.bf16.mxu0 %v4740
        %5029 = vmatpush1.bf16.msra.mxu0 %v4739
        %5030 = vmatprep.subr.bf16.mxu0 %v4742
        %5031 = vmatpush1.bf16.msra.mxu0 %v4741
        %5032 = vmatprep.subr.bf16.mxu0 %v4744
        %5033 = vmatpush1.bf16.msra.mxu0 %v4743
        %5034 = vmatprep.subr.bf16.mxu0 %v4746
        %5035 = vmatpush1.bf16.msra.mxu0 %v4745
        %5036 = vmatprep.subr.bf16.mxu0 %v4748
        %5037 = vmatpush1.bf16.msra.mxu0 %v4747
        %5038 = vmatprep.subr.bf16.mxu0 %v4750
        %5039 = vmatpush1.bf16.msra.mxu0 %v4749
        %5040 = vmatprep.subr.bf16.mxu0 %v4752
        %5041 = vmatpush1.bf16.msra.mxu0 %v4751
        %5042 = vmatprep.subr.bf16.mxu0 %v4754
        %5043 = vmatpush1.bf16.msra.mxu0 %v4753
        %5044 = vmatprep.subr.bf16.mxu0 %v4756
        %5045 = vmatpush1.bf16.msra.mxu0 %v4755
        %5046 = vmatprep.mubr.bf16.mxu0 %v4364
        %5047 = vmatmul.mubr.bf16.gmra.mrb[0].mxu0 %v4363
        %v5048 = vpop.f32.mrb[0].mxu0
        %v5049 = vadd.f32 %v4856, %v5048
        %v5050 = vpop.f32.mrb[0].mxu0
        %v5051 = vadd.f32 %v4858, %v5050
        %v5052 = vpop.f32.mrb[0].mxu0
        %v5053 = vadd.f32 %v4860, %v5052
        %v5054 = vpop.f32.mrb[0].mxu0
        %v5055 = vadd.f32 %v4862, %v5054
        %5056 = vmatprep.mubr.bf16.mxu0 %v4368
        %5057 = vmatmul.mubr.bf16.gmra.mrb[0].mxu0 %v4367
        %v5058 = vpop.f32.mrb[0].mxu0
        %v5059 = vadd.f32 %v4866, %v5058
        %v5060 = vpop.f32.mrb[0].mxu0
        %v5061 = vadd.f32 %v4868, %v5060
        %v5062 = vpop.f32.mrb[0].mxu0
        %v5063 = vadd.f32 %v4870, %v5062
        %v5064 = vpop.f32.mrb[0].mxu0
        %v5065 = vadd.f32 %v4872, %v5064
        %5066 = vmatprep.mubr.bf16.mxu0 %v4372
        %5067 = vmatmul.mubr.bf16.gmra.mrb[0].mxu0 %v4371
        %v5068 = vpop.f32.mrb[0].mxu0
        %v5069 = vadd.f32 %v4876, %v5068
        %v5070 = vpop.f32.mrb[0].mxu0
        %v5071 = vadd.f32 %v4878, %v5070
        %v5072 = vpop.f32.mrb[0].mxu0
        %v5073 = vadd.f32 %v4880, %v5072
        %v5074 = vpop.f32.mrb[0].mxu0
        %v5075 = vadd.f32 %v4882, %v5074
        %5076 = vmatprep.mubr.bf16.mxu0 %v4376
        %5077 = vmatmul.mubr.bf16.gmra.mrb[0].mxu0 %v4375
        %v5078 = vpop.f32.mrb[0].mxu0
        %v5079 = vadd.f32 %v4886, %v5078
        %v5080 = vpop.f32.mrb[0].mxu0
        %v5081 = vadd.f32 %v4888, %v5080
        %v5082 = vpop.f32.mrb[0].mxu0
        %v5083 = vadd.f32 %v4890, %v5082
        %v5084 = vpop.f32.mrb[0].mxu0
        %v5085 = vadd.f32 %v4892, %v5084
        %5086 = vmatprep.mubr.bf16.mxu0 %v4380
        %5087 = vmatmul.mubr.bf16.gmra.mrb[0].mxu0 %v4379
        %v5088 = vpop.f32.mrb[0].mxu0
        %v5089 = vadd.f32 %v4896, %v5088
        %v5090 = vpop.f32.mrb[0].mxu0
        %v5091 = vadd.f32 %v4898, %v5090
        %v5092 = vpop.f32.mrb[0].mxu0
        %v5093 = vadd.f32 %v4900, %v5092
        %v5094 = vpop.f32.mrb[0].mxu0
        %v5095 = vadd.f32 %v4902, %v5094
        %5096 = vmatprep.mubr.bf16.mxu0 %v4384
        %5097 = vmatmul.mubr.bf16.gmra.mrb[0].mxu0 %v4383
        %v5098 = vpop.f32.mrb[0].mxu0
        %v5099 = vadd.f32 %v4906, %v5098
        %v5100 = vpop.f32.mrb[0].mxu0
        %v5101 = vadd.f32 %v4908, %v5100
        %v5102 = vpop.f32.mrb[0].mxu0
        %v5103 = vadd.f32 %v4910, %v5102
        %v5104 = vpop.f32.mrb[0].mxu0
        %v5105 = vadd.f32 %v4912, %v5104
        %5106 = vmatprep.mubr.bf16.mxu0 %v4388
        %5107 = vmatmul.mubr.bf16.gmra.mrb[0].mxu0 %v4387
        %v5108 = vpop.f32.mrb[0].mxu0
        %v5109 = vadd.f32 %v4916, %v5108
        %v5110 = vpop.f32.mrb[0].mxu0
        %v5111 = vadd.f32 %v4918, %v5110
        %v5112 = vpop.f32.mrb[0].mxu0
        %v5113 = vadd.f32 %v4920, %v5112
        %v5114 = vpop.f32.mrb[0].mxu0
        %v5115 = vadd.f32 %v4922, %v5114
        %5116 = vmatprep.mubr.bf16.mxu0 %v4392
        %5117 = vmatmul.mubr.bf16.gmra.mrb[0].mxu0 %v4391
        %v5118 = vpop.f32.mrb[0].mxu0
        %v5119 = vadd.f32 %v4926, %v5118
        %v5120 = vpop.f32.mrb[0].mxu0
        %v5121 = vadd.f32 %v4928, %v5120
        %v5122 = vpop.f32.mrb[0].mxu0
        %v5123 = vadd.f32 %v4930, %v5122
        %v5124 = vpop.f32.mrb[0].mxu0
        %v5125 = vadd.f32 %v4932, %v5124
        %5126 = vmatprep.mubr.bf16.mxu0 %v4396
        %5127 = vmatmul.mubr.bf16.gmra.mrb[0].mxu0 %v4395
        %v5128 = vpop.f32.mrb[0].mxu0
        %v5129 = vadd.f32 %v4936, %v5128
        %v5130 = vpop.f32.mrb[0].mxu0
        %v5131 = vadd.f32 %v4938, %v5130
        %v5132 = vpop.f32.mrb[0].mxu0
        %v5133 = vadd.f32 %v4940, %v5132
        %v5134 = vpop.f32.mrb[0].mxu0
        %v5135 = vadd.f32 %v4942, %v5134
        %5136 = vmatprep.mubr.bf16.mxu0 %v4400
        %5137 = vmatmul.mubr.bf16.gmra.mrb[0].mxu0 %v4399
        %v5138 = vpop.f32.mrb[0].mxu0
        %v5139 = vadd.f32 %v4946, %v5138
        %v5140 = vpop.f32.mrb[0].mxu0
        %v5141 = vadd.f32 %v4948, %v5140
        %v5142 = vpop.f32.mrb[0].mxu0
        %v5143 = vadd.f32 %v4950, %v5142
        %v5144 = vpop.f32.mrb[0].mxu0
        %v5145 = vadd.f32 %v4952, %v5144
        %5146 = vmatprep.mubr.bf16.mxu0 %v4404
        %5147 = vmatmul.mubr.bf16.gmra.mrb[0].mxu0 %v4403
        %v5148 = vpop.f32.mrb[0].mxu0
        %v5149 = vadd.f32 %v4956, %v5148
        %v5150 = vpop.f32.mrb[0].mxu0
        %v5151 = vadd.f32 %v4958, %v5150
        %v5152 = vpop.f32.mrb[0].mxu0
        %v5153 = vadd.f32 %v4960, %v5152
        %v5154 = vpop.f32.mrb[0].mxu0
        %v5155 = vadd.f32 %v4962, %v5154
        %5156 = vmatprep.mubr.bf16.mxu0 %v4408
        %5157 = vmatmul.mubr.bf16.gmra.mrb[0].mxu0 %v4407
        %v5158 = vpop.f32.mrb[0].mxu0
        %v5159 = vadd.f32 %v4966, %v5158
        %v5160 = vpop.f32.mrb[0].mxu0
        %v5161 = vadd.f32 %v4968, %v5160
        %v5162 = vpop.f32.mrb[0].mxu0
        %v5163 = vadd.f32 %v4970, %v5162
        %v5164 = vpop.f32.mrb[0].mxu0
        %v5165 = vadd.f32 %v4972, %v5164
        %5166 = vmatprep.mubr.bf16.mxu0 %v4412
        %5167 = vmatmul.mubr.bf16.gmra.mrb[0].mxu0 %v4411
        %v5168 = vpop.f32.mrb[0].mxu0
        %v5169 = vadd.f32 %v4976, %v5168
        %v5170 = vpop.f32.mrb[0].mxu0
        %v5171 = vadd.f32 %v4978, %v5170
        %v5172 = vpop.f32.mrb[0].mxu0
        %v5173 = vadd.f32 %v4980, %v5172
        %v5174 = vpop.f32.mrb[0].mxu0
        %v5175 = vadd.f32 %v4982, %v5174
        %5176 = vmatprep.mubr.bf16.mxu0 %v4416
        %5177 = vmatmul.mubr.bf16.gmra.mrb[0].mxu0 %v4415
        %v5178 = vpop.f32.mrb[0].mxu0
        %v5179 = vadd.f32 %v4986, %v5178
        %v5180 = vpop.f32.mrb[0].mxu0
        %v5181 = vadd.f32 %v4988, %v5180
        %v5182 = vpop.f32.mrb[0].mxu0
        %v5183 = vadd.f32 %v4990, %v5182
        %v5184 = vpop.f32.mrb[0].mxu0
        %v5185 = vadd.f32 %v4992, %v5184
        %5186 = vmatprep.mubr.bf16.mxu0 %v4420
        %5187 = vmatmul.mubr.bf16.gmra.mrb[0].mxu0 %v4419
        %v5188 = vpop.f32.mrb[0].mxu0
        %v5189 = vadd.f32 %v4996, %v5188
        %v5190 = vpop.f32.mrb[0].mxu0
        %v5191 = vadd.f32 %v4998, %v5190
        %v5192 = vpop.f32.mrb[0].mxu0
        %v5193 = vadd.f32 %v5000, %v5192
        %v5194 = vpop.f32.mrb[0].mxu0
        %v5195 = vadd.f32 %v5002, %v5194
        %5196 = vmatprep.mubr.bf16.mxu0 %v4424
        %5197 = vmatmul.mubr.bf16.gmra.mrb[0].mxu0 %v4423
        %v5198 = vpop.f32.mrb[0].mxu0
        %v5199 = vadd.f32 %v5006, %v5198
        %v5200 = vpop.f32.mrb[0].mxu0
        %v5201 = vadd.f32 %v5008, %v5200
        %v5202 = vpop.f32.mrb[0].mxu0
        %v5203 = vadd.f32 %v5010, %v5202
        %v5204 = vpop.f32.mrb[0].mxu0
        %v5205 = vadd.f32 %v5012, %v5204
        %5206 = vdwg.mxu0
        %v5207 = vmax.f32 %v5049, 0.0
        %v5208 = vmax.f32 %v5051, 0.0
        %v5209 = vmax.f32 %v5053, 0.0
        %v5210 = vmax.f32 %v5055, 0.0
        %v5211 = vmax.f32 %v5059, 0.0
        %v5212 = vmax.f32 %v5061, 0.0
        %v5213 = vmax.f32 %v5063, 0.0
        %v5214 = vmax.f32 %v5065, 0.0
        %v5215 = vmax.f32 %v5069, 0.0
        %v5216 = vmax.f32 %v5071, 0.0
        %v5217 = vmax.f32 %v5073, 0.0
        %v5218 = vmax.f32 %v5075, 0.0
        %v5219 = vmax.f32 %v5079, 0.0
        %v5220 = vmax.f32 %v5081, 0.0
        %v5221 = vmax.f32 %v5083, 0.0
        %v5222 = vmax.f32 %v5085, 0.0
        %v5223 = vmax.f32 %v5089, 0.0
        %v5224 = vmax.f32 %v5091, 0.0
        %v5225 = vmax.f32 %v5093, 0.0
        %v5226 = vmax.f32 %v5095, 0.0
        %v5227 = vmax.f32 %v5099, 0.0
        %v5228 = vmax.f32 %v5101, 0.0
        %v5229 = vmax.f32 %v5103, 0.0
        %v5230 = vmax.f32 %v5105, 0.0
        %v5231 = vmax.f32 %v5109, 0.0
        %v5232 = vmax.f32 %v5111, 0.0
        %v5233 = vmax.f32 %v5113, 0.0
        %v5234 = vmax.f32 %v5115, 0.0
        %v5235 = vmax.f32 %v5119, 0.0
        %v5236 = vmax.f32 %v5121, 0.0
        %v5237 = vmax.f32 %v5123, 0.0
        %v5238 = vmax.f32 %v5125, 0.0
        %v5239 = vmax.f32 %v5129, 0.0
        %v5240 = vmax.f32 %v5131, 0.0
        %v5241 = vmax.f32 %v5133, 0.0
        %v5242 = vmax.f32 %v5135, 0.0
        %v5243 = vmax.f32 %v5139, 0.0
        %v5244 = vmax.f32 %v5141, 0.0
        %v5245 = vmax.f32 %v5143, 0.0
        %v5246 = vmax.f32 %v5145, 0.0
        %v5247 = vmax.f32 %v5149, 0.0
        %v5248 = vmax.f32 %v5151, 0.0
        %v5249 = vmax.f32 %v5153, 0.0
        %v5250 = vmax.f32 %v5155, 0.0
        %v5251 = vmax.f32 %v5159, 0.0
        %v5252 = vmax.f32 %v5161, 0.0
        %v5253 = vmax.f32 %v5163, 0.0
        %v5254 = vmax.f32 %v5165, 0.0
        %v5255 = vmax.f32 %v5169, 0.0
        %v5256 = vmax.f32 %v5171, 0.0
        %v5257 = vmax.f32 %v5173, 0.0
        %v5258 = vmax.f32 %v5175, 0.0
        %v5259 = vmax.f32 %v5179, 0.0
        %v5260 = vmax.f32 %v5181, 0.0
        %v5261 = vmax.f32 %v5183, 0.0
        %v5262 = vmax.f32 %v5185, 0.0
        %v5263 = vmax.f32 %v5189, 0.0
        %v5264 = vmax.f32 %v5191, 0.0
        %v5265 = vmax.f32 %v5193, 0.0
        %v5266 = vmax.f32 %v5195, 0.0
        %v5267 = vmax.f32 %v5199, 0.0
        %v5268 = vmax.f32 %v5201, 0.0
        %v5269 = vmax.f32 %v5203, 0.0
        %v5270 = vmax.f32 %v5205, 0.0
        %v5271 = vpack.c.bf16 %v5209, %v5207
        %v5272 = vpack.c.bf16 %v5210, %v5208
        %v5273 = vpack.c.bf16 %v5213, %v5211
        %v5274 = vpack.c.bf16 %v5214, %v5212
        %v5275 = vpack.c.bf16 %v5217, %v5215
        %v5276 = vpack.c.bf16 %v5218, %v5216
        %v5277 = vpack.c.bf16 %v5221, %v5219
        %v5278 = vpack.c.bf16 %v5222, %v5220
        %v5279 = vpack.c.bf16 %v5225, %v5223
        %v5280 = vpack.c.bf16 %v5226, %v5224
        %v5281 = vpack.c.bf16 %v5229, %v5227
        %v5282 = vpack.c.bf16 %v5230, %v5228
        %v5283 = vpack.c.bf16 %v5233, %v5231
        %v5284 = vpack.c.bf16 %v5234, %v5232
        %v5285 = vpack.c.bf16 %v5237, %v5235
        %v5286 = vpack.c.bf16 %v5238, %v5236
        %v5287 = vpack.c.bf16 %v5241, %v5239
        %v5288 = vpack.c.bf16 %v5242, %v5240
        %v5289 = vpack.c.bf16 %v5245, %v5243
        %v5290 = vpack.c.bf16 %v5246, %v5244
        %v5291 = vpack.c.bf16 %v5249, %v5247
        %v5292 = vpack.c.bf16 %v5250, %v5248
        %v5293 = vpack.c.bf16 %v5253, %v5251
        %v5294 = vpack.c.bf16 %v5254, %v5252
        %v5295 = vpack.c.bf16 %v5257, %v5255
        %v5296 = vpack.c.bf16 %v5258, %v5256
        %v5297 = vpack.c.bf16 %v5261, %v5259
        %v5298 = vpack.c.bf16 %v5262, %v5260
        %v5299 = vpack.c.bf16 %v5265, %v5263
        %v5300 = vpack.c.bf16 %v5266, %v5264
        %v5301 = vpack.c.bf16 %v5269, %v5267
        %v5302 = vpack.c.bf16 %v5270, %v5268
        %v5303 = vld [vmem:[#allocation8] sm:$0xff]
        %v5304 = vld [vmem:[#allocation8 + $0x8] sm:$0xf]
        %v5305 = vld [vmem:[#allocation8 + $0xc] sm:$0xff]
        %v5306 = vld [vmem:[#allocation8 + $0x14] sm:$0xf]
        %v5307 = vld [vmem:[#allocation8 + $0x18] sm:$0xff]
        %v5308 = vld [vmem:[#allocation8 + $0x20] sm:$0xf]
        %v5309 = vld [vmem:[#allocation8 + $0x24] sm:$0xff]
        %v5310 = vld [vmem:[#allocation8 + $0x2c] sm:$0xf]
        %v5311 = vld [vmem:[#allocation8 + $0x30] sm:$0xff]
        %v5312 = vld [vmem:[#allocation8 + $0x38] sm:$0xf]
        %v5313 = vld [vmem:[#allocation8 + $0x3c] sm:$0xff]
        %v5314 = vld [vmem:[#allocation8 + $0x44] sm:$0xf]
        %v5315 = vld [vmem:[#allocation8 + $0x48] sm:$0xff]
        %v5316 = vld [vmem:[#allocation8 + $0x50] sm:$0xf]
        %v5317 = vld [vmem:[#allocation8 + $0x54] sm:$0xff]
        %v5318 = vld [vmem:[#allocation8 + $0x5c] sm:$0xf]
        %v5319 = vld [vmem:[#allocation8 + $0x60] sm:$0xff]
        %v5320 = vld [vmem:[#allocation8 + $0x68] sm:$0xf]
        %v5321 = vld [vmem:[#allocation8 + $0x6c] sm:$0xff]
        %v5322 = vld [vmem:[#allocation8 + $0x74] sm:$0xf]
        %v5323 = vld [vmem:[#allocation8 + $0x78] sm:$0xff]
        %v5324 = vld [vmem:[#allocation8 + $0x80] sm:$0xf]
        %v5325 = vld [vmem:[#allocation8 + $0x84] sm:$0xff]
        %v5326 = vld [vmem:[#allocation8 + $0x8c] sm:$0xf]
        %v5327 = vld [vmem:[#allocation8 + $0x90] sm:$0xff]
        %v5328 = vld [vmem:[#allocation8 + $0x98] sm:$0xf]
        %v5329 = vld [vmem:[#allocation8 + $0x9c] sm:$0xff]
        %v5330 = vld [vmem:[#allocation8 + $0xa4] sm:$0xf]
        %v5331 = vld [vmem:[#allocation8 + $0xa8] sm:$0xff]
        %v5332 = vld [vmem:[#allocation8 + $0xb0] sm:$0xf]
        %v5333 = vld [vmem:[#allocation8 + $0xb4] sm:$0xff]
        %v5334 = vld [vmem:[#allocation8 + $0xbc] sm:$0xf]
        %v5335 = vld [vmem:[#allocation8 + $0xc0] sm:$0xff]
        %v5336 = vld [vmem:[#allocation8 + $0xc8] sm:$0xf]
        %v5337 = vld [vmem:[#allocation8 + $0xcc] sm:$0xff]
        %v5338 = vld [vmem:[#allocation8 + $0xd4] sm:$0xf]
        %v5339 = vld [vmem:[#allocation8 + $0xd8] sm:$0xff]
        %v5340 = vld [vmem:[#allocation8 + $0xe0] sm:$0xf]
        %v5341 = vld [vmem:[#allocation8 + $0xe4] sm:$0xff]
        %v5342 = vld [vmem:[#allocation8 + $0xec] sm:$0xf]
        %v5343 = vld [vmem:[#allocation8 + $0xf0] sm:$0xff]
        %v5344 = vld [vmem:[#allocation8 + $0xf8] sm:$0xf]
        %v5345 = vld [vmem:[#allocation8 + $0xfc] sm:$0xff]
        %v5346 = vld [vmem:[#allocation8 + $0x104] sm:$0xf]
        %v5347 = vld [vmem:[#allocation8 + $0x108] sm:$0xff]
        %v5348 = vld [vmem:[#allocation8 + $0x110] sm:$0xf]
        %v5349 = vld [vmem:[#allocation8 + $0x114] sm:$0xff]
        %v5350 = vld [vmem:[#allocation8 + $0x11c] sm:$0xf]
        %v5351 = vld [vmem:[#allocation8 + $0x120] sm:$0xff]
        %v5352 = vld [vmem:[#allocation8 + $0x128] sm:$0xf]
        %v5353 = vld [vmem:[#allocation8 + $0x12c] sm:$0xff]
        %v5354 = vld [vmem:[#allocation8 + $0x134] sm:$0xf]
        %v5355 = vld [vmem:[#allocation8 + $0x138] sm:$0xff]
        %v5356 = vld [vmem:[#allocation8 + $0x140] sm:$0xf]
        %v5357 = vld [vmem:[#allocation8 + $0x144] sm:$0xff]
        %v5358 = vld [vmem:[#allocation8 + $0x14c] sm:$0xf]
        %v5359 = vld [vmem:[#allocation8 + $0x150] sm:$0xff]
        %v5360 = vld [vmem:[#allocation8 + $0x158] sm:$0xf]
        %v5361 = vld [vmem:[#allocation8 + $0x15c] sm:$0xff]
        %v5362 = vld [vmem:[#allocation8 + $0x164] sm:$0xf]
        %v5363 = vld [vmem:[#allocation8 + $0x168] sm:$0xff]
        %v5364 = vld [vmem:[#allocation8 + $0x170] sm:$0xf]
        %v5365 = vld [vmem:[#allocation8 + $0x174] sm:$0xff]
        %v5366 = vld [vmem:[#allocation8 + $0x17c] sm:$0xf]
        %v5367 = vld [vmem:[%s6] sm:$0x7]
        %v5369 = vlaneseq
        %v5370 = vshrl.u32 %v5369, 7
        %v5371 = vsub.s32 0, %v5370
        %v5372 = vrot.slane %v5367, %v5371
        %v5373 = vlaneseq
        %v5374 = vshrl.u32 %v5373, 7
        %v5375 = vsub.s32 1, %v5374
        %v5376 = vrot.slane %v5367, %v5375
        %v5377 = vlaneseq
        %v5378 = vshrl.u32 %v5377, 7
        %v5379 = vsub.s32 2, %v5378
        %v5380 = vrot.slane %v5367, %v5379
        %v5448 = vunpack.c.l.b16 %v5303
        %v5449 = vunpack.c.h.b16 %v5303
        %v5450 = vunpack.c.l.b16 %v5304
        %v5451 = vunpack.c.l.b16 %v5305
        %v5452 = vunpack.c.h.b16 %v5305
        %v5453 = vunpack.c.l.b16 %v5306
        %v5454 = vunpack.c.l.b16 %v5307
        %v5455 = vunpack.c.h.b16 %v5307
        %v5456 = vunpack.c.l.b16 %v5308
        %v5457 = vunpack.c.l.b16 %v5309
        %v5458 = vunpack.c.h.b16 %v5309
        %v5459 = vunpack.c.l.b16 %v5310
        %v5460 = vunpack.c.l.b16 %v5311
        %v5461 = vunpack.c.h.b16 %v5311
        %v5462 = vunpack.c.l.b16 %v5312
        %v5463 = vunpack.c.l.b16 %v5313
        %v5464 = vunpack.c.h.b16 %v5313
        %v5465 = vunpack.c.l.b16 %v5314
        %v5466 = vunpack.c.l.b16 %v5315
        %v5467 = vunpack.c.h.b16 %v5315
        %v5468 = vunpack.c.l.b16 %v5316
        %v5469 = vunpack.c.l.b16 %v5317
        %v5470 = vunpack.c.h.b16 %v5317
        %v5471 = vunpack.c.l.b16 %v5318
        %v5472 = vunpack.c.l.b16 %v5319
        %v5473 = vunpack.c.h.b16 %v5319
        %v5474 = vunpack.c.l.b16 %v5320
        %v5475 = vunpack.c.l.b16 %v5321
        %v5476 = vunpack.c.h.b16 %v5321
        %v5477 = vunpack.c.l.b16 %v5322
        %v5478 = vunpack.c.l.b16 %v5323
        %v5479 = vunpack.c.h.b16 %v5323
        %v5480 = vunpack.c.l.b16 %v5324
        %v5481 = vunpack.c.l.b16 %v5325
        %v5482 = vunpack.c.h.b16 %v5325
        %v5483 = vunpack.c.l.b16 %v5326
        %v5484 = vunpack.c.l.b16 %v5327
        %v5485 = vunpack.c.h.b16 %v5327
        %v5486 = vunpack.c.l.b16 %v5328
        %v5487 = vunpack.c.l.b16 %v5329
        %v5488 = vunpack.c.h.b16 %v5329
        %v5489 = vunpack.c.l.b16 %v5330
        %v5490 = vunpack.c.l.b16 %v5331
        %v5491 = vunpack.c.h.b16 %v5331
        %v5492 = vunpack.c.l.b16 %v5332
        %v5493 = vunpack.c.l.b16 %v5333
        %v5494 = vunpack.c.h.b16 %v5333
        %v5495 = vunpack.c.l.b16 %v5334
        %v5496 = vunpack.c.l.b16 %v5335
        %v5497 = vunpack.c.h.b16 %v5335
        %v5498 = vunpack.c.l.b16 %v5336
        %v5499 = vunpack.c.l.b16 %v5337
        %v5500 = vunpack.c.h.b16 %v5337
        %v5501 = vunpack.c.l.b16 %v5338
        %v5502 = vunpack.c.l.b16 %v5339
        %v5503 = vunpack.c.h.b16 %v5339
        %v5504 = vunpack.c.l.b16 %v5340
        %v5505 = vunpack.c.l.b16 %v5341
        %v5506 = vunpack.c.h.b16 %v5341
        %v5507 = vunpack.c.l.b16 %v5342
        %v5508 = vunpack.c.l.b16 %v5343
        %v5509 = vunpack.c.h.b16 %v5343
        %v5510 = vunpack.c.l.b16 %v5344
        %v5511 = vunpack.c.l.b16 %v5345
        %v5512 = vunpack.c.h.b16 %v5345
        %v5513 = vunpack.c.l.b16 %v5346
        %v5514 = vunpack.c.l.b16 %v5347
        %v5515 = vunpack.c.h.b16 %v5347
        %v5516 = vunpack.c.l.b16 %v5348
        %v5517 = vunpack.c.l.b16 %v5349
        %v5518 = vunpack.c.h.b16 %v5349
        %v5519 = vunpack.c.l.b16 %v5350
        %v5520 = vunpack.c.l.b16 %v5351
        %v5521 = vunpack.c.h.b16 %v5351
        %v5522 = vunpack.c.l.b16 %v5352
        %v5523 = vunpack.c.l.b16 %v5353
        %v5524 = vunpack.c.h.b16 %v5353
        %v5525 = vunpack.c.l.b16 %v5354
        %v5526 = vunpack.c.l.b16 %v5355
        %v5527 = vunpack.c.h.b16 %v5355
        %v5528 = vunpack.c.l.b16 %v5356
        %v5529 = vunpack.c.l.b16 %v5357
        %v5530 = vunpack.c.h.b16 %v5357
        %v5531 = vunpack.c.l.b16 %v5358
        %v5532 = vunpack.c.l.b16 %v5359
        %v5533 = vunpack.c.h.b16 %v5359
        %v5534 = vunpack.c.l.b16 %v5360
        %v5535 = vunpack.c.l.b16 %v5361
        %v5536 = vunpack.c.h.b16 %v5361
        %v5537 = vunpack.c.l.b16 %v5362
        %v5538 = vunpack.c.l.b16 %v5363
        %v5539 = vunpack.c.h.b16 %v5363
        %v5540 = vunpack.c.l.b16 %v5364
        %v5541 = vunpack.c.l.b16 %v5365
        %v5542 = vunpack.c.h.b16 %v5365
        %v5543 = vunpack.c.l.b16 %v5366
        %v5544 = vpack.c.b16 %v5451, %v5448
        %v5545 = vpack.c.b16 %v5452, %v5449
        %v5546 = vpack.c.b16 %v5453, %v5450
        %v5547 = vpack.c.b16 %v5457, %v5454
        %v5548 = vpack.c.b16 %v5458, %v5455
        %v5549 = vpack.c.b16 %v5459, %v5456
        %v5550 = vpack.c.b16 %v5463, %v5460
        %v5551 = vpack.c.b16 %v5464, %v5461
        %v5552 = vpack.c.b16 %v5465, %v5462
        %v5553 = vpack.c.b16 %v5469, %v5466
        %v5554 = vpack.c.b16 %v5470, %v5467
        %v5555 = vpack.c.b16 %v5471, %v5468
        %v5556 = vpack.c.b16 %v5475, %v5472
        %v5557 = vpack.c.b16 %v5476, %v5473
        %v5558 = vpack.c.b16 %v5477, %v5474
        %v5559 = vpack.c.b16 %v5481, %v5478
        %v5560 = vpack.c.b16 %v5482, %v5479
        %v5561 = vpack.c.b16 %v5483, %v5480
        %v5562 = vpack.c.b16 %v5487, %v5484
        %v5563 = vpack.c.b16 %v5488, %v5485
        %v5564 = vpack.c.b16 %v5489, %v5486
        %v5565 = vpack.c.b16 %v5493, %v5490
        %v5566 = vpack.c.b16 %v5494, %v5491
        %v5567 = vpack.c.b16 %v5495, %v5492
        %v5568 = vpack.c.b16 %v5499, %v5496
        %v5569 = vpack.c.b16 %v5500, %v5497
        %v5570 = vpack.c.b16 %v5501, %v5498
        %v5571 = vpack.c.b16 %v5505, %v5502
        %v5572 = vpack.c.b16 %v5506, %v5503
        %v5573 = vpack.c.b16 %v5507, %v5504
        %v5574 = vpack.c.b16 %v5511, %v5508
        %v5575 = vpack.c.b16 %v5512, %v5509
        %v5576 = vpack.c.b16 %v5513, %v5510
        %v5577 = vpack.c.b16 %v5517, %v5514
        %v5578 = vpack.c.b16 %v5518, %v5515
        %v5579 = vpack.c.b16 %v5519, %v5516
        %v5580 = vpack.c.b16 %v5523, %v5520
        %v5581 = vpack.c.b16 %v5524, %v5521
        %v5582 = vpack.c.b16 %v5525, %v5522
        %v5583 = vpack.c.b16 %v5529, %v5526
        %v5584 = vpack.c.b16 %v5530, %v5527
        %v5585 = vpack.c.b16 %v5531, %v5528
        %v5586 = vpack.c.b16 %v5535, %v5532
        %v5587 = vpack.c.b16 %v5536, %v5533
        %v5588 = vpack.c.b16 %v5537, %v5534
        %v5589 = vpack.c.b16 %v5541, %v5538
        %v5590 = vpack.c.b16 %v5542, %v5539
        %v5591 = vpack.c.b16 %v5543, %v5540
        %5640 = vmatprep.subr.bf16.mxu0 %v5545
        %5641 = vmatpush1.bf16.msra.mxu0 %v5544
        %5642 = vmatprep.subr.bf16.mxu0 %v5548
        %5643 = vmatpush1.bf16.msra.mxu0 %v5547
        %5644 = vmatprep.subr.bf16.mxu0 %v5551
        %5645 = vmatpush1.bf16.msra.mxu0 %v5550
        %5646 = vmatprep.subr.bf16.mxu0 %v5554
        %5647 = vmatpush1.bf16.msra.mxu0 %v5553
        %5648 = vmatprep.subr.bf16.mxu0 %v5557
        %5649 = vmatpush1.bf16.msra.mxu0 %v5556
        %5650 = vmatprep.subr.bf16.mxu0 %v5560
        %5651 = vmatpush1.bf16.msra.mxu0 %v5559
        %5652 = vmatprep.subr.bf16.mxu0 %v5563
        %5653 = vmatpush1.bf16.msra.mxu0 %v5562
        %5654 = vmatprep.subr.bf16.mxu0 %v5566
        %5655 = vmatpush1.bf16.msra.mxu0 %v5565
        %5656 = vmatprep.subr.bf16.mxu0 %v5569
        %5657 = vmatpush1.bf16.msra.mxu0 %v5568
        %5658 = vmatprep.subr.bf16.mxu0 %v5572
        %5659 = vmatpush1.bf16.msra.mxu0 %v5571
        %5660 = vmatprep.subr.bf16.mxu0 %v5575
        %5661 = vmatpush1.bf16.msra.mxu0 %v5574
        %5662 = vmatprep.subr.bf16.mxu0 %v5578
        %5663 = vmatpush1.bf16.msra.mxu0 %v5577
        %5664 = vmatprep.subr.bf16.mxu0 %v5581
        %5665 = vmatpush1.bf16.msra.mxu0 %v5580
        %5666 = vmatprep.subr.bf16.mxu0 %v5584
        %5667 = vmatpush1.bf16.msra.mxu0 %v5583
        %5668 = vmatprep.subr.bf16.mxu0 %v5587
        %5669 = vmatpush1.bf16.msra.mxu0 %v5586
        %5670 = vmatprep.subr.bf16.mxu0 %v5590
        %5671 = vmatpush1.bf16.msra.mxu0 %v5589
        %5672 = vmatprep.mubr.bf16.mxu0 %v5272
        %5673 = vmatmul.mubr.bf16.gmra.mrb[0].mxu0 %v5271
        %v5674 = vpop.f32.mrb[0].mxu0
        %v5675 = vadd.f32 %v5372, %v5674
        %v5676 = vpop.f32.mrb[0].mxu0
        %v5677 = vadd.f32 %v5376, %v5676
        %v5678 = vpop.f32.mrb[0].mxu0
        %v5679 = vadd.f32 %v5372, %v5678
        %v5680 = vpop.f32.mrb[0].mxu0
        %v5681 = vadd.f32 %v5376, %v5680
        %5682 = vmatprep.mubr.bf16.mxu0 %v5274
        %5683 = vmatmul.mubr.bf16.gmra.mrb[0].mxu0 %v5273
        %v5684 = vpop.f32.mrb[0].mxu0
        %v5685 = vadd.f32 %v5372, %v5684
        %v5686 = vpop.f32.mrb[0].mxu0
        %v5687 = vadd.f32 %v5376, %v5686
        %v5688 = vpop.f32.mrb[0].mxu0
        %v5689 = vadd.f32 %v5372, %v5688
        %v5690 = vpop.f32.mrb[0].mxu0
        %v5691 = vadd.f32 %v5376, %v5690
        %5692 = vmatprep.mubr.bf16.mxu0 %v5276
        %5693 = vmatmul.mubr.bf16.gmra.mrb[0].mxu0 %v5275
        %v5694 = vpop.f32.mrb[0].mxu0
        %v5695 = vadd.f32 %v5372, %v5694
        %v5696 = vpop.f32.mrb[0].mxu0
        %v5697 = vadd.f32 %v5376, %v5696
        %v5698 = vpop.f32.mrb[0].mxu0
        %v5699 = vadd.f32 %v5372, %v5698
        %v5700 = vpop.f32.mrb[0].mxu0
        %v5701 = vadd.f32 %v5376, %v5700
        %5702 = vmatprep.mubr.bf16.mxu0 %v5278
        %5703 = vmatmul.mubr.bf16.gmra.mrb[0].mxu0 %v5277
        %v5704 = vpop.f32.mrb[0].mxu0
        %v5705 = vadd.f32 %v5372, %v5704
        %v5706 = vpop.f32.mrb[0].mxu0
        %v5707 = vadd.f32 %v5376, %v5706
        %v5708 = vpop.f32.mrb[0].mxu0
        %v5709 = vadd.f32 %v5372, %v5708
        %v5710 = vpop.f32.mrb[0].mxu0
        %v5711 = vadd.f32 %v5376, %v5710
        %5712 = vmatprep.mubr.bf16.mxu0 %v5280
        %5713 = vmatmul.mubr.bf16.gmra.mrb[0].mxu0 %v5279
        %v5714 = vpop.f32.mrb[0].mxu0
        %v5715 = vadd.f32 %v5372, %v5714
        %v5716 = vpop.f32.mrb[0].mxu0
        %v5717 = vadd.f32 %v5376, %v5716
        %v5718 = vpop.f32.mrb[0].mxu0
        %v5719 = vadd.f32 %v5372, %v5718
        %v5720 = vpop.f32.mrb[0].mxu0
        %v5721 = vadd.f32 %v5376, %v5720
        %5722 = vmatprep.mubr.bf16.mxu0 %v5282
        %5723 = vmatmul.mubr.bf16.gmra.mrb[0].mxu0 %v5281
        %v5724 = vpop.f32.mrb[0].mxu0
        %v5725 = vadd.f32 %v5372, %v5724
        %v5726 = vpop.f32.mrb[0].mxu0
        %v5727 = vadd.f32 %v5376, %v5726
        %v5728 = vpop.f32.mrb[0].mxu0
        %v5729 = vadd.f32 %v5372, %v5728
        %v5730 = vpop.f32.mrb[0].mxu0
        %v5731 = vadd.f32 %v5376, %v5730
        %5732 = vmatprep.mubr.bf16.mxu0 %v5284
        %5733 = vmatmul.mubr.bf16.gmra.mrb[0].mxu0 %v5283
        %v5734 = vpop.f32.mrb[0].mxu0
        %v5735 = vadd.f32 %v5372, %v5734
        %v5736 = vpop.f32.mrb[0].mxu0
        %v5737 = vadd.f32 %v5376, %v5736
        %v5738 = vpop.f32.mrb[0].mxu0
        %v5739 = vadd.f32 %v5372, %v5738
        %v5740 = vpop.f32.mrb[0].mxu0
        %v5741 = vadd.f32 %v5376, %v5740
        %5742 = vmatprep.mubr.bf16.mxu0 %v5286
        %5743 = vmatmul.mubr.bf16.gmra.mrb[0].mxu0 %v5285
        %v5744 = vpop.f32.mrb[0].mxu0
        %v5745 = vadd.f32 %v5372, %v5744
        %v5746 = vpop.f32.mrb[0].mxu0
        %v5747 = vadd.f32 %v5376, %v5746
        %v5748 = vpop.f32.mrb[0].mxu0
        %v5749 = vadd.f32 %v5372, %v5748
        %v5750 = vpop.f32.mrb[0].mxu0
        %v5751 = vadd.f32 %v5376, %v5750
        %5752 = vmatprep.mubr.bf16.mxu0 %v5288
        %5753 = vmatmul.mubr.bf16.gmra.mrb[0].mxu0 %v5287
        %v5754 = vpop.f32.mrb[0].mxu0
        %v5755 = vadd.f32 %v5372, %v5754
        %v5756 = vpop.f32.mrb[0].mxu0
        %v5757 = vadd.f32 %v5376, %v5756
        %v5758 = vpop.f32.mrb[0].mxu0
        %v5759 = vadd.f32 %v5372, %v5758
        %v5760 = vpop.f32.mrb[0].mxu0
        %v5761 = vadd.f32 %v5376, %v5760
        %5762 = vmatprep.mubr.bf16.mxu0 %v5290
        %5763 = vmatmul.mubr.bf16.gmra.mrb[0].mxu0 %v5289
        %v5764 = vpop.f32.mrb[0].mxu0
        %v5765 = vadd.f32 %v5372, %v5764
        %v5766 = vpop.f32.mrb[0].mxu0
        %v5767 = vadd.f32 %v5376, %v5766
        %v5768 = vpop.f32.mrb[0].mxu0
        %v5769 = vadd.f32 %v5372, %v5768
        %v5770 = vpop.f32.mrb[0].mxu0
        %v5771 = vadd.f32 %v5376, %v5770
        %5772 = vmatprep.mubr.bf16.mxu0 %v5292
        %5773 = vmatmul.mubr.bf16.gmra.mrb[0].mxu0 %v5291
        %v5774 = vpop.f32.mrb[0].mxu0
        %v5775 = vadd.f32 %v5372, %v5774
        %v5776 = vpop.f32.mrb[0].mxu0
        %v5777 = vadd.f32 %v5376, %v5776
        %v5778 = vpop.f32.mrb[0].mxu0
        %v5779 = vadd.f32 %v5372, %v5778
        %v5780 = vpop.f32.mrb[0].mxu0
        %v5781 = vadd.f32 %v5376, %v5780
        %5782 = vmatprep.mubr.bf16.mxu0 %v5294
        %5783 = vmatmul.mubr.bf16.gmra.mrb[0].mxu0 %v5293
        %v5784 = vpop.f32.mrb[0].mxu0
        %v5785 = vadd.f32 %v5372, %v5784
        %v5786 = vpop.f32.mrb[0].mxu0
        %v5787 = vadd.f32 %v5376, %v5786
        %v5788 = vpop.f32.mrb[0].mxu0
        %v5789 = vadd.f32 %v5372, %v5788
        %v5790 = vpop.f32.mrb[0].mxu0
        %v5791 = vadd.f32 %v5376, %v5790
        %5792 = vmatprep.mubr.bf16.mxu0 %v5296
        %5793 = vmatmul.mubr.bf16.gmra.mrb[0].mxu0 %v5295
        %v5794 = vpop.f32.mrb[0].mxu0
        %v5795 = vadd.f32 %v5372, %v5794
        %v5796 = vpop.f32.mrb[0].mxu0
        %v5797 = vadd.f32 %v5376, %v5796
        %v5798 = vpop.f32.mrb[0].mxu0
        %v5799 = vadd.f32 %v5372, %v5798
        %v5800 = vpop.f32.mrb[0].mxu0
        %v5801 = vadd.f32 %v5376, %v5800
        %5802 = vmatprep.mubr.bf16.mxu0 %v5298
        %5803 = vmatmul.mubr.bf16.gmra.mrb[0].mxu0 %v5297
        %v5804 = vpop.f32.mrb[0].mxu0
        %v5805 = vadd.f32 %v5372, %v5804
        %v5806 = vpop.f32.mrb[0].mxu0
        %v5807 = vadd.f32 %v5376, %v5806
        %v5808 = vpop.f32.mrb[0].mxu0
        %v5809 = vadd.f32 %v5372, %v5808
        %v5810 = vpop.f32.mrb[0].mxu0
        %v5811 = vadd.f32 %v5376, %v5810
        %5812 = vmatprep.mubr.bf16.mxu0 %v5300
        %5813 = vmatmul.mubr.bf16.gmra.mrb[0].mxu0 %v5299
        %v5814 = vpop.f32.mrb[0].mxu0
        %v5815 = vadd.f32 %v5372, %v5814
        %v5816 = vpop.f32.mrb[0].mxu0
        %v5817 = vadd.f32 %v5376, %v5816
        %v5818 = vpop.f32.mrb[0].mxu0
        %v5819 = vadd.f32 %v5372, %v5818
        %v5820 = vpop.f32.mrb[0].mxu0
        %v5821 = vadd.f32 %v5376, %v5820
        %5822 = vmatprep.mubr.bf16.mxu0 %v5302
        %5823 = vmatmul.mubr.bf16.gmra.mrb[0].mxu0 %v5301
        %v5824 = vpop.f32.mrb[0].mxu0
        %v5825 = vadd.f32 %v5372, %v5824
        %v5826 = vpop.f32.mrb[0].mxu0
        %v5827 = vadd.f32 %v5376, %v5826
        %v5828 = vpop.f32.mrb[0].mxu0
        %v5829 = vadd.f32 %v5372, %v5828
        %v5830 = vpop.f32.mrb[0].mxu0
        %v5831 = vadd.f32 %v5376, %v5830
        %5832 = vdwg.mxu0
        %5833 = vmatprep.subr.bf16.mxu0 0
        %5834 = vmatpush1.bf16.msra.mxu0 %v5546
        %5835 = vmatprep.subr.bf16.mxu0 0
        %5836 = vmatpush1.bf16.msra.mxu0 %v5549
        %5837 = vmatprep.subr.bf16.mxu0 0
        %5838 = vmatpush1.bf16.msra.mxu0 %v5552
        %5839 = vmatprep.subr.bf16.mxu0 0
        %5840 = vmatpush1.bf16.msra.mxu0 %v5555
        %5841 = vmatprep.subr.bf16.mxu0 0
        %5842 = vmatpush1.bf16.msra.mxu0 %v5558
        %5843 = vmatprep.subr.bf16.mxu0 0
        %5844 = vmatpush1.bf16.msra.mxu0 %v5561
        %5845 = vmatprep.subr.bf16.mxu0 0
        %5846 = vmatpush1.bf16.msra.mxu0 %v5564
        %5847 = vmatprep.subr.bf16.mxu0 0
        %5848 = vmatpush1.bf16.msra.mxu0 %v5567
        %5849 = vmatprep.subr.bf16.mxu0 0
        %5850 = vmatpush1.bf16.msra.mxu0 %v5570
        %5851 = vmatprep.subr.bf16.mxu0 0
        %5852 = vmatpush1.bf16.msra.mxu0 %v5573
        %5853 = vmatprep.subr.bf16.mxu0 0
        %5854 = vmatpush1.bf16.msra.mxu0 %v5576
        %5855 = vmatprep.subr.bf16.mxu0 0
        %5856 = vmatpush1.bf16.msra.mxu0 %v5579
        %5857 = vmatprep.subr.bf16.mxu0 0
        %5858 = vmatpush1.bf16.msra.mxu0 %v5582
        %5859 = vmatprep.subr.bf16.mxu0 0
        %5860 = vmatpush1.bf16.msra.mxu0 %v5585
        %5861 = vmatprep.subr.bf16.mxu0 0
        %5862 = vmatpush1.bf16.msra.mxu0 %v5588
        %5863 = vmatprep.subr.bf16.mxu0 0
        %5864 = vmatpush1.bf16.msra.mxu0 %v5591
        %5865 = vmatprep.mubr.bf16.mxu0 %v5272
        %5866 = vmatmul.mubr.bf16.gmra.mrb[0].mxu0 %v5271
        %v5867 = vpop.f32.mrb[0].mxu0
        %v5868 = vadd.f32 %v5380, %v5867
        %v5869 = vpop.f32.mrb[0].mxu0
        %v5870 = vpop.f32.mrb[0].mxu0
        %v5871 = vadd.f32 %v5380, %v5870
        %v5872 = vpop.f32.mrb[0].mxu0
        %5873 = vmatprep.mubr.bf16.mxu0 %v5274
        %5874 = vmatmul.mubr.bf16.gmra.mrb[0].mxu0 %v5273
        %v5875 = vpop.f32.mrb[0].mxu0
        %v5876 = vadd.f32 %v5380, %v5875
        %v5877 = vpop.f32.mrb[0].mxu0
        %v5878 = vpop.f32.mrb[0].mxu0
        %v5879 = vadd.f32 %v5380, %v5878
        %v5880 = vpop.f32.mrb[0].mxu0
        %5881 = vmatprep.mubr.bf16.mxu0 %v5276
        %5882 = vmatmul.mubr.bf16.gmra.mrb[0].mxu0 %v5275
        %v5883 = vpop.f32.mrb[0].mxu0
        %v5884 = vadd.f32 %v5380, %v5883
        %v5885 = vpop.f32.mrb[0].mxu0
        %v5886 = vpop.f32.mrb[0].mxu0
        %v5887 = vadd.f32 %v5380, %v5886
        %v5888 = vpop.f32.mrb[0].mxu0
        %5889 = vmatprep.mubr.bf16.mxu0 %v5278
        %5890 = vmatmul.mubr.bf16.gmra.mrb[0].mxu0 %v5277
        %v5891 = vpop.f32.mrb[0].mxu0
        %v5892 = vadd.f32 %v5380, %v5891
        %v5893 = vpop.f32.mrb[0].mxu0
        %v5894 = vpop.f32.mrb[0].mxu0
        %v5895 = vadd.f32 %v5380, %v5894
        %v5896 = vpop.f32.mrb[0].mxu0
        %5897 = vmatprep.mubr.bf16.mxu0 %v5280
        %5898 = vmatmul.mubr.bf16.gmra.mrb[0].mxu0 %v5279
        %v5899 = vpop.f32.mrb[0].mxu0
        %v5900 = vadd.f32 %v5380, %v5899
        %v5901 = vpop.f32.mrb[0].mxu0
        %v5902 = vpop.f32.mrb[0].mxu0
        %v5903 = vadd.f32 %v5380, %v5902
        %v5904 = vpop.f32.mrb[0].mxu0
        %5905 = vmatprep.mubr.bf16.mxu0 %v5282
        %5906 = vmatmul.mubr.bf16.gmra.mrb[0].mxu0 %v5281
        %v5907 = vpop.f32.mrb[0].mxu0
        %v5908 = vadd.f32 %v5380, %v5907
        %v5909 = vpop.f32.mrb[0].mxu0
        %v5910 = vpop.f32.mrb[0].mxu0
        %v5911 = vadd.f32 %v5380, %v5910
        %v5912 = vpop.f32.mrb[0].mxu0
        %5913 = vmatprep.mubr.bf16.mxu0 %v5284
        %5914 = vmatmul.mubr.bf16.gmra.mrb[0].mxu0 %v5283
        %v5915 = vpop.f32.mrb[0].mxu0
        %v5916 = vadd.f32 %v5380, %v5915
        %v5917 = vpop.f32.mrb[0].mxu0
        %v5918 = vpop.f32.mrb[0].mxu0
        %v5919 = vadd.f32 %v5380, %v5918
        %v5920 = vpop.f32.mrb[0].mxu0
        %5921 = vmatprep.mubr.bf16.mxu0 %v5286
        %5922 = vmatmul.mubr.bf16.gmra.mrb[0].mxu0 %v5285
        %v5923 = vpop.f32.mrb[0].mxu0
        %v5924 = vadd.f32 %v5380, %v5923
        %v5925 = vpop.f32.mrb[0].mxu0
        %v5926 = vpop.f32.mrb[0].mxu0
        %v5927 = vadd.f32 %v5380, %v5926
        %v5928 = vpop.f32.mrb[0].mxu0
        %5929 = vmatprep.mubr.bf16.mxu0 %v5288
        %5930 = vmatmul.mubr.bf16.gmra.mrb[0].mxu0 %v5287
        %v5931 = vpop.f32.mrb[0].mxu0
        %v5932 = vadd.f32 %v5380, %v5931
        %v5933 = vpop.f32.mrb[0].mxu0
        %v5934 = vpop.f32.mrb[0].mxu0
        %v5935 = vadd.f32 %v5380, %v5934
        %v5936 = vpop.f32.mrb[0].mxu0
        %5937 = vmatprep.mubr.bf16.mxu0 %v5290
        %5938 = vmatmul.mubr.bf16.gmra.mrb[0].mxu0 %v5289
        %v5939 = vpop.f32.mrb[0].mxu0
        %v5940 = vadd.f32 %v5380, %v5939
        %v5941 = vpop.f32.mrb[0].mxu0
        %v5942 = vpop.f32.mrb[0].mxu0
        %v5943 = vadd.f32 %v5380, %v5942
        %v5944 = vpop.f32.mrb[0].mxu0
        %5945 = vmatprep.mubr.bf16.mxu0 %v5292
        %5946 = vmatmul.mubr.bf16.gmra.mrb[0].mxu0 %v5291
        %v5947 = vpop.f32.mrb[0].mxu0
        %v5948 = vadd.f32 %v5380, %v5947
        %v5949 = vpop.f32.mrb[0].mxu0
        %v5950 = vpop.f32.mrb[0].mxu0
        %v5951 = vadd.f32 %v5380, %v5950
        %v5952 = vpop.f32.mrb[0].mxu0
        %5953 = vmatprep.mubr.bf16.mxu0 %v5294
        %5954 = vmatmul.mubr.bf16.gmra.mrb[0].mxu0 %v5293
        %v5955 = vpop.f32.mrb[0].mxu0
        %v5956 = vadd.f32 %v5380, %v5955
        %v5957 = vpop.f32.mrb[0].mxu0
        %v5958 = vpop.f32.mrb[0].mxu0
        %v5959 = vadd.f32 %v5380, %v5958
        %v5960 = vpop.f32.mrb[0].mxu0
        %5961 = vmatprep.mubr.bf16.mxu0 %v5296
        %5962 = vmatmul.mubr.bf16.gmra.mrb[0].mxu0 %v5295
        %v5963 = vpop.f32.mrb[0].mxu0
        %v5964 = vadd.f32 %v5380, %v5963
        %v5965 = vpop.f32.mrb[0].mxu0
        %v5966 = vpop.f32.mrb[0].mxu0
        %v5967 = vadd.f32 %v5380, %v5966
        %v5968 = vpop.f32.mrb[0].mxu0
        %5969 = vmatprep.mubr.bf16.mxu0 %v5298
        %5970 = vmatmul.mubr.bf16.gmra.mrb[0].mxu0 %v5297
        %v5971 = vpop.f32.mrb[0].mxu0
        %v5972 = vadd.f32 %v5380, %v5971
        %v5973 = vpop.f32.mrb[0].mxu0
        %v5974 = vpop.f32.mrb[0].mxu0
        %v5975 = vadd.f32 %v5380, %v5974
        %v5976 = vpop.f32.mrb[0].mxu0
        %5977 = vmatprep.mubr.bf16.mxu0 %v5300
        %5978 = vmatmul.mubr.bf16.gmra.mrb[0].mxu0 %v5299
        %v5979 = vpop.f32.mrb[0].mxu0
        %v5980 = vadd.f32 %v5380, %v5979
        %v5981 = vpop.f32.mrb[0].mxu0
        %v5982 = vpop.f32.mrb[0].mxu0
        %v5983 = vadd.f32 %v5380, %v5982
        %v5984 = vpop.f32.mrb[0].mxu0
        %5985 = vmatprep.mubr.bf16.mxu0 %v5302
        %5986 = vmatmul.mubr.bf16.gmra.mrb[0].mxu0 %v5301
        %v5987 = vpop.f32.mrb[0].mxu0
        %v5988 = vadd.f32 %v5380, %v5987
        %v5989 = vpop.f32.mrb[0].mxu0
        %v5990 = vpop.f32.mrb[0].mxu0
        %v5991 = vadd.f32 %v5380, %v5990
        %v5992 = vpop.f32.mrb[0].mxu0
        %5993 = vdwg.mxu0
        %5994 = vst [vmem:[%s359] sm:$0xff] %v5675
        %5995 = vst [vmem:[%s359 + $0x8] sm:$0xff] %v5677
        %5996 = vst [vmem:[%s359 + $0x10] sm:$0xff] %v5868
        %5997 = vst [vmem:[%s359 + $0x18] sm:$0xff] %v5679
        %5998 = vst [vmem:[%s359 + $0x20] sm:$0xff] %v5681
        %5999 = vst [vmem:[%s359 + $0x28] sm:$0xff] %v5871
        %6000 = vst [vmem:[%s359 + $0x30] sm:$0xff] %v5685
        %6001 = vst [vmem:[%s359 + $0x38] sm:$0xff] %v5687
        %6002 = vst [vmem:[%s359 + $0x40] sm:$0xff] %v5876
        %6003 = vst [vmem:[%s359 + $0x48] sm:$0xff] %v5689
        %6004 = vst [vmem:[%s359 + $0x50] sm:$0xff] %v5691
        %6005 = vst [vmem:[%s359 + $0x58] sm:$0xff] %v5879
        %6006 = vst [vmem:[%s359 + $0x60] sm:$0xff] %v5695
        %6007 = vst [vmem:[%s359 + $0x68] sm:$0xff] %v5697
        %6008 = vst [vmem:[%s359 + $0x70] sm:$0xff] %v5884
        %6009 = vst [vmem:[%s359 + $0x78] sm:$0xff] %v5699
        %6010 = vst [vmem:[%s359 + $0x80] sm:$0xff] %v5701
        %6011 = vst [vmem:[%s359 + $0x88] sm:$0xff] %v5887
        %6012 = vst [vmem:[%s359 + $0x90] sm:$0xff] %v5705
        %6013 = vst [vmem:[%s359 + $0x98] sm:$0xff] %v5707
        %6014 = vst [vmem:[%s359 + $0xa0] sm:$0xff] %v5892
        %6015 = vst [vmem:[%s359 + $0xa8] sm:$0xff] %v5709
        %6016 = vst [vmem:[%s359 + $0xb0] sm:$0xff] %v5711
        %6017 = vst [vmem:[%s359 + $0xb8] sm:$0xff] %v5895
        %6018 = vst [vmem:[%s359 + $0xc0] sm:$0xff] %v5715
        %6019 = vst [vmem:[%s359 + $0xc8] sm:$0xff] %v5717
        %6020 = vst [vmem:[%s359 + $0xd0] sm:$0xff] %v5900
        %6021 = vst [vmem:[%s359 + $0xd8] sm:$0xff] %v5719
        %6022 = vst [vmem:[%s359 + $0xe0] sm:$0xff] %v5721
        %6023 = vst [vmem:[%s359 + $0xe8] sm:$0xff] %v5903
        %6024 = vst [vmem:[%s359 + $0xf0] sm:$0xff] %v5725
        %6025 = vst [vmem:[%s359 + $0xf8] sm:$0xff] %v5727
        %6026 = vst [vmem:[%s359 + $0x100] sm:$0xff] %v5908
        %6027 = vst [vmem:[%s359 + $0x108] sm:$0xff] %v5729
        %6028 = vst [vmem:[%s359 + $0x110] sm:$0xff] %v5731
        %6029 = vst [vmem:[%s359 + $0x118] sm:$0xff] %v5911
        %6030 = vst [vmem:[%s359 + $0x120] sm:$0xff] %v5735
        %6031 = vst [vmem:[%s359 + $0x128] sm:$0xff] %v5737
        %6032 = vst [vmem:[%s359 + $0x130] sm:$0xff] %v5916
        %6033 = vst [vmem:[%s359 + $0x138] sm:$0xff] %v5739
        %6034 = vst [vmem:[%s359 + $0x140] sm:$0xff] %v5741
        %6035 = vst [vmem:[%s359 + $0x148] sm:$0xff] %v5919
        %6036 = vst [vmem:[%s359 + $0x150] sm:$0xff] %v5745
        %6037 = vst [vmem:[%s359 + $0x158] sm:$0xff] %v5747
        %6038 = vst [vmem:[%s359 + $0x160] sm:$0xff] %v5924
        %6039 = vst [vmem:[%s359 + $0x168] sm:$0xff] %v5749
        %6040 = vst [vmem:[%s359 + $0x170] sm:$0xff] %v5751
        %6041 = vst [vmem:[%s359 + $0x178] sm:$0xff] %v5927
        %6042 = vst [vmem:[%s359 + $0x180] sm:$0xff] %v5755
        %6043 = vst [vmem:[%s359 + $0x188] sm:$0xff] %v5757
        %6044 = vst [vmem:[%s359 + $0x190] sm:$0xff] %v5932
        %6045 = vst [vmem:[%s359 + $0x198] sm:$0xff] %v5759
        %6046 = vst [vmem:[%s359 + $0x1a0] sm:$0xff] %v5761
        %6047 = vst [vmem:[%s359 + $0x1a8] sm:$0xff] %v5935
        %6048 = vst [vmem:[%s359 + $0x1b0] sm:$0xff] %v5765
        %6049 = vst [vmem:[%s359 + $0x1b8] sm:$0xff] %v5767
        %6050 = vst [vmem:[%s359 + $0x1c0] sm:$0xff] %v5940
        %6051 = vst [vmem:[%s359 + $0x1c8] sm:$0xff] %v5769
        %6052 = vst [vmem:[%s359 + $0x1d0] sm:$0xff] %v5771
        %6053 = vst [vmem:[%s359 + $0x1d8] sm:$0xff] %v5943
        %6054 = vst [vmem:[%s359 + $0x1e0] sm:$0xff] %v5775
        %6055 = vst [vmem:[%s359 + $0x1e8] sm:$0xff] %v5777
        %6056 = vst [vmem:[%s359 + $0x1f0] sm:$0xff] %v5948
        %6057 = vst [vmem:[%s359 + $0x1f8] sm:$0xff] %v5779
        %6058 = vst [vmem:[%s359 + $0x200] sm:$0xff] %v5781
        %6059 = vst [vmem:[%s359 + $0x208] sm:$0xff] %v5951
        %6060 = vst [vmem:[%s359 + $0x210] sm:$0xff] %v5785
        %6061 = vst [vmem:[%s359 + $0x218] sm:$0xff] %v5787
        %6062 = vst [vmem:[%s359 + $0x220] sm:$0xff] %v5956
        %6063 = vst [vmem:[%s359 + $0x228] sm:$0xff] %v5789
        %6064 = vst [vmem:[%s359 + $0x230] sm:$0xff] %v5791
        %6065 = vst [vmem:[%s359 + $0x238] sm:$0xff] %v5959
        %6066 = vst [vmem:[%s359 + $0x240] sm:$0xff] %v5795
        %6067 = vst [vmem:[%s359 + $0x248] sm:$0xff] %v5797
        %6068 = vst [vmem:[%s359 + $0x250] sm:$0xff] %v5964
        %6069 = vst [vmem:[%s359 + $0x258] sm:$0xff] %v5799
        %6070 = vst [vmem:[%s359 + $0x260] sm:$0xff] %v5801
        %6071 = vst [vmem:[%s359 + $0x268] sm:$0xff] %v5967
        %6072 = vst [vmem:[%s359 + $0x270] sm:$0xff] %v5805
        %6073 = vst [vmem:[%s359 + $0x278] sm:$0xff] %v5807
        %6074 = vst [vmem:[%s359 + $0x280] sm:$0xff] %v5972
        %6075 = vst [vmem:[%s359 + $0x288] sm:$0xff] %v5809
        %6076 = vst [vmem:[%s359 + $0x290] sm:$0xff] %v5811
        %6077 = vst [vmem:[%s359 + $0x298] sm:$0xff] %v5975
        %6078 = vst [vmem:[%s359 + $0x2a0] sm:$0xff] %v5815
        %6079 = vst [vmem:[%s359 + $0x2a8] sm:$0xff] %v5817
        %6080 = vst [vmem:[%s359 + $0x2b0] sm:$0xff] %v5980
        %6081 = vst [vmem:[%s359 + $0x2b8] sm:$0xff] %v5819
        %6082 = vst [vmem:[%s359 + $0x2c0] sm:$0xff] %v5821
        %6083 = vst [vmem:[%s359 + $0x2c8] sm:$0xff] %v5983
        %6084 = vst [vmem:[%s359 + $0x2d0] sm:$0xff] %v5825
        %6085 = vst [vmem:[%s359 + $0x2d8] sm:$0xff] %v5827
        %6086 = vst [vmem:[%s359 + $0x2e0] sm:$0xff] %v5988
        %6087 = vst [vmem:[%s359 + $0x2e8] sm:$0xff] %v5829
        %6088 = vst [vmem:[%s359 + $0x2f0] sm:$0xff] %v5831
        %6089 = vst [vmem:[%s359 + $0x2f8] sm:$0xff] %v5991
        %s6090 = sand.u32 %s202, 1
        %s6091 = scalar_lea.sflag [#allocation4], %s6090
        %s6092 = sand.u32 %s202, 1
        %s6093 = smul.addr %s6092, 768
        %s6094 = scalar_lea.vmem [#allocation10], %s6093
        // Predicated region
        $region65: #{tpu_custom_call.1} parent=47 // pred_check
          %p6095 = pneg %p212
        $region66: #{tpu_custom_call.1} parent=47 // pred_check_branch
          %6097 = sbr.rel (%p6095) target = $region68
        $region67: #{tpu_custom_call.1} parent=47 // pred_region
          %s6098 = smul.u32 32, %s31
          %s6100 = ssub.s32 12288, 12288
          %6101 = vsyncadd %s6091, %s6100
          %s6102 = smul.addr %s6098, 3
          %s6103 = smul.addr %s30, 96
          %s6104 = sadd.s32 %s6102, %s6103
          %s6105 = smul.addr %s6104, 128
          %s6106 = scalar_lea.hbm %s7, %s6105
          %s6107 = sshll.u32 %s6094, 4
          %s6108 = int_to_ptr.vmem [resolvable:$true] %s6107
          %6113 = dma.vmem_to_hbm [thread:$0]  %s6108, 12288, %s6106, %s6091, 384, 384, 24
        $region68: #{tpu_custom_call.1} parent=47 // pred_fallthru
          _
      $region48: #{tpu_custom_call.1} parent=5 // pred_fallthru
        _
      %p6114 = scmp.le.s32.totalorder 2, %s21
      // Predicated region
      $region69: #{tpu_custom_call.1} parent=5 // pred_check
        %p6115 = pneg %p6114
      $region70: #{tpu_custom_call.1} parent=5 // pred_check_branch
        %6117 = sbr.rel (%p6115) target = $region72
      $region71: #{tpu_custom_call.1} parent=5 // pred_region
        %s6118 = ssub.s32 %s21, 2
        // Predicated region
        $region73: #{tpu_custom_call.1} parent=71 // pred_check
          %p6119 = pneg %p218
        $region74: #{tpu_custom_call.1} parent=71 // pred_check_branch
          %6121 = sbr.rel (%p6119) target = $region76
        $region75: #{tpu_custom_call.1} parent=71 // pred_region
          %s6122 = sand.u32 %s203, 1
          %s6123 = scalar_lea.sflag [#allocation4], %s6122
          %s6124 = sand.u32 %s203, 1
          %s6125 = smul.addr %s6124, 768
          %s6126 = scalar_lea.vmem [#allocation10], %s6125
          %6127 = dma.done %s6123, 12288
        $region76: #{tpu_custom_call.1} parent=71 // pred_fallthru
          _
      $region72: #{tpu_custom_call.1} parent=5 // pred_fallthru
        _
    $region6: #{tpu_custom_call.1} parent=1 // loop_footer
      %s25 = sadd.s32 1, %s21
    $region7: #{tpu_custom_call.1} parent=1 // loop_footer_branch
      %20 = sbr.rel target = $region3
    $region8: #{tpu_custom_call.1} parent=1 // loop_exit
      _
    %6128 = vsyncpa [#allocation3], 1
    %s6129 = scalar_lea.sflag [#allocation3], 1
    %6130 = vsyncpa %s6129, 1
    %6131 = vsyncpa [#allocation6], 1
    %6132 = vsyncpa [#allocation9], 1
    %6133 = vsyncpa [#allocation4], 1
    %s6134 = scalar_lea.sflag [#allocation4], 1
    %6135 = vsyncpa %s6134, 1

</llo_original>
